<compile_context>
chip_gen: v7x
topology: tpu7x:2x2x1
jax: 0.10.0
libtpu: 0.0.40
codegen_flags: <defaults>
</compile_context>

<pallas_src>
import jax
import jax.numpy as jnp
from jax.experimental import pallas as pl
from jax.experimental.pallas import tpu as pltpu

# ---------------- static model configuration ----------------
B = 16        # batch (number of envs)
TB = 8        # batch tile per grid step
T = 8         # sequence length
F = 16        # input_size
H = 32        # hidden / output_size
G = 4 * H     # packed gate width (i, f, g, o) = 128 lanes  (PyTorch gate order)

# packed-parameter row offsets (all rows are 4H = 128 lanes wide)
O_IH1 = 0            # (F, 4H)
O_HH1 = O_IH1 + F    # (H, 4H)
O_IH2 = O_HH1 + H    # (H, 4H)
O_HH2 = O_IH2 + H    # (H, 4H)
O_B1 = O_HH2 + H     # (1, 4H)  = b_ih_l0 + b_hh_l0
O_B2 = O_B1 + 1      # (1, 4H)  = b_ih_l1 + b_hh_l1
P_ROWS = ((O_B2 + 1 + 7) // 8) * 8   # pad to multiple of 8 sublanes -> 120


def _sigmoid(x):
    return 1.0 / (1.0 + jnp.exp(-x))


def _split_gates(z):
    # z: (rows, 4H) with PyTorch gate order [i, f, g, o]
    ig = _sigmoid(z[:, 0:H])
    fg = _sigmoid(z[:, H:2 * H])
    gg = jnp.tanh(z[:, 2 * H:3 * H])
    og = _sigmoid(z[:, 3 * H:4 * H])
    return ig, fg, gg, og


# ---------------- Pallas kernel ----------------
def _lstm_encoder_kernel(x_ref, p_ref, out_ref):
    x = x_ref[...]                                   # (TB, T, F) f32

    w_ih1 = p_ref[O_IH1:O_IH1 + F, :]                # (F, 4H)
    w_hh1 = p_ref[O_HH1:O_HH1 + H, :]                # (H, 4H)
    w_ih2 = p_ref[O_IH2:O_IH2 + H, :]                # (H, 4H)
    w_hh2 = p_ref[O_HH2:O_HH2 + H, :]                # (H, 4H)
    b1 = p_ref[O_B1:O_B1 + 1, :]                     # (1, 4H)
    b2 = p_ref[O_B2:O_B2 + 1, :]                     # (1, 4H)

    # ----- layer 1: input projection for ALL timesteps as one 2-D MXU dot -----
    xp1 = (jnp.dot(x.reshape(TB * T, F), w_ih1,
                   preferred_element_type=jnp.float32) + b1)
    xp1 = xp1.reshape(TB, T, G)                      # (TB, T, 4H), batch-major

    # layer-1 recurrence; h_{-1}=c_{-1}=0 so t=0 skips the recurrent matmul
    ig, fg, gg, og = _split_gates(xp1[:, 0, :])
    c = ig * gg
    h = og * jnp.tanh(c)
    h1_steps = [h]
    for t in range(1, T):
        z = xp1[:, t, :] + jnp.dot(h, w_hh1, preferred_element_type=jnp.float32)
        ig, fg, gg, og = _split_gates(z)
        c = fg * c + ig * gg
        h = og * jnp.tanh(c)
        h1_steps.append(h)

    # ----- layer 2: input projection for ALL timesteps as one 2-D MXU dot -----
    h1_tm = jnp.concatenate(h1_steps, axis=0)        # (T*TB, H), time-major rows
    xp2 = (jnp.dot(h1_tm, w_ih2, preferred_element_type=jnp.float32) + b2)
    xp2 = xp2.reshape(T, TB, G)                      # (T, TB, 4H)

    # layer-2 recurrence; only the final hidden state is kept (forward returns
    # x[:, -1, :]), so no per-step output is ever materialized.
    ig, fg, gg, og = _split_gates(xp2[0])
    c = ig * gg
    h = og * jnp.tanh(c)
    for t in range(1, T):
        z = xp2[t] + jnp.dot(h, w_hh2, preferred_element_type=jnp.float32)
        ig, fg, gg, og = _split_gates(z)
        c = fg * c + ig * gg
        h = og * jnp.tanh(c)

    out_ref[...] = h.astype(out_ref.dtype)           # (TB, H)


# ---------------- wrapper ----------------
def lstm_encoder_forward(x, packed_params):
    """x: (B, T, F) f32; packed_params: (P_ROWS, 4H) f32."""
    assert x.shape == (B, T, F) and B % TB == 0
    return pl.pallas_call(
        _lstm_encoder_kernel,
        out_shape=jax.ShapeDtypeStruct((B, H), jnp.float32),
        grid=(B // TB,),
        in_specs=[
            pl.BlockSpec((TB, T, F), lambda i: (i, 0, 0)),   # batch-tiled input
            pl.BlockSpec((P_ROWS, G), lambda i: (0, 0)),     # packed weights, resident
        ],
        out_specs=pl.BlockSpec((TB, H), lambda i: (i, 0)),
        compiler_params=pltpu.CompilerParams(
            dimension_semantics=("parallel",)),              # batch tiles -> 2 TCs on v7x
    )(x, packed_params)


# ---------------- parameter construction / packing ----------------
def make_params(key):
    """Weights stored in JAX-friendly layout (in, 4H); gate order i,f,g,o.
    Equivalent to PyTorch weight_ih_l*.T / weight_hh_l*.T with b = b_ih + b_hh."""
    ks = jax.random.split(key, 8)
    s = 0.15
    return {
        'w_ih1': s * jax.random.normal(ks[0], (F, G), jnp.float32),
        'w_hh1': s * jax.random.normal(ks[1], (H, G), jnp.float32),
        'b1':    0.05 * jax.random.normal(ks[2], (G,), jnp.float32),
        'w_ih2': s * jax.random.normal(ks[3], (H, G), jnp.float32),
        'w_hh2': s * jax.random.normal(ks[4], (H, G), jnp.float32),
        'b2':    0.05 * jax.random.normal(ks[5], (G,), jnp.float32),
    }


def pack_params(p):
    packed = jnp.concatenate([
        p['w_ih1'], p['w_hh1'], p['w_ih2'], p['w_hh2'],
        p['b1'][None, :], p['b2'][None, :],
    ], axis=0)                                             # (114, 128)
    pad = P_ROWS - packed.shape[0]
    return jnp.pad(packed, ((0, pad), (0, 0)))             # (120, 128)


# ---------------- pure-JAX reference (same math, standard formulation) ----------------
def lstm_encoder_ref(x, p):
    def layer(inp, w_ih, w_hh, b):
        bsz = inp.shape[0]
        h = jnp.zeros((bsz, H), jnp.float32)
        c = jnp.zeros((bsz, H), jnp.float32)
        outs = []
        for t in range(inp.shape[1]):
            z = inp[:, t, :] @ w_ih + h @ w_hh + b
            ig, fg, gg, og = _split_gates(z)
            c = fg * c + ig * gg
            h = og * jnp.tanh(c)
            outs.append(h)
        return jnp.stack(outs, axis=1)                     # (B, T, H)

    y1 = layer(x, p['w_ih1'], p['w_hh1'], p['b1'])
    y2 = layer(y1, p['w_ih2'], p['w_hh2'], p['b2'])
    return y2[:, -1, :]                                    # forward(): last timestep


if __name__ == "__main__":
    key = jax.random.PRNGKey(0)
    k_x, k_p = jax.random.split(key)
    x = jax.random.normal(k_x, (B, T, F), jnp.float32)
    params = make_params(k_p)
    packed = pack_params(params)

    out = lstm_encoder_forward(x, packed)
    out = jax.block_until_ready(out)

    ref = lstm_encoder_ref(x, params)
    assert out.shape == (B, H)
    assert jnp.allclose(out, ref, atol=1e-3, rtol=1e-3), "mismatch vs reference"
    # TODO(synk): bidirectional=True variant (reverse-direction pass + concat) is not
    # implemented; the module is constructed with the default bidirectional=False.
    print("KERNEL_OK")
</pallas_src>

<mosaic_0001>
module attributes {stable_mosaic.version = 11 : i64} {
  func.func @_lstm_encoder_kernel(%arg0: i32, %arg1: memref<8x8x16xf32, #tpu.memory_space<vmem>>, %arg2: memref<120x128xf32, #tpu.memory_space<vmem>>, %arg3: memref<8x32xf32, #tpu.memory_space<vmem>>) attributes {dimension_semantics = [#tpu.dimension_semantics<parallel>], iteration_bounds = array<i64: 2>, scalar_prefetch = 0 : i64, scratch_operands = 0 : i64, tpu.core_type = #tpu.core_type<tc>, window_params = [{transform_indices = @transform_0, window_bounds = array<i64: 8, 8, 16>}, {pipeline_mode = #tpu.pipeline_mode<synchronous>, transform_indices = @transform_1, window_bounds = array<i64: 120, 128>}, {transform_indices = @transform_2, window_bounds = array<i64: 8, 32>}]} {
    %c0 = arith.constant 0 : index
    %c0_0 = arith.constant 0 : index
    %c0_1 = arith.constant 0 : index
    %0 = vector.load %arg1[%c0, %c0_0, %c0_1] : memref<8x8x16xf32, #tpu.memory_space<vmem>>, vector<8x8x16xf32>
    %c0_2 = arith.constant 0 : index
    %c0_3 = arith.constant 0 : index
    %1 = vector.load %arg2[%c0_2, %c0_3] : memref<120x128xf32, #tpu.memory_space<vmem>>, vector<16x128xf32>
    %c16 = arith.constant 16 : index
    %c0_4 = arith.constant 0 : index
    %2 = vector.load %arg2[%c16, %c0_4] : memref<120x128xf32, #tpu.memory_space<vmem>>, vector<32x128xf32>
    %c48 = arith.constant 48 : index
    %c0_5 = arith.constant 0 : index
    %3 = vector.load %arg2[%c48, %c0_5] : memref<120x128xf32, #tpu.memory_space<vmem>>, vector<32x128xf32>
    %c80 = arith.constant 80 : index
    %c0_6 = arith.constant 0 : index
    %4 = vector.load %arg2[%c80, %c0_6] : memref<120x128xf32, #tpu.memory_space<vmem>>, vector<32x128xf32>
    %c112 = arith.constant 112 : index
    %c0_7 = arith.constant 0 : index
    %5 = vector.load %arg2[%c112, %c0_7] : memref<120x128xf32, #tpu.memory_space<vmem>>, vector<1x128xf32>
    %c113 = arith.constant 113 : index
    %c0_8 = arith.constant 0 : index
    %6 = vector.load %arg2[%c113, %c0_8] : memref<120x128xf32, #tpu.memory_space<vmem>>, vector<1x128xf32>
    %7 = vector.shape_cast %0 : vector<8x8x16xf32> to vector<64x16xf32>
    %cst = arith.constant dense<0.000000e+00> : vector<64x128xf32>
    %8 = tpu.matmul %7, %1, %cst {dimension_numbers = #tpu.dot_dimension_numbers<[1], [0], [0], [1], [0, 0, 1, 1], [], []>} : vector<64x16xf32>, vector<16x128xf32>, vector<64x128xf32> -> vector<64x128xf32>
    %9 = vector.broadcast %5 : vector<1x128xf32> to vector<64x128xf32>
    %10 = arith.addf %8, %9 : vector<64x128xf32>
    %11 = vector.shape_cast %10 : vector<64x128xf32> to vector<8x8x128xf32>
    %12 = vector.extract_strided_slice %11 {offsets = [0, 0, 0], sizes = [8, 1, 128], strides = [1, 1, 1]} : vector<8x8x128xf32> to vector<8x1x128xf32>
    %13 = vector.shape_cast %12 : vector<8x1x128xf32> to vector<8x128xf32>
    %14 = vector.extract_strided_slice %13 {offsets = [0, 0], sizes = [8, 32], strides = [1, 1]} : vector<8x128xf32> to vector<8x32xf32>
    %cst_9 = arith.constant 0.000000e+00 : f32
    %15 = vector.broadcast %cst_9 : f32 to vector<8x32xf32>
    %16 = arith.subf %15, %14 : vector<8x32xf32>
    %17 = math.exp %16 : vector<8x32xf32>
    %cst_10 = arith.constant 1.000000e+00 : f32
    %18 = vector.broadcast %cst_10 : f32 to vector<8x32xf32>
    %19 = arith.addf %18, %17 : vector<8x32xf32>
    %cst_11 = arith.constant 1.000000e+00 : f32
    %20 = vector.broadcast %cst_11 : f32 to vector<8x32xf32>
    %21 = arith.divf %20, %19 : vector<8x32xf32>
    %22 = vector.extract_strided_slice %13 {offsets = [0, 64], sizes = [8, 32], strides = [1, 1]} : vector<8x128xf32> to vector<8x32xf32>
    %23 = math.tanh %22 : vector<8x32xf32>
    %24 = vector.extract_strided_slice %13 {offsets = [0, 96], sizes = [8, 32], strides = [1, 1]} : vector<8x128xf32> to vector<8x32xf32>
    %cst_12 = arith.constant 0.000000e+00 : f32
    %25 = vector.broadcast %cst_12 : f32 to vector<8x32xf32>
    %26 = arith.subf %25, %24 : vector<8x32xf32>
    %27 = math.exp %26 : vector<8x32xf32>
    %cst_13 = arith.constant 1.000000e+00 : f32
    %28 = vector.broadcast %cst_13 : f32 to vector<8x32xf32>
    %29 = arith.addf %28, %27 : vector<8x32xf32>
    %cst_14 = arith.constant 1.000000e+00 : f32
    %30 = vector.broadcast %cst_14 : f32 to vector<8x32xf32>
    %31 = arith.divf %30, %29 : vector<8x32xf32>
    %32 = arith.mulf %21, %23 : vector<8x32xf32>
    %33 = math.tanh %32 : vector<8x32xf32>
    %34 = arith.mulf %31, %33 : vector<8x32xf32>
    %35 = vector.extract_strided_slice %11 {offsets = [0, 1, 0], sizes = [8, 1, 128], strides = [1, 1, 1]} : vector<8x8x128xf32> to vector<8x1x128xf32>
    %36 = vector.shape_cast %35 : vector<8x1x128xf32> to vector<8x128xf32>
    %cst_15 = arith.constant dense<0.000000e+00> : vector<8x128xf32>
    %37 = tpu.matmul %34, %2, %cst_15 {dimension_numbers = #tpu.dot_dimension_numbers<[1], [0], [0], [1], [0, 0, 1, 1], [], []>} : vector<8x32xf32>, vector<32x128xf32>, vector<8x128xf32> -> vector<8x128xf32>
    %38 = arith.addf %36, %37 : vector<8x128xf32>
    %39 = vector.extract_strided_slice %38 {offsets = [0, 0], sizes = [8, 32], strides = [1, 1]} : vector<8x128xf32> to vector<8x32xf32>
    %cst_16 = arith.constant 0.000000e+00 : f32
    %40 = vector.broadcast %cst_16 : f32 to vector<8x32xf32>
    %41 = arith.subf %40, %39 : vector<8x32xf32>
    %42 = math.exp %41 : vector<8x32xf32>
    %cst_17 = arith.constant 1.000000e+00 : f32
    %43 = vector.broadcast %cst_17 : f32 to vector<8x32xf32>
    %44 = arith.addf %43, %42 : vector<8x32xf32>
    %cst_18 = arith.constant 1.000000e+00 : f32
    %45 = vector.broadcast %cst_18 : f32 to vector<8x32xf32>
    %46 = arith.divf %45, %44 : vector<8x32xf32>
    %47 = vector.extract_strided_slice %38 {offsets = [0, 32], sizes = [8, 32], strides = [1, 1]} : vector<8x128xf32> to vector<8x32xf32>
    %cst_19 = arith.constant 0.000000e+00 : f32
    %48 = vector.broadcast %cst_19 : f32 to vector<8x32xf32>
    %49 = arith.subf %48, %47 : vector<8x32xf32>
    %50 = math.exp %49 : vector<8x32xf32>
    %cst_20 = arith.constant 1.000000e+00 : f32
    %51 = vector.broadcast %cst_20 : f32 to vector<8x32xf32>
    %52 = arith.addf %51, %50 : vector<8x32xf32>
    %cst_21 = arith.constant 1.000000e+00 : f32
    %53 = vector.broadcast %cst_21 : f32 to vector<8x32xf32>
    %54 = arith.divf %53, %52 : vector<8x32xf32>
    %55 = vector.extract_strided_slice %38 {offsets = [0, 64], sizes = [8, 32], strides = [1, 1]} : vector<8x128xf32> to vector<8x32xf32>
    %56 = math.tanh %55 : vector<8x32xf32>
    %57 = vector.extract_strided_slice %38 {offsets = [0, 96], sizes = [8, 32], strides = [1, 1]} : vector<8x128xf32> to vector<8x32xf32>
    %cst_22 = arith.constant 0.000000e+00 : f32
    %58 = vector.broadcast %cst_22 : f32 to vector<8x32xf32>
    %59 = arith.subf %58, %57 : vector<8x32xf32>
    %60 = math.exp %59 : vector<8x32xf32>
    %cst_23 = arith.constant 1.000000e+00 : f32
    %61 = vector.broadcast %cst_23 : f32 to vector<8x32xf32>
    %62 = arith.addf %61, %60 : vector<8x32xf32>
    %cst_24 = arith.constant 1.000000e+00 : f32
    %63 = vector.broadcast %cst_24 : f32 to vector<8x32xf32>
    %64 = arith.divf %63, %62 : vector<8x32xf32>
    %65 = arith.mulf %54, %32 : vector<8x32xf32>
    %66 = arith.mulf %46, %56 : vector<8x32xf32>
    %67 = arith.addf %65, %66 : vector<8x32xf32>
    %68 = math.tanh %67 : vector<8x32xf32>
    %69 = arith.mulf %64, %68 : vector<8x32xf32>
    %70 = vector.extract_strided_slice %11 {offsets = [0, 2, 0], sizes = [8, 1, 128], strides = [1, 1, 1]} : vector<8x8x128xf32> to vector<8x1x128xf32>
    %71 = vector.shape_cast %70 : vector<8x1x128xf32> to vector<8x128xf32>
    %cst_25 = arith.constant dense<0.000000e+00> : vector<8x128xf32>
    %72 = tpu.matmul %69, %2, %cst_25 {dimension_numbers = #tpu.dot_dimension_numbers<[1], [0], [0], [1], [0, 0, 1, 1], [], []>} : vector<8x32xf32>, vector<32x128xf32>, vector<8x128xf32> -> vector<8x128xf32>
    %73 = arith.addf %71, %72 : vector<8x128xf32>
    %74 = vector.extract_strided_slice %73 {offsets = [0, 0], sizes = [8, 32], strides = [1, 1]} : vector<8x128xf32> to vector<8x32xf32>
    %cst_26 = arith.constant 0.000000e+00 : f32
    %75 = vector.broadcast %cst_26 : f32 to vector<8x32xf32>
    %76 = arith.subf %75, %74 : vector<8x32xf32>
    %77 = math.exp %76 : vector<8x32xf32>
    %cst_27 = arith.constant 1.000000e+00 : f32
    %78 = vector.broadcast %cst_27 : f32 to vector<8x32xf32>
    %79 = arith.addf %78, %77 : vector<8x32xf32>
    %cst_28 = arith.constant 1.000000e+00 : f32
    %80 = vector.broadcast %cst_28 : f32 to vector<8x32xf32>
    %81 = arith.divf %80, %79 : vector<8x32xf32>
    %82 = vector.extract_strided_slice %73 {offsets = [0, 32], sizes = [8, 32], strides = [1, 1]} : vector<8x128xf32> to vector<8x32xf32>
    %cst_29 = arith.constant 0.000000e+00 : f32
    %83 = vector.broadcast %cst_29 : f32 to vector<8x32xf32>
    %84 = arith.subf %83, %82 : vector<8x32xf32>
    %85 = math.exp %84 : vector<8x32xf32>
    %cst_30 = arith.constant 1.000000e+00 : f32
    %86 = vector.broadcast %cst_30 : f32 to vector<8x32xf32>
    %87 = arith.addf %86, %85 : vector<8x32xf32>
    %cst_31 = arith.constant 1.000000e+00 : f32
    %88 = vector.broadcast %cst_31 : f32 to vector<8x32xf32>
    %89 = arith.divf %88, %87 : vector<8x32xf32>
    %90 = vector.extract_strided_slice %73 {offsets = [0, 64], sizes = [8, 32], strides = [1, 1]} : vector<8x128xf32> to vector<8x32xf32>
    %91 = math.tanh %90 : vector<8x32xf32>
    %92 = vector.extract_strided_slice %73 {offsets = [0, 96], sizes = [8, 32], strides = [1, 1]} : vector<8x128xf32> to vector<8x32xf32>
    %cst_32 = arith.constant 0.000000e+00 : f32
    %93 = vector.broadcast %cst_32 : f32 to vector<8x32xf32>
    %94 = arith.subf %93, %92 : vector<8x32xf32>
    %95 = math.exp %94 : vector<8x32xf32>
    %cst_33 = arith.constant 1.000000e+00 : f32
    %96 = vector.broadcast %cst_33 : f32 to vector<8x32xf32>
    %97 = arith.addf %96, %95 : vector<8x32xf32>
    %cst_34 = arith.constant 1.000000e+00 : f32
    %98 = vector.broadcast %cst_34 : f32 to vector<8x32xf32>
    %99 = arith.divf %98, %97 : vector<8x32xf32>
    %100 = arith.mulf %89, %67 : vector<8x32xf32>
    %101 = arith.mulf %81, %91 : vector<8x32xf32>
    %102 = arith.addf %100, %101 : vector<8x32xf32>
    %103 = math.tanh %102 : vector<8x32xf32>
    %104 = arith.mulf %99, %103 : vector<8x32xf32>
    %105 = vector.extract_strided_slice %11 {offsets = [0, 3, 0], sizes = [8, 1, 128], strides = [1, 1, 1]} : vector<8x8x128xf32> to vector<8x1x128xf32>
    %106 = vector.shape_cast %105 : vector<8x1x128xf32> to vector<8x128xf32>
    %cst_35 = arith.constant dense<0.000000e+00> : vector<8x128xf32>
    %107 = tpu.matmul %104, %2, %cst_35 {dimension_numbers = #tpu.dot_dimension_numbers<[1], [0], [0], [1], [0, 0, 1, 1], [], []>} : vector<8x32xf32>, vector<32x128xf32>, vector<8x128xf32> -> vector<8x128xf32>
    %108 = arith.addf %106, %107 : vector<8x128xf32>
    %109 = vector.extract_strided_slice %108 {offsets = [0, 0], sizes = [8, 32], strides = [1, 1]} : vector<8x128xf32> to vector<8x32xf32>
    %cst_36 = arith.constant 0.000000e+00 : f32
    %110 = vector.broadcast %cst_36 : f32 to vector<8x32xf32>
    %111 = arith.subf %110, %109 : vector<8x32xf32>
    %112 = math.exp %111 : vector<8x32xf32>
    %cst_37 = arith.constant 1.000000e+00 : f32
    %113 = vector.broadcast %cst_37 : f32 to vector<8x32xf32>
    %114 = arith.addf %113, %112 : vector<8x32xf32>
    %cst_38 = arith.constant 1.000000e+00 : f32
    %115 = vector.broadcast %cst_38 : f32 to vector<8x32xf32>
    %116 = arith.divf %115, %114 : vector<8x32xf32>
    %117 = vector.extract_strided_slice %108 {offsets = [0, 32], sizes = [8, 32], strides = [1, 1]} : vector<8x128xf32> to vector<8x32xf32>
    %cst_39 = arith.constant 0.000000e+00 : f32
    %118 = vector.broadcast %cst_39 : f32 to vector<8x32xf32>
    %119 = arith.subf %118, %117 : vector<8x32xf32>
    %120 = math.exp %119 : vector<8x32xf32>
    %cst_40 = arith.constant 1.000000e+00 : f32
    %121 = vector.broadcast %cst_40 : f32 to vector<8x32xf32>
    %122 = arith.addf %121, %120 : vector<8x32xf32>
    %cst_41 = arith.constant 1.000000e+00 : f32
    %123 = vector.broadcast %cst_41 : f32 to vector<8x32xf32>
    %124 = arith.divf %123, %122 : vector<8x32xf32>
    %125 = vector.extract_strided_slice %108 {offsets = [0, 64], sizes = [8, 32], strides = [1, 1]} : vector<8x128xf32> to vector<8x32xf32>
    %126 = math.tanh %125 : vector<8x32xf32>
    %127 = vector.extract_strided_slice %108 {offsets = [0, 96], sizes = [8, 32], strides = [1, 1]} : vector<8x128xf32> to vector<8x32xf32>
    %cst_42 = arith.constant 0.000000e+00 : f32
    %128 = vector.broadcast %cst_42 : f32 to vector<8x32xf32>
    %129 = arith.subf %128, %127 : vector<8x32xf32>
    %130 = math.exp %129 : vector<8x32xf32>
    %cst_43 = arith.constant 1.000000e+00 : f32
    %131 = vector.broadcast %cst_43 : f32 to vector<8x32xf32>
    %132 = arith.addf %131, %130 : vector<8x32xf32>
    %cst_44 = arith.constant 1.000000e+00 : f32
    %133 = vector.broadcast %cst_44 : f32 to vector<8x32xf32>
    %134 = arith.divf %133, %132 : vector<8x32xf32>
    %135 = arith.mulf %124, %102 : vector<8x32xf32>
    %136 = arith.mulf %116, %126 : vector<8x32xf32>
    %137 = arith.addf %135, %136 : vector<8x32xf32>
    %138 = math.tanh %137 : vector<8x32xf32>
    %139 = arith.mulf %134, %138 : vector<8x32xf32>
    %140 = vector.extract_strided_slice %11 {offsets = [0, 4, 0], sizes = [8, 1, 128], strides = [1, 1, 1]} : vector<8x8x128xf32> to vector<8x1x128xf32>
    %141 = vector.shape_cast %140 : vector<8x1x128xf32> to vector<8x128xf32>
    %cst_45 = arith.constant dense<0.000000e+00> : vector<8x128xf32>
    %142 = tpu.matmul %139, %2, %cst_45 {dimension_numbers = #tpu.dot_dimension_numbers<[1], [0], [0], [1], [0, 0, 1, 1], [], []>} : vector<8x32xf32>, vector<32x128xf32>, vector<8x128xf32> -> vector<8x128xf32>
    %143 = arith.addf %141, %142 : vector<8x128xf32>
    %144 = vector.extract_strided_slice %143 {offsets = [0, 0], sizes = [8, 32], strides = [1, 1]} : vector<8x128xf32> to vector<8x32xf32>
    %cst_46 = arith.constant 0.000000e+00 : f32
    %145 = vector.broadcast %cst_46 : f32 to vector<8x32xf32>
    %146 = arith.subf %145, %144 : vector<8x32xf32>
    %147 = math.exp %146 : vector<8x32xf32>
    %cst_47 = arith.constant 1.000000e+00 : f32
    %148 = vector.broadcast %cst_47 : f32 to vector<8x32xf32>
    %149 = arith.addf %148, %147 : vector<8x32xf32>
    %cst_48 = arith.constant 1.000000e+00 : f32
    %150 = vector.broadcast %cst_48 : f32 to vector<8x32xf32>
    %151 = arith.divf %150, %149 : vector<8x32xf32>
    %152 = vector.extract_strided_slice %143 {offsets = [0, 32], sizes = [8, 32], strides = [1, 1]} : vector<8x128xf32> to vector<8x32xf32>
    %cst_49 = arith.constant 0.000000e+00 : f32
    %153 = vector.broadcast %cst_49 : f32 to vector<8x32xf32>
    %154 = arith.subf %153, %152 : vector<8x32xf32>
    %155 = math.exp %154 : vector<8x32xf32>
    %cst_50 = arith.constant 1.000000e+00 : f32
    %156 = vector.broadcast %cst_50 : f32 to vector<8x32xf32>
    %157 = arith.addf %156, %155 : vector<8x32xf32>
    %cst_51 = arith.constant 1.000000e+00 : f32
    %158 = vector.broadcast %cst_51 : f32 to vector<8x32xf32>
    %159 = arith.divf %158, %157 : vector<8x32xf32>
    %160 = vector.extract_strided_slice %143 {offsets = [0, 64], sizes = [8, 32], strides = [1, 1]} : vector<8x128xf32> to vector<8x32xf32>
    %161 = math.tanh %160 : vector<8x32xf32>
    %162 = vector.extract_strided_slice %143 {offsets = [0, 96], sizes = [8, 32], strides = [1, 1]} : vector<8x128xf32> to vector<8x32xf32>
    %cst_52 = arith.constant 0.000000e+00 : f32
    %163 = vector.broadcast %cst_52 : f32 to vector<8x32xf32>
    %164 = arith.subf %163, %162 : vector<8x32xf32>
    %165 = math.exp %164 : vector<8x32xf32>
    %cst_53 = arith.constant 1.000000e+00 : f32
    %166 = vector.broadcast %cst_53 : f32 to vector<8x32xf32>
    %167 = arith.addf %166, %165 : vector<8x32xf32>
    %cst_54 = arith.constant 1.000000e+00 : f32
    %168 = vector.broadcast %cst_54 : f32 to vector<8x32xf32>
    %169 = arith.divf %168, %167 : vector<8x32xf32>
    %170 = arith.mulf %159, %137 : vector<8x32xf32>
    %171 = arith.mulf %151, %161 : vector<8x32xf32>
    %172 = arith.addf %170, %171 : vector<8x32xf32>
    %173 = math.tanh %172 : vector<8x32xf32>
    %174 = arith.mulf %169, %173 : vector<8x32xf32>
    %175 = vector.extract_strided_slice %11 {offsets = [0, 5, 0], sizes = [8, 1, 128], strides = [1, 1, 1]} : vector<8x8x128xf32> to vector<8x1x128xf32>
    %176 = vector.shape_cast %175 : vector<8x1x128xf32> to vector<8x128xf32>
    %cst_55 = arith.constant dense<0.000000e+00> : vector<8x128xf32>
    %177 = tpu.matmul %174, %2, %cst_55 {dimension_numbers = #tpu.dot_dimension_numbers<[1], [0], [0], [1], [0, 0, 1, 1], [], []>} : vector<8x32xf32>, vector<32x128xf32>, vector<8x128xf32> -> vector<8x128xf32>
    %178 = arith.addf %176, %177 : vector<8x128xf32>
    %179 = vector.extract_strided_slice %178 {offsets = [0, 0], sizes = [8, 32], strides = [1, 1]} : vector<8x128xf32> to vector<8x32xf32>
    %cst_56 = arith.constant 0.000000e+00 : f32
    %180 = vector.broadcast %cst_56 : f32 to vector<8x32xf32>
    %181 = arith.subf %180, %179 : vector<8x32xf32>
    %182 = math.exp %181 : vector<8x32xf32>
    %cst_57 = arith.constant 1.000000e+00 : f32
    %183 = vector.broadcast %cst_57 : f32 to vector<8x32xf32>
    %184 = arith.addf %183, %182 : vector<8x32xf32>
    %cst_58 = arith.constant 1.000000e+00 : f32
    %185 = vector.broadcast %cst_58 : f32 to vector<8x32xf32>
    %186 = arith.divf %185, %184 : vector<8x32xf32>
    %187 = vector.extract_strided_slice %178 {offsets = [0, 32], sizes = [8, 32], strides = [1, 1]} : vector<8x128xf32> to vector<8x32xf32>
    %cst_59 = arith.constant 0.000000e+00 : f32
    %188 = vector.broadcast %cst_59 : f32 to vector<8x32xf32>
    %189 = arith.subf %188, %187 : vector<8x32xf32>
    %190 = math.exp %189 : vector<8x32xf32>
    %cst_60 = arith.constant 1.000000e+00 : f32
    %191 = vector.broadcast %cst_60 : f32 to vector<8x32xf32>
    %192 = arith.addf %191, %190 : vector<8x32xf32>
    %cst_61 = arith.constant 1.000000e+00 : f32
    %193 = vector.broadcast %cst_61 : f32 to vector<8x32xf32>
    %194 = arith.divf %193, %192 : vector<8x32xf32>
    %195 = vector.extract_strided_slice %178 {offsets = [0, 64], sizes = [8, 32], strides = [1, 1]} : vector<8x128xf32> to vector<8x32xf32>
    %196 = math.tanh %195 : vector<8x32xf32>
    %197 = vector.extract_strided_slice %178 {offsets = [0, 96], sizes = [8, 32], strides = [1, 1]} : vector<8x128xf32> to vector<8x32xf32>
    %cst_62 = arith.constant 0.000000e+00 : f32
    %198 = vector.broadcast %cst_62 : f32 to vector<8x32xf32>
    %199 = arith.subf %198, %197 : vector<8x32xf32>
    %200 = math.exp %199 : vector<8x32xf32>
    %cst_63 = arith.constant 1.000000e+00 : f32
    %201 = vector.broadcast %cst_63 : f32 to vector<8x32xf32>
    %202 = arith.addf %201, %200 : vector<8x32xf32>
    %cst_64 = arith.constant 1.000000e+00 : f32
    %203 = vector.broadcast %cst_64 : f32 to vector<8x32xf32>
    %204 = arith.divf %203, %202 : vector<8x32xf32>
    %205 = arith.mulf %194, %172 : vector<8x32xf32>
    %206 = arith.mulf %186, %196 : vector<8x32xf32>
    %207 = arith.addf %205, %206 : vector<8x32xf32>
    %208 = math.tanh %207 : vector<8x32xf32>
    %209 = arith.mulf %204, %208 : vector<8x32xf32>
    %210 = vector.extract_strided_slice %11 {offsets = [0, 6, 0], sizes = [8, 1, 128], strides = [1, 1, 1]} : vector<8x8x128xf32> to vector<8x1x128xf32>
    %211 = vector.shape_cast %210 : vector<8x1x128xf32> to vector<8x128xf32>
    %cst_65 = arith.constant dense<0.000000e+00> : vector<8x128xf32>
    %212 = tpu.matmul %209, %2, %cst_65 {dimension_numbers = #tpu.dot_dimension_numbers<[1], [0], [0], [1], [0, 0, 1, 1], [], []>} : vector<8x32xf32>, vector<32x128xf32>, vector<8x128xf32> -> vector<8x128xf32>
    %213 = arith.addf %211, %212 : vector<8x128xf32>
    %214 = vector.extract_strided_slice %213 {offsets = [0, 0], sizes = [8, 32], strides = [1, 1]} : vector<8x128xf32> to vector<8x32xf32>
    %cst_66 = arith.constant 0.000000e+00 : f32
    %215 = vector.broadcast %cst_66 : f32 to vector<8x32xf32>
    %216 = arith.subf %215, %214 : vector<8x32xf32>
    %217 = math.exp %216 : vector<8x32xf32>
    %cst_67 = arith.constant 1.000000e+00 : f32
    %218 = vector.broadcast %cst_67 : f32 to vector<8x32xf32>
    %219 = arith.addf %218, %217 : vector<8x32xf32>
    %cst_68 = arith.constant 1.000000e+00 : f32
    %220 = vector.broadcast %cst_68 : f32 to vector<8x32xf32>
    %221 = arith.divf %220, %219 : vector<8x32xf32>
    %222 = vector.extract_strided_slice %213 {offsets = [0, 32], sizes = [8, 32], strides = [1, 1]} : vector<8x128xf32> to vector<8x32xf32>
    %cst_69 = arith.constant 0.000000e+00 : f32
    %223 = vector.broadcast %cst_69 : f32 to vector<8x32xf32>
    %224 = arith.subf %223, %222 : vector<8x32xf32>
    %225 = math.exp %224 : vector<8x32xf32>
    %cst_70 = arith.constant 1.000000e+00 : f32
    %226 = vector.broadcast %cst_70 : f32 to vector<8x32xf32>
    %227 = arith.addf %226, %225 : vector<8x32xf32>
    %cst_71 = arith.constant 1.000000e+00 : f32
    %228 = vector.broadcast %cst_71 : f32 to vector<8x32xf32>
    %229 = arith.divf %228, %227 : vector<8x32xf32>
    %230 = vector.extract_strided_slice %213 {offsets = [0, 64], sizes = [8, 32], strides = [1, 1]} : vector<8x128xf32> to vector<8x32xf32>
    %231 = math.tanh %230 : vector<8x32xf32>
    %232 = vector.extract_strided_slice %213 {offsets = [0, 96], sizes = [8, 32], strides = [1, 1]} : vector<8x128xf32> to vector<8x32xf32>
    %cst_72 = arith.constant 0.000000e+00 : f32
    %233 = vector.broadcast %cst_72 : f32 to vector<8x32xf32>
    %234 = arith.subf %233, %232 : vector<8x32xf32>
    %235 = math.exp %234 : vector<8x32xf32>
    %cst_73 = arith.constant 1.000000e+00 : f32
    %236 = vector.broadcast %cst_73 : f32 to vector<8x32xf32>
    %237 = arith.addf %236, %235 : vector<8x32xf32>
    %cst_74 = arith.constant 1.000000e+00 : f32
    %238 = vector.broadcast %cst_74 : f32 to vector<8x32xf32>
    %239 = arith.divf %238, %237 : vector<8x32xf32>
    %240 = arith.mulf %229, %207 : vector<8x32xf32>
    %241 = arith.mulf %221, %231 : vector<8x32xf32>
    %242 = arith.addf %240, %241 : vector<8x32xf32>
    %243 = math.tanh %242 : vector<8x32xf32>
    %244 = arith.mulf %239, %243 : vector<8x32xf32>
    %245 = vector.extract_strided_slice %11 {offsets = [0, 7, 0], sizes = [8, 1, 128], strides = [1, 1, 1]} : vector<8x8x128xf32> to vector<8x1x128xf32>
    %246 = vector.shape_cast %245 : vector<8x1x128xf32> to vector<8x128xf32>
    %cst_75 = arith.constant dense<0.000000e+00> : vector<8x128xf32>
    %247 = tpu.matmul %244, %2, %cst_75 {dimension_numbers = #tpu.dot_dimension_numbers<[1], [0], [0], [1], [0, 0, 1, 1], [], []>} : vector<8x32xf32>, vector<32x128xf32>, vector<8x128xf32> -> vector<8x128xf32>
    %248 = arith.addf %246, %247 : vector<8x128xf32>
    %249 = vector.extract_strided_slice %248 {offsets = [0, 0], sizes = [8, 32], strides = [1, 1]} : vector<8x128xf32> to vector<8x32xf32>
    %cst_76 = arith.constant 0.000000e+00 : f32
    %250 = vector.broadcast %cst_76 : f32 to vector<8x32xf32>
    %251 = arith.subf %250, %249 : vector<8x32xf32>
    %252 = math.exp %251 : vector<8x32xf32>
    %cst_77 = arith.constant 1.000000e+00 : f32
    %253 = vector.broadcast %cst_77 : f32 to vector<8x32xf32>
    %254 = arith.addf %253, %252 : vector<8x32xf32>
    %cst_78 = arith.constant 1.000000e+00 : f32
    %255 = vector.broadcast %cst_78 : f32 to vector<8x32xf32>
    %256 = arith.divf %255, %254 : vector<8x32xf32>
    %257 = vector.extract_strided_slice %248 {offsets = [0, 32], sizes = [8, 32], strides = [1, 1]} : vector<8x128xf32> to vector<8x32xf32>
    %cst_79 = arith.constant 0.000000e+00 : f32
    %258 = vector.broadcast %cst_79 : f32 to vector<8x32xf32>
    %259 = arith.subf %258, %257 : vector<8x32xf32>
    %260 = math.exp %259 : vector<8x32xf32>
    %cst_80 = arith.constant 1.000000e+00 : f32
    %261 = vector.broadcast %cst_80 : f32 to vector<8x32xf32>
    %262 = arith.addf %261, %260 : vector<8x32xf32>
    %cst_81 = arith.constant 1.000000e+00 : f32
    %263 = vector.broadcast %cst_81 : f32 to vector<8x32xf32>
    %264 = arith.divf %263, %262 : vector<8x32xf32>
    %265 = vector.extract_strided_slice %248 {offsets = [0, 64], sizes = [8, 32], strides = [1, 1]} : vector<8x128xf32> to vector<8x32xf32>
    %266 = math.tanh %265 : vector<8x32xf32>
    %267 = vector.extract_strided_slice %248 {offsets = [0, 96], sizes = [8, 32], strides = [1, 1]} : vector<8x128xf32> to vector<8x32xf32>
    %cst_82 = arith.constant 0.000000e+00 : f32
    %268 = vector.broadcast %cst_82 : f32 to vector<8x32xf32>
    %269 = arith.subf %268, %267 : vector<8x32xf32>
    %270 = math.exp %269 : vector<8x32xf32>
    %cst_83 = arith.constant 1.000000e+00 : f32
    %271 = vector.broadcast %cst_83 : f32 to vector<8x32xf32>
    %272 = arith.addf %271, %270 : vector<8x32xf32>
    %cst_84 = arith.constant 1.000000e+00 : f32
    %273 = vector.broadcast %cst_84 : f32 to vector<8x32xf32>
    %274 = arith.divf %273, %272 : vector<8x32xf32>
    %275 = arith.mulf %264, %242 : vector<8x32xf32>
    %276 = arith.mulf %256, %266 : vector<8x32xf32>
    %277 = arith.addf %275, %276 : vector<8x32xf32>
    %278 = math.tanh %277 : vector<8x32xf32>
    %279 = arith.mulf %274, %278 : vector<8x32xf32>
    %280 = tpu.concatenate %34, %69, %104, %139, %174, %209, %244, %279 in 0 : vector<8x32xf32>, vector<8x32xf32>, vector<8x32xf32>, vector<8x32xf32>, vector<8x32xf32>, vector<8x32xf32>, vector<8x32xf32>, vector<8x32xf32> -> vector<64x32xf32>
    %cst_85 = arith.constant dense<0.000000e+00> : vector<64x128xf32>
    %281 = tpu.matmul %280, %3, %cst_85 {dimension_numbers = #tpu.dot_dimension_numbers<[1], [0], [0], [1], [0, 0, 1, 1], [], []>} : vector<64x32xf32>, vector<32x128xf32>, vector<64x128xf32> -> vector<64x128xf32>
    %282 = vector.broadcast %6 : vector<1x128xf32> to vector<64x128xf32>
    %283 = arith.addf %281, %282 : vector<64x128xf32>
    %284 = vector.shape_cast %283 : vector<64x128xf32> to vector<8x8x128xf32>
    %285 = vector.extract_strided_slice %284 {offsets = [0, 0, 0], sizes = [1, 8, 128], strides = [1, 1, 1]} : vector<8x8x128xf32> to vector<1x8x128xf32>
    %286 = vector.shape_cast %285 : vector<1x8x128xf32> to vector<8x128xf32>
    %287 = vector.extract_strided_slice %286 {offsets = [0, 0], sizes = [8, 32], strides = [1, 1]} : vector<8x128xf32> to vector<8x32xf32>
    %cst_86 = arith.constant 0.000000e+00 : f32
    %288 = vector.broadcast %cst_86 : f32 to vector<8x32xf32>
    %289 = arith.subf %288, %287 : vector<8x32xf32>
    %290 = math.exp %289 : vector<8x32xf32>
    %cst_87 = arith.constant 1.000000e+00 : f32
    %291 = vector.broadcast %cst_87 : f32 to vector<8x32xf32>
    %292 = arith.addf %291, %290 : vector<8x32xf32>
    %cst_88 = arith.constant 1.000000e+00 : f32
    %293 = vector.broadcast %cst_88 : f32 to vector<8x32xf32>
    %294 = arith.divf %293, %292 : vector<8x32xf32>
    %295 = vector.extract_strided_slice %286 {offsets = [0, 64], sizes = [8, 32], strides = [1, 1]} : vector<8x128xf32> to vector<8x32xf32>
    %296 = math.tanh %295 : vector<8x32xf32>
    %297 = vector.extract_strided_slice %286 {offsets = [0, 96], sizes = [8, 32], strides = [1, 1]} : vector<8x128xf32> to vector<8x32xf32>
    %cst_89 = arith.constant 0.000000e+00 : f32
    %298 = vector.broadcast %cst_89 : f32 to vector<8x32xf32>
    %299 = arith.subf %298, %297 : vector<8x32xf32>
    %300 = math.exp %299 : vector<8x32xf32>
    %cst_90 = arith.constant 1.000000e+00 : f32
    %301 = vector.broadcast %cst_90 : f32 to vector<8x32xf32>
    %302 = arith.addf %301, %300 : vector<8x32xf32>
    %cst_91 = arith.constant 1.000000e+00 : f32
    %303 = vector.broadcast %cst_91 : f32 to vector<8x32xf32>
    %304 = arith.divf %303, %302 : vector<8x32xf32>
    %305 = arith.mulf %294, %296 : vector<8x32xf32>
    %306 = math.tanh %305 : vector<8x32xf32>
    %307 = arith.mulf %304, %306 : vector<8x32xf32>
    %308 = vector.extract_strided_slice %284 {offsets = [1, 0, 0], sizes = [1, 8, 128], strides = [1, 1, 1]} : vector<8x8x128xf32> to vector<1x8x128xf32>
    %309 = vector.shape_cast %308 : vector<1x8x128xf32> to vector<8x128xf32>
    %cst_92 = arith.constant dense<0.000000e+00> : vector<8x128xf32>
    %310 = tpu.matmul %307, %4, %cst_92 {dimension_numbers = #tpu.dot_dimension_numbers<[1], [0], [0], [1], [0, 0, 1, 1], [], []>} : vector<8x32xf32>, vector<32x128xf32>, vector<8x128xf32> -> vector<8x128xf32>
    %311 = arith.addf %309, %310 : vector<8x128xf32>
    %312 = vector.extract_strided_slice %311 {offsets = [0, 0], sizes = [8, 32], strides = [1, 1]} : vector<8x128xf32> to vector<8x32xf32>
    %cst_93 = arith.constant 0.000000e+00 : f32
    %313 = vector.broadcast %cst_93 : f32 to vector<8x32xf32>
    %314 = arith.subf %313, %312 : vector<8x32xf32>
    %315 = math.exp %314 : vector<8x32xf32>
    %cst_94 = arith.constant 1.000000e+00 : f32
    %316 = vector.broadcast %cst_94 : f32 to vector<8x32xf32>
    %317 = arith.addf %316, %315 : vector<8x32xf32>
    %cst_95 = arith.constant 1.000000e+00 : f32
    %318 = vector.broadcast %cst_95 : f32 to vector<8x32xf32>
    %319 = arith.divf %318, %317 : vector<8x32xf32>
    %320 = vector.extract_strided_slice %311 {offsets = [0, 32], sizes = [8, 32], strides = [1, 1]} : vector<8x128xf32> to vector<8x32xf32>
    %cst_96 = arith.constant 0.000000e+00 : f32
    %321 = vector.broadcast %cst_96 : f32 to vector<8x32xf32>
    %322 = arith.subf %321, %320 : vector<8x32xf32>
    %323 = math.exp %322 : vector<8x32xf32>
    %cst_97 = arith.constant 1.000000e+00 : f32
    %324 = vector.broadcast %cst_97 : f32 to vector<8x32xf32>
    %325 = arith.addf %324, %323 : vector<8x32xf32>
    %cst_98 = arith.constant 1.000000e+00 : f32
    %326 = vector.broadcast %cst_98 : f32 to vector<8x32xf32>
    %327 = arith.divf %326, %325 : vector<8x32xf32>
    %328 = vector.extract_strided_slice %311 {offsets = [0, 64], sizes = [8, 32], strides = [1, 1]} : vector<8x128xf32> to vector<8x32xf32>
    %329 = math.tanh %328 : vector<8x32xf32>
    %330 = vector.extract_strided_slice %311 {offsets = [0, 96], sizes = [8, 32], strides = [1, 1]} : vector<8x128xf32> to vector<8x32xf32>
    %cst_99 = arith.constant 0.000000e+00 : f32
    %331 = vector.broadcast %cst_99 : f32 to vector<8x32xf32>
    %332 = arith.subf %331, %330 : vector<8x32xf32>
    %333 = math.exp %332 : vector<8x32xf32>
    %cst_100 = arith.constant 1.000000e+00 : f32
    %334 = vector.broadcast %cst_100 : f32 to vector<8x32xf32>
    %335 = arith.addf %334, %333 : vector<8x32xf32>
    %cst_101 = arith.constant 1.000000e+00 : f32
    %336 = vector.broadcast %cst_101 : f32 to vector<8x32xf32>
    %337 = arith.divf %336, %335 : vector<8x32xf32>
    %338 = arith.mulf %327, %305 : vector<8x32xf32>
    %339 = arith.mulf %319, %329 : vector<8x32xf32>
    %340 = arith.addf %338, %339 : vector<8x32xf32>
    %341 = math.tanh %340 : vector<8x32xf32>
    %342 = arith.mulf %337, %341 : vector<8x32xf32>
    %343 = vector.extract_strided_slice %284 {offsets = [2, 0, 0], sizes = [1, 8, 128], strides = [1, 1, 1]} : vector<8x8x128xf32> to vector<1x8x128xf32>
    %344 = vector.shape_cast %343 : vector<1x8x128xf32> to vector<8x128xf32>
    %cst_102 = arith.constant dense<0.000000e+00> : vector<8x128xf32>
    %345 = tpu.matmul %342, %4, %cst_102 {dimension_numbers = #tpu.dot_dimension_numbers<[1], [0], [0], [1], [0, 0, 1, 1], [], []>} : vector<8x32xf32>, vector<32x128xf32>, vector<8x128xf32> -> vector<8x128xf32>
    %346 = arith.addf %344, %345 : vector<8x128xf32>
    %347 = vector.extract_strided_slice %346 {offsets = [0, 0], sizes = [8, 32], strides = [1, 1]} : vector<8x128xf32> to vector<8x32xf32>
    %cst_103 = arith.constant 0.000000e+00 : f32
    %348 = vector.broadcast %cst_103 : f32 to vector<8x32xf32>
    %349 = arith.subf %348, %347 : vector<8x32xf32>
    %350 = math.exp %349 : vector<8x32xf32>
    %cst_104 = arith.constant 1.000000e+00 : f32
    %351 = vector.broadcast %cst_104 : f32 to vector<8x32xf32>
    %352 = arith.addf %351, %350 : vector<8x32xf32>
    %cst_105 = arith.constant 1.000000e+00 : f32
    %353 = vector.broadcast %cst_105 : f32 to vector<8x32xf32>
    %354 = arith.divf %353, %352 : vector<8x32xf32>
    %355 = vector.extract_strided_slice %346 {offsets = [0, 32], sizes = [8, 32], strides = [1, 1]} : vector<8x128xf32> to vector<8x32xf32>
    %cst_106 = arith.constant 0.000000e+00 : f32
    %356 = vector.broadcast %cst_106 : f32 to vector<8x32xf32>
    %357 = arith.subf %356, %355 : vector<8x32xf32>
    %358 = math.exp %357 : vector<8x32xf32>
    %cst_107 = arith.constant 1.000000e+00 : f32
    %359 = vector.broadcast %cst_107 : f32 to vector<8x32xf32>
    %360 = arith.addf %359, %358 : vector<8x32xf32>
    %cst_108 = arith.constant 1.000000e+00 : f32
    %361 = vector.broadcast %cst_108 : f32 to vector<8x32xf32>
    %362 = arith.divf %361, %360 : vector<8x32xf32>
    %363 = vector.extract_strided_slice %346 {offsets = [0, 64], sizes = [8, 32], strides = [1, 1]} : vector<8x128xf32> to vector<8x32xf32>
    %364 = math.tanh %363 : vector<8x32xf32>
    %365 = vector.extract_strided_slice %346 {offsets = [0, 96], sizes = [8, 32], strides = [1, 1]} : vector<8x128xf32> to vector<8x32xf32>
    %cst_109 = arith.constant 0.000000e+00 : f32
    %366 = vector.broadcast %cst_109 : f32 to vector<8x32xf32>
    %367 = arith.subf %366, %365 : vector<8x32xf32>
    %368 = math.exp %367 : vector<8x32xf32>
    %cst_110 = arith.constant 1.000000e+00 : f32
    %369 = vector.broadcast %cst_110 : f32 to vector<8x32xf32>
    %370 = arith.addf %369, %368 : vector<8x32xf32>
    %cst_111 = arith.constant 1.000000e+00 : f32
    %371 = vector.broadcast %cst_111 : f32 to vector<8x32xf32>
    %372 = arith.divf %371, %370 : vector<8x32xf32>
    %373 = arith.mulf %362, %340 : vector<8x32xf32>
    %374 = arith.mulf %354, %364 : vector<8x32xf32>
    %375 = arith.addf %373, %374 : vector<8x32xf32>
    %376 = math.tanh %375 : vector<8x32xf32>
    %377 = arith.mulf %372, %376 : vector<8x32xf32>
    %378 = vector.extract_strided_slice %284 {offsets = [3, 0, 0], sizes = [1, 8, 128], strides = [1, 1, 1]} : vector<8x8x128xf32> to vector<1x8x128xf32>
    %379 = vector.shape_cast %378 : vector<1x8x128xf32> to vector<8x128xf32>
    %cst_112 = arith.constant dense<0.000000e+00> : vector<8x128xf32>
    %380 = tpu.matmul %377, %4, %cst_112 {dimension_numbers = #tpu.dot_dimension_numbers<[1], [0], [0], [1], [0, 0, 1, 1], [], []>} : vector<8x32xf32>, vector<32x128xf32>, vector<8x128xf32> -> vector<8x128xf32>
    %381 = arith.addf %379, %380 : vector<8x128xf32>
    %382 = vector.extract_strided_slice %381 {offsets = [0, 0], sizes = [8, 32], strides = [1, 1]} : vector<8x128xf32> to vector<8x32xf32>
    %cst_113 = arith.constant 0.000000e+00 : f32
    %383 = vector.broadcast %cst_113 : f32 to vector<8x32xf32>
    %384 = arith.subf %383, %382 : vector<8x32xf32>
    %385 = math.exp %384 : vector<8x32xf32>
    %cst_114 = arith.constant 1.000000e+00 : f32
    %386 = vector.broadcast %cst_114 : f32 to vector<8x32xf32>
    %387 = arith.addf %386, %385 : vector<8x32xf32>
    %cst_115 = arith.constant 1.000000e+00 : f32
    %388 = vector.broadcast %cst_115 : f32 to vector<8x32xf32>
    %389 = arith.divf %388, %387 : vector<8x32xf32>
    %390 = vector.extract_strided_slice %381 {offsets = [0, 32], sizes = [8, 32], strides = [1, 1]} : vector<8x128xf32> to vector<8x32xf32>
    %cst_116 = arith.constant 0.000000e+00 : f32
    %391 = vector.broadcast %cst_116 : f32 to vector<8x32xf32>
    %392 = arith.subf %391, %390 : vector<8x32xf32>
    %393 = math.exp %392 : vector<8x32xf32>
    %cst_117 = arith.constant 1.000000e+00 : f32
    %394 = vector.broadcast %cst_117 : f32 to vector<8x32xf32>
    %395 = arith.addf %394, %393 : vector<8x32xf32>
    %cst_118 = arith.constant 1.000000e+00 : f32
    %396 = vector.broadcast %cst_118 : f32 to vector<8x32xf32>
    %397 = arith.divf %396, %395 : vector<8x32xf32>
    %398 = vector.extract_strided_slice %381 {offsets = [0, 64], sizes = [8, 32], strides = [1, 1]} : vector<8x128xf32> to vector<8x32xf32>
    %399 = math.tanh %398 : vector<8x32xf32>
    %400 = vector.extract_strided_slice %381 {offsets = [0, 96], sizes = [8, 32], strides = [1, 1]} : vector<8x128xf32> to vector<8x32xf32>
    %cst_119 = arith.constant 0.000000e+00 : f32
    %401 = vector.broadcast %cst_119 : f32 to vector<8x32xf32>
    %402 = arith.subf %401, %400 : vector<8x32xf32>
    %403 = math.exp %402 : vector<8x32xf32>
    %cst_120 = arith.constant 1.000000e+00 : f32
    %404 = vector.broadcast %cst_120 : f32 to vector<8x32xf32>
    %405 = arith.addf %404, %403 : vector<8x32xf32>
    %cst_121 = arith.constant 1.000000e+00 : f32
    %406 = vector.broadcast %cst_121 : f32 to vector<8x32xf32>
    %407 = arith.divf %406, %405 : vector<8x32xf32>
    %408 = arith.mulf %397, %375 : vector<8x32xf32>
    %409 = arith.mulf %389, %399 : vector<8x32xf32>
    %410 = arith.addf %408, %409 : vector<8x32xf32>
    %411 = math.tanh %410 : vector<8x32xf32>
    %412 = arith.mulf %407, %411 : vector<8x32xf32>
    %413 = vector.extract_strided_slice %284 {offsets = [4, 0, 0], sizes = [1, 8, 128], strides = [1, 1, 1]} : vector<8x8x128xf32> to vector<1x8x128xf32>
    %414 = vector.shape_cast %413 : vector<1x8x128xf32> to vector<8x128xf32>
    %cst_122 = arith.constant dense<0.000000e+00> : vector<8x128xf32>
    %415 = tpu.matmul %412, %4, %cst_122 {dimension_numbers = #tpu.dot_dimension_numbers<[1], [0], [0], [1], [0, 0, 1, 1], [], []>} : vector<8x32xf32>, vector<32x128xf32>, vector<8x128xf32> -> vector<8x128xf32>
    %416 = arith.addf %414, %415 : vector<8x128xf32>
    %417 = vector.extract_strided_slice %416 {offsets = [0, 0], sizes = [8, 32], strides = [1, 1]} : vector<8x128xf32> to vector<8x32xf32>
    %cst_123 = arith.constant 0.000000e+00 : f32
    %418 = vector.broadcast %cst_123 : f32 to vector<8x32xf32>
    %419 = arith.subf %418, %417 : vector<8x32xf32>
    %420 = math.exp %419 : vector<8x32xf32>
    %cst_124 = arith.constant 1.000000e+00 : f32
    %421 = vector.broadcast %cst_124 : f32 to vector<8x32xf32>
    %422 = arith.addf %421, %420 : vector<8x32xf32>
    %cst_125 = arith.constant 1.000000e+00 : f32
    %423 = vector.broadcast %cst_125 : f32 to vector<8x32xf32>
    %424 = arith.divf %423, %422 : vector<8x32xf32>
    %425 = vector.extract_strided_slice %416 {offsets = [0, 32], sizes = [8, 32], strides = [1, 1]} : vector<8x128xf32> to vector<8x32xf32>
    %cst_126 = arith.constant 0.000000e+00 : f32
    %426 = vector.broadcast %cst_126 : f32 to vector<8x32xf32>
    %427 = arith.subf %426, %425 : vector<8x32xf32>
    %428 = math.exp %427 : vector<8x32xf32>
    %cst_127 = arith.constant 1.000000e+00 : f32
    %429 = vector.broadcast %cst_127 : f32 to vector<8x32xf32>
    %430 = arith.addf %429, %428 : vector<8x32xf32>
    %cst_128 = arith.constant 1.000000e+00 : f32
    %431 = vector.broadcast %cst_128 : f32 to vector<8x32xf32>
    %432 = arith.divf %431, %430 : vector<8x32xf32>
    %433 = vector.extract_strided_slice %416 {offsets = [0, 64], sizes = [8, 32], strides = [1, 1]} : vector<8x128xf32> to vector<8x32xf32>
    %434 = math.tanh %433 : vector<8x32xf32>
    %435 = vector.extract_strided_slice %416 {offsets = [0, 96], sizes = [8, 32], strides = [1, 1]} : vector<8x128xf32> to vector<8x32xf32>
    %cst_129 = arith.constant 0.000000e+00 : f32
    %436 = vector.broadcast %cst_129 : f32 to vector<8x32xf32>
    %437 = arith.subf %436, %435 : vector<8x32xf32>
    %438 = math.exp %437 : vector<8x32xf32>
    %cst_130 = arith.constant 1.000000e+00 : f32
    %439 = vector.broadcast %cst_130 : f32 to vector<8x32xf32>
    %440 = arith.addf %439, %438 : vector<8x32xf32>
    %cst_131 = arith.constant 1.000000e+00 : f32
    %441 = vector.broadcast %cst_131 : f32 to vector<8x32xf32>
    %442 = arith.divf %441, %440 : vector<8x32xf32>
    %443 = arith.mulf %432, %410 : vector<8x32xf32>
    %444 = arith.mulf %424, %434 : vector<8x32xf32>
    %445 = arith.addf %443, %444 : vector<8x32xf32>
    %446 = math.tanh %445 : vector<8x32xf32>
    %447 = arith.mulf %442, %446 : vector<8x32xf32>
    %448 = vector.extract_strided_slice %284 {offsets = [5, 0, 0], sizes = [1, 8, 128], strides = [1, 1, 1]} : vector<8x8x128xf32> to vector<1x8x128xf32>
    %449 = vector.shape_cast %448 : vector<1x8x128xf32> to vector<8x128xf32>
    %cst_132 = arith.constant dense<0.000000e+00> : vector<8x128xf32>
    %450 = tpu.matmul %447, %4, %cst_132 {dimension_numbers = #tpu.dot_dimension_numbers<[1], [0], [0], [1], [0, 0, 1, 1], [], []>} : vector<8x32xf32>, vector<32x128xf32>, vector<8x128xf32> -> vector<8x128xf32>
    %451 = arith.addf %449, %450 : vector<8x128xf32>
    %452 = vector.extract_strided_slice %451 {offsets = [0, 0], sizes = [8, 32], strides = [1, 1]} : vector<8x128xf32> to vector<8x32xf32>
    %cst_133 = arith.constant 0.000000e+00 : f32
    %453 = vector.broadcast %cst_133 : f32 to vector<8x32xf32>
    %454 = arith.subf %453, %452 : vector<8x32xf32>
    %455 = math.exp %454 : vector<8x32xf32>
    %cst_134 = arith.constant 1.000000e+00 : f32
    %456 = vector.broadcast %cst_134 : f32 to vector<8x32xf32>
    %457 = arith.addf %456, %455 : vector<8x32xf32>
    %cst_135 = arith.constant 1.000000e+00 : f32
    %458 = vector.broadcast %cst_135 : f32 to vector<8x32xf32>
    %459 = arith.divf %458, %457 : vector<8x32xf32>
    %460 = vector.extract_strided_slice %451 {offsets = [0, 32], sizes = [8, 32], strides = [1, 1]} : vector<8x128xf32> to vector<8x32xf32>
    %cst_136 = arith.constant 0.000000e+00 : f32
    %461 = vector.broadcast %cst_136 : f32 to vector<8x32xf32>
    %462 = arith.subf %461, %460 : vector<8x32xf32>
    %463 = math.exp %462 : vector<8x32xf32>
    %cst_137 = arith.constant 1.000000e+00 : f32
    %464 = vector.broadcast %cst_137 : f32 to vector<8x32xf32>
    %465 = arith.addf %464, %463 : vector<8x32xf32>
    %cst_138 = arith.constant 1.000000e+00 : f32
    %466 = vector.broadcast %cst_138 : f32 to vector<8x32xf32>
    %467 = arith.divf %466, %465 : vector<8x32xf32>
    %468 = vector.extract_strided_slice %451 {offsets = [0, 64], sizes = [8, 32], strides = [1, 1]} : vector<8x128xf32> to vector<8x32xf32>
    %469 = math.tanh %468 : vector<8x32xf32>
    %470 = vector.extract_strided_slice %451 {offsets = [0, 96], sizes = [8, 32], strides = [1, 1]} : vector<8x128xf32> to vector<8x32xf32>
    %cst_139 = arith.constant 0.000000e+00 : f32
    %471 = vector.broadcast %cst_139 : f32 to vector<8x32xf32>
    %472 = arith.subf %471, %470 : vector<8x32xf32>
    %473 = math.exp %472 : vector<8x32xf32>
    %cst_140 = arith.constant 1.000000e+00 : f32
    %474 = vector.broadcast %cst_140 : f32 to vector<8x32xf32>
    %475 = arith.addf %474, %473 : vector<8x32xf32>
    %cst_141 = arith.constant 1.000000e+00 : f32
    %476 = vector.broadcast %cst_141 : f32 to vector<8x32xf32>
    %477 = arith.divf %476, %475 : vector<8x32xf32>
    %478 = arith.mulf %467, %445 : vector<8x32xf32>
    %479 = arith.mulf %459, %469 : vector<8x32xf32>
    %480 = arith.addf %478, %479 : vector<8x32xf32>
    %481 = math.tanh %480 : vector<8x32xf32>
    %482 = arith.mulf %477, %481 : vector<8x32xf32>
    %483 = vector.extract_strided_slice %284 {offsets = [6, 0, 0], sizes = [1, 8, 128], strides = [1, 1, 1]} : vector<8x8x128xf32> to vector<1x8x128xf32>
    %484 = vector.shape_cast %483 : vector<1x8x128xf32> to vector<8x128xf32>
    %cst_142 = arith.constant dense<0.000000e+00> : vector<8x128xf32>
    %485 = tpu.matmul %482, %4, %cst_142 {dimension_numbers = #tpu.dot_dimension_numbers<[1], [0], [0], [1], [0, 0, 1, 1], [], []>} : vector<8x32xf32>, vector<32x128xf32>, vector<8x128xf32> -> vector<8x128xf32>
    %486 = arith.addf %484, %485 : vector<8x128xf32>
    %487 = vector.extract_strided_slice %486 {offsets = [0, 0], sizes = [8, 32], strides = [1, 1]} : vector<8x128xf32> to vector<8x32xf32>
    %cst_143 = arith.constant 0.000000e+00 : f32
    %488 = vector.broadcast %cst_143 : f32 to vector<8x32xf32>
    %489 = arith.subf %488, %487 : vector<8x32xf32>
    %490 = math.exp %489 : vector<8x32xf32>
    %cst_144 = arith.constant 1.000000e+00 : f32
    %491 = vector.broadcast %cst_144 : f32 to vector<8x32xf32>
    %492 = arith.addf %491, %490 : vector<8x32xf32>
    %cst_145 = arith.constant 1.000000e+00 : f32
    %493 = vector.broadcast %cst_145 : f32 to vector<8x32xf32>
    %494 = arith.divf %493, %492 : vector<8x32xf32>
    %495 = vector.extract_strided_slice %486 {offsets = [0, 32], sizes = [8, 32], strides = [1, 1]} : vector<8x128xf32> to vector<8x32xf32>
    %cst_146 = arith.constant 0.000000e+00 : f32
    %496 = vector.broadcast %cst_146 : f32 to vector<8x32xf32>
    %497 = arith.subf %496, %495 : vector<8x32xf32>
    %498 = math.exp %497 : vector<8x32xf32>
    %cst_147 = arith.constant 1.000000e+00 : f32
    %499 = vector.broadcast %cst_147 : f32 to vector<8x32xf32>
    %500 = arith.addf %499, %498 : vector<8x32xf32>
    %cst_148 = arith.constant 1.000000e+00 : f32
    %501 = vector.broadcast %cst_148 : f32 to vector<8x32xf32>
    %502 = arith.divf %501, %500 : vector<8x32xf32>
    %503 = vector.extract_strided_slice %486 {offsets = [0, 64], sizes = [8, 32], strides = [1, 1]} : vector<8x128xf32> to vector<8x32xf32>
    %504 = math.tanh %503 : vector<8x32xf32>
    %505 = vector.extract_strided_slice %486 {offsets = [0, 96], sizes = [8, 32], strides = [1, 1]} : vector<8x128xf32> to vector<8x32xf32>
    %cst_149 = arith.constant 0.000000e+00 : f32
    %506 = vector.broadcast %cst_149 : f32 to vector<8x32xf32>
    %507 = arith.subf %506, %505 : vector<8x32xf32>
    %508 = math.exp %507 : vector<8x32xf32>
    %cst_150 = arith.constant 1.000000e+00 : f32
    %509 = vector.broadcast %cst_150 : f32 to vector<8x32xf32>
    %510 = arith.addf %509, %508 : vector<8x32xf32>
    %cst_151 = arith.constant 1.000000e+00 : f32
    %511 = vector.broadcast %cst_151 : f32 to vector<8x32xf32>
    %512 = arith.divf %511, %510 : vector<8x32xf32>
    %513 = arith.mulf %502, %480 : vector<8x32xf32>
    %514 = arith.mulf %494, %504 : vector<8x32xf32>
    %515 = arith.addf %513, %514 : vector<8x32xf32>
    %516 = math.tanh %515 : vector<8x32xf32>
    %517 = arith.mulf %512, %516 : vector<8x32xf32>
    %518 = vector.extract_strided_slice %284 {offsets = [7, 0, 0], sizes = [1, 8, 128], strides = [1, 1, 1]} : vector<8x8x128xf32> to vector<1x8x128xf32>
    %519 = vector.shape_cast %518 : vector<1x8x128xf32> to vector<8x128xf32>
    %cst_152 = arith.constant dense<0.000000e+00> : vector<8x128xf32>
    %520 = tpu.matmul %517, %4, %cst_152 {dimension_numbers = #tpu.dot_dimension_numbers<[1], [0], [0], [1], [0, 0, 1, 1], [], []>} : vector<8x32xf32>, vector<32x128xf32>, vector<8x128xf32> -> vector<8x128xf32>
    %521 = arith.addf %519, %520 : vector<8x128xf32>
    %522 = vector.extract_strided_slice %521 {offsets = [0, 0], sizes = [8, 32], strides = [1, 1]} : vector<8x128xf32> to vector<8x32xf32>
    %cst_153 = arith.constant 0.000000e+00 : f32
    %523 = vector.broadcast %cst_153 : f32 to vector<8x32xf32>
    %524 = arith.subf %523, %522 : vector<8x32xf32>
    %525 = math.exp %524 : vector<8x32xf32>
    %cst_154 = arith.constant 1.000000e+00 : f32
    %526 = vector.broadcast %cst_154 : f32 to vector<8x32xf32>
    %527 = arith.addf %526, %525 : vector<8x32xf32>
    %cst_155 = arith.constant 1.000000e+00 : f32
    %528 = vector.broadcast %cst_155 : f32 to vector<8x32xf32>
    %529 = arith.divf %528, %527 : vector<8x32xf32>
    %530 = vector.extract_strided_slice %521 {offsets = [0, 32], sizes = [8, 32], strides = [1, 1]} : vector<8x128xf32> to vector<8x32xf32>
    %cst_156 = arith.constant 0.000000e+00 : f32
    %531 = vector.broadcast %cst_156 : f32 to vector<8x32xf32>
    %532 = arith.subf %531, %530 : vector<8x32xf32>
    %533 = math.exp %532 : vector<8x32xf32>
    %cst_157 = arith.constant 1.000000e+00 : f32
    %534 = vector.broadcast %cst_157 : f32 to vector<8x32xf32>
    %535 = arith.addf %534, %533 : vector<8x32xf32>
    %cst_158 = arith.constant 1.000000e+00 : f32
    %536 = vector.broadcast %cst_158 : f32 to vector<8x32xf32>
    %537 = arith.divf %536, %535 : vector<8x32xf32>
    %538 = vector.extract_strided_slice %521 {offsets = [0, 64], sizes = [8, 32], strides = [1, 1]} : vector<8x128xf32> to vector<8x32xf32>
    %539 = math.tanh %538 : vector<8x32xf32>
    %540 = vector.extract_strided_slice %521 {offsets = [0, 96], sizes = [8, 32], strides = [1, 1]} : vector<8x128xf32> to vector<8x32xf32>
    %cst_159 = arith.constant 0.000000e+00 : f32
    %541 = vector.broadcast %cst_159 : f32 to vector<8x32xf32>
    %542 = arith.subf %541, %540 : vector<8x32xf32>
    %543 = math.exp %542 : vector<8x32xf32>
    %cst_160 = arith.constant 1.000000e+00 : f32
    %544 = vector.broadcast %cst_160 : f32 to vector<8x32xf32>
    %545 = arith.addf %544, %543 : vector<8x32xf32>
    %cst_161 = arith.constant 1.000000e+00 : f32
    %546 = vector.broadcast %cst_161 : f32 to vector<8x32xf32>
    %547 = arith.divf %546, %545 : vector<8x32xf32>
    %548 = arith.mulf %537, %515 : vector<8x32xf32>
    %549 = arith.mulf %529, %539 : vector<8x32xf32>
    %550 = arith.addf %548, %549 : vector<8x32xf32>
    %551 = math.tanh %550 : vector<8x32xf32>
    %552 = arith.mulf %547, %551 : vector<8x32xf32>
    %c0_162 = arith.constant 0 : index
    %c0_163 = arith.constant 0 : index
    %553 = vector.load %arg3[%c0_162, %c0_163] : memref<8x32xf32, #tpu.memory_space<vmem>>, vector<8x32xf32>
    tpu.vector_store %arg3[%c0_162, %c0_163], %552 {strides = array<i32>} : memref<8x32xf32, #tpu.memory_space<vmem>>, vector<8x32xf32>,
    return
  }
  func.func @transform_0(%arg0: i32) -> (i32, i32, i32) {
    %c0_i32 = arith.constant 0 : i32
    %c0_i32_0 = arith.constant 0 : i32
    %c0_i32_1 = arith.constant 0 : i32
    return %arg0, %c0_i32, %c0_i32_0 : i32, i32, i32
  }
  func.func @transform_1(%arg0: i32) -> (i32, i32) {
    %c0_i32 = arith.constant 0 : i32
    %c0_i32_0 = arith.constant 0 : i32
    %c0_i32_1 = arith.constant 0 : i32
    return %c0_i32, %c0_i32_0 : i32, i32
  }
  func.func @transform_2(%arg0: i32) -> (i32, i32) {
    %c0_i32 = arith.constant 0 : i32
    %c0_i32_0 = arith.constant 0 : i32
    return %arg0, %c0_i32 : i32, i32
  }
}

</mosaic_0001>

<llo_original>
// kernel: tpu_custom_call.1
$region0: #{tpu_custom_call.1}
  #allocation0 [shape = 'u32[]', space=smem, size = 0x4, offset = 0x4, fixed_abs, tag = 'smem constant byte address 0x4 - core index']
  #allocation1 [shape = 'u32[144,128]{1,0:T(1,128)}', space=vmem, size = 0x12000, scoped, tag = 'internal scratch']
  %s0 = inlined_call_operand.hbm [shape: f32[16,8,16], index: 0, kind: input, shape index: {}]
  %s1 = inlined_call_operand.hbm [shape: f32[120,128], index: 1, kind: input, shape index: {}]
  %s2 = inlined_call_operand.hbm [shape: f32[16,32], index: 2, kind: output, shape index: {}]
  %s3 = sld [smem:[#allocation0]]
  $region49: #{tpu_custom_call.1} parent=0
    _
  %s5 = ssub.s32 1, %s3
  %s6 = scalar_select 0, %s5, %s3
  $region1: #{tpu_custom_call.1} parent=0
    #allocation2 [shape = 'u8[65536]{0}', space=vmem, size = 0x10000, scoped, tag = 'input window, operand 0']
    #allocation3 [shape = 's32[2]{0}', space=sflag, size = 0x8, scoped, tag = 'scoped memory for tpu_custom_call.1']
    #allocation4 [shape = 's32[2]{0}', space=sflag, size = 0x8, scoped, tag = 'scoped memory for tpu_custom_call.1']
    #allocation5 [shape = 'u8[61440]{0}', space=vmem, size = 0xf000, scoped, tag = 'input window, operand 1, single buffered']
    #allocation6 [shape = 's32[1]{0}', space=sflag, size = 0x4, scoped, tag = 'scoped memory for tpu_custom_call.1']
    #allocation7 [shape = 'u8[8192]{0}', space=vmem, size = 0x2000, scoped, tag = 'output window, operand 0']
    %7 = vsyncpa [#allocation3], 0
    %s8 = scalar_lea.sflag [#allocation3], 1
    %9 = vsyncpa %s8, 0
    %10 = vsyncpa [#allocation6], 0
    %11 = vsyncpa [#allocation4], 0
    %s12 = scalar_lea.sflag [#allocation4], 1
    %13 = vsyncpa %s12, 0
    loop: start=0, step=1, limit=4
    $region2: #{tpu_custom_call.1} parent=1 // loop_pre_header
      _
    $region3: #{tpu_custom_call.1} parent=1 // loop_header
      %s15 = sphi 0, %s19
      %p16 = scmp.ge.s32.totalorder %s15, 4
      %s25 = sphi 0, %s27
      %s28 = sphi 0, %s25
      %s29 = sphi 0, %s28
      %s45 = sphi 0, %s29
      %s49 = sphi 0, %s49
      %s51 = sphi 0, %s49
      %s52 = sphi 0, %s51
      %s66 = sphi 0, %s52
      %s72 = sphi 0, %s74
      %s75 = sphi 0, %s72
      %s76 = sphi 0, %s75
      %s92 = sphi 0, %s76
    $region4: #{tpu_custom_call.1} parent=1 // loop_header_branch
      %18 = sbr.rel (%p16) target = $region8
    $region5: #{tpu_custom_call.1} parent=1 // loop_body
      %s20 = ssub.s32 %s15, 1
      %s21 = ssub.s32 %s15, 2
      %s22 = sadd.s32 %s15, 1
      %s23 = ssub.s32 %s15, %s22
      %p24 = scmp.eq.s32.totalorder %s23, 0
      %s26 = sadd.s32 %s25, 1
      %s27 = scalar_select %p24, %s25, %s26
      %p30 = pneg %p24
      %p31 = scmp.eq.s32.totalorder %s15, 1
      %p32 = por %p30, %p31
      %p33 = scmp.ne.s32.totalorder %s25, %s28
      %p34 = scmp.eq.s32.totalorder %s15, 0
      %p35 = por %p33, %p34
      %p36 = scmp.ne.s32.totalorder %s25, %s28
      %p37 = scmp.eq.s32.totalorder %s20, 1
      %p38 = por %p36, %p37
      %p39 = scmp.ne.s32.totalorder %s28, %s29
      %p40 = scmp.eq.s32.totalorder %s20, 0
      %p41 = por %p39, %p40
      %p42 = scmp.ne.s32.totalorder %s28, %s29
      %p43 = scmp.eq.s32.totalorder %s21, 1
      %p44 = por %p42, %p43
      %p46 = scmp.ne.s32.totalorder %s29, %s45
      %p47 = scmp.eq.s32.totalorder %s21, 0
      %p48 = por %p46, %p47
      %s50 = sadd.s32 %s49, 1
      %p53 = scmp.eq.s32.totalorder %s15, 1
      %p54 = scmp.ne.s32.totalorder %s49, %s51
      %p55 = scmp.eq.s32.totalorder %s15, 0
      %p56 = por %p54, %p55
      %p57 = scmp.ne.s32.totalorder %s49, %s51
      %p58 = scmp.eq.s32.totalorder %s20, 1
      %p59 = por %p57, %p58
      %p60 = scmp.ne.s32.totalorder %s51, %s52
      %p61 = scmp.eq.s32.totalorder %s20, 0
      %p62 = por %p60, %p61
      %p63 = scmp.ne.s32.totalorder %s51, %s52
      %p64 = scmp.eq.s32.totalorder %s21, 1
      %p65 = por %p63, %p64
      %p67 = scmp.ne.s32.totalorder %s52, %s66
      %p68 = scmp.eq.s32.totalorder %s21, 0
      %p69 = por %p67, %p68
      %s70 = ssub.s32 %s15, %s22
      %p71 = scmp.eq.s32.totalorder %s70, 0
      %s73 = sadd.s32 %s72, 1
      %s74 = scalar_select %p71, %s72, %s73
      %p77 = pneg %p71
      %p78 = scmp.eq.s32.totalorder %s15, 1
      %p79 = por %p77, %p78
      %p80 = scmp.ne.s32.totalorder %s72, %s75
      %p81 = scmp.eq.s32.totalorder %s15, 0
      %p82 = por %p80, %p81
      %p83 = scmp.ne.s32.totalorder %s72, %s75
      %p84 = scmp.eq.s32.totalorder %s20, 1
      %p85 = por %p83, %p84
      %p86 = scmp.ne.s32.totalorder %s75, %s76
      %p87 = scmp.eq.s32.totalorder %s20, 0
      %p88 = por %p86, %p87
      %p89 = scmp.ne.s32.totalorder %s75, %s76
      %p90 = scmp.eq.s32.totalorder %s21, 1
      %p91 = por %p89, %p90
      %p93 = scmp.ne.s32.totalorder %s76, %s92
      %p94 = scmp.eq.s32.totalorder %s21, 0
      %p95 = por %p93, %p94
      %p96 = scmp.le.s32.totalorder 1, %s15
      %p97 = scmp.lt.s32.totalorder %s15, 3
      %p98 = pnand %p96, %p97
      %p99 = pneg %p98
      // Predicated region
      $region9: #{tpu_custom_call.1} parent=5 // pred_check
        _
      $region10: #{tpu_custom_call.1} parent=5 // pred_check_branch
        %101 = sbr.rel (%p98) target = $region12
      $region11: #{tpu_custom_call.1} parent=5 // pred_region
        %s102 = ssub.s32 %s15, 1
        // Predicated region
        $region13: #{tpu_custom_call.1} parent=11 // pred_check
          %p103 = pneg %p62
        $region14: #{tpu_custom_call.1} parent=11 // pred_check_branch
          %105 = sbr.rel (%p103) target = $region16
        $region15: #{tpu_custom_call.1} parent=11 // pred_region
          %s107 = ssub.s32 1920, 1920
          %108 = vsyncadd [#allocation6], %s107
          %s109 = sshll.u32 [#allocation5], 4
          %s110 = int_to_ptr.vmem [resolvable:$true] %s109
          %115 = dma.hbm_to_vmem [thread:$0]  %s1, 1920, %s110, [#allocation6], 128, 128, 8
        $region16: #{tpu_custom_call.1} parent=11 // pred_fallthru
          _
      $region12: #{tpu_custom_call.1} parent=5 // pred_fallthru
        _
      %p116 = scmp.lt.s32.totalorder %s15, 2
      // Predicated region
      $region17: #{tpu_custom_call.1} parent=5 // pred_check
        %p117 = pneg %p116
      $region18: #{tpu_custom_call.1} parent=5 // pred_check_branch
        %119 = sbr.rel (%p117) target = $region20
      $region19: #{tpu_custom_call.1} parent=5 // pred_region
        // Predicated region
        $region21: #{tpu_custom_call.1} parent=19 // pred_check
          %p120 = pneg %p35
        $region22: #{tpu_custom_call.1} parent=19 // pred_check_branch
          %122 = sbr.rel (%p120) target = $region24
        $region23: #{tpu_custom_call.1} parent=19 // pred_region
          %s123 = sand.u32 %s25, 1
          %s124 = scalar_lea.sflag [#allocation3], %s123
          %s125 = sand.u32 %s25, 1
          %s126 = smul.addr %s125, 64
          %s127 = scalar_lea.vmem [#allocation2], %s126
          %s128 = smul.u32 8, %s15
          %s130 = ssub.s32 1024, 1024
          %131 = vsyncadd %s124, %s130
          %s132 = smul.addr %s128, 128
          %s133 = scalar_lea.hbm %s0, %s132
          %s134 = sshll.u32 %s127, 4
          %s135 = int_to_ptr.vmem [resolvable:$true] %s134
          %140 = dma.hbm_to_vmem [thread:$0]  %s133, 1024, %s135, %s124, 128, 128, 8
        $region24: #{tpu_custom_call.1} parent=19 // pred_fallthru
          _
      $region20: #{tpu_custom_call.1} parent=5 // pred_fallthru
        _
      %p141 = scmp.le.s32.totalorder 1, %s15
      %p142 = scmp.lt.s32.totalorder %s15, 3
      %p143 = pnand %p141, %p142
      %p144 = pneg %p143
      // Predicated region
      $region25: #{tpu_custom_call.1} parent=5 // pred_check
        _
      $region26: #{tpu_custom_call.1} parent=5 // pred_check_branch
        %146 = sbr.rel (%p143) target = $region28
      $region27: #{tpu_custom_call.1} parent=5 // pred_region
        %s147 = ssub.s32 %s15, 1
        %s148 = sand.u32 %s28, 1
        %s149 = scalar_lea.sflag [#allocation3], %s148
        %s150 = sand.u32 %s28, 1
        %s151 = smul.addr %s150, 64
        %s152 = scalar_lea.vmem [#allocation2], %s151
        // Predicated region
        $region29: #{tpu_custom_call.1} parent=27 // pred_check
          %p153 = pneg %p41
        $region30: #{tpu_custom_call.1} parent=27 // pred_check_branch
          %155 = sbr.rel (%p153) target = $region32
        $region31: #{tpu_custom_call.1} parent=27 // pred_region
          %156 = dma.done %s149, 1024
        $region32: #{tpu_custom_call.1} parent=27 // pred_fallthru
          _
        // Predicated region
        $region33: #{tpu_custom_call.1} parent=27 // pred_check
          %p157 = pneg %p62
        $region34: #{tpu_custom_call.1} parent=27 // pred_check_branch
          %159 = sbr.rel (%p157) target = $region36
        $region35: #{tpu_custom_call.1} parent=27 // pred_region
          %160 = dma.done [#allocation6], 1920
        $region36: #{tpu_custom_call.1} parent=27 // pred_fallthru
          _
        %s161 = sand.u32 %s28, 1
        %s162 = scalar_lea.sflag [#allocation3], %s161
        %s163 = sand.u32 %s28, 1
        %s164 = smul.addr %s163, 64
        %s165 = scalar_lea.vmem [#allocation2], %s164
        %p166 = pneg %p41
        %p167 = pneg %p38
        %p168 = pneg %p62
        %p169 = pneg %p59
        %p170 = pneg %p88
        %p171 = pneg %p85
        %s172 = sand.u32 %s75, 1
        %s173 = scalar_lea.sflag [#allocation4], %s172
        %s174 = sand.u32 %s75, 1
        %s175 = smul.addr %s174, 8
        %s176 = scalar_lea.vmem [#allocation7], %s175
        %s177 = smul.u32 8, %s20
        %v178 = vld [vmem:[%s152] sm:$0xff]
        %v179 = vld [vmem:[%s152 + $0x8] sm:$0xff]
        %v180 = vld [vmem:[%s152 + $0x10] sm:$0xff]
        %v181 = vld [vmem:[%s152 + $0x18] sm:$0xff]
        %v182 = vld [vmem:[%s152 + $0x20] sm:$0xff]
        %v183 = vld [vmem:[%s152 + $0x28] sm:$0xff]
        %v184 = vld [vmem:[%s152 + $0x30] sm:$0xff]
        %v185 = vld [vmem:[%s152 + $0x38] sm:$0xff]
        %v186 = vld [vmem:[#allocation5] sm:$0xff]
        %v187 = vld [vmem:[#allocation5 + $0x8] sm:$0xff]
        %v188 = vld [vmem:[#allocation5 + $0x10] sm:$0xff]
        %v189 = vld [vmem:[#allocation5 + $0x18] sm:$0xff]
        %v190 = vld [vmem:[#allocation5 + $0x20] sm:$0xff]
        %v191 = vld [vmem:[#allocation5 + $0x28] sm:$0xff]
        %v192 = vld [vmem:[#allocation5 + $0x30] sm:$0xff]
        %v193 = vld [vmem:[#allocation5 + $0x38] sm:$0xff]
        %v194 = vld [vmem:[#allocation5 + $0x40] sm:$0xff]
        %v195 = vld [vmem:[#allocation5 + $0x48] sm:$0xff]
        %v196 = vld [vmem:[#allocation5 + $0x50] sm:$0xff]
        %v197 = vld [vmem:[#allocation5 + $0x58] sm:$0xff]
        %v198 = vld [vmem:[#allocation5 + $0x60] sm:$0xff]
        %v199 = vld [vmem:[#allocation5 + $0x68] sm:$0xff]
        %v200 = vld [vmem:[#allocation5 + $0x70] sm:$0x1]
        %v201 = vld [vmem:[#allocation5 + $0x71] sm:$0x1]
        %v202 = vlaneseq
        %v203 = vshrl.u32 %v202, 7
        %v204 = vsub.s32 0, %v203
        %v205 = vrot.slane %v200, %v204
        %vm206 = vcmask 130048
        %v208 = vsel %vm206, %v178, 0
        %v211 = vsel %vm206, %v179, 0
        %v214 = vsel %vm206, %v180, 0
        %v217 = vsel %vm206, %v181, 0
        %v220 = vsel %vm206, %v182, 0
        %v223 = vsel %vm206, %v183, 0
        %v226 = vsel %vm206, %v184, 0
        %v229 = vsel %vm206, %v185, 0
        %231 = vmatprep.subr.mxu0 0.0
        %232 = vmatpush1.msra.mxu0 %v186
        %233 = vmatprep.subr.mxu0 0.0
        %234 = vmatpush1.msra.mxu0 %v187
        %235 = vmatprep.subr.mxu0 0.0
        %236 = vmatpush1.msra.mxu0 0.0
        %237 = vmatprep.subr.mxu0 0.0
        %238 = vmatpush1.msra.mxu0 0.0
        %239 = vmatprep.subr.mxu0 0.0
        %240 = vmatpush1.msra.mxu0 0.0
        %241 = vmatprep.subr.mxu0 0.0
        %242 = vmatpush1.msra.mxu0 0.0
        %243 = vmatprep.subr.mxu0 0.0
        %244 = vmatpush1.msra.mxu0 0.0
        %245 = vmatprep.subr.mxu0 0.0
        %246 = vmatpush1.msra.mxu0 0.0
        %247 = vmatprep.subr.mxu0 0.0
        %248 = vmatpush1.msra.mxu0 0.0
        %249 = vmatprep.subr.mxu0 0.0
        %250 = vmatpush1.msra.mxu0 0.0
        %251 = vmatprep.subr.mxu0 0.0
        %252 = vmatpush1.msra.mxu0 0.0
        %253 = vmatprep.subr.mxu0 0.0
        %254 = vmatpush1.msra.mxu0 0.0
        %255 = vmatprep.subr.mxu0 0.0
        %256 = vmatpush1.msra.mxu0 0.0
        %257 = vmatprep.subr.mxu0 0.0
        %258 = vmatpush1.msra.mxu0 0.0
        %259 = vmatprep.subr.mxu0 0.0
        %260 = vmatpush1.msra.mxu0 0.0
        %261 = vmatprep.subr.mxu0 0.0
        %262 = vmatpush1.msra.mxu0 0.0
        %263 = vmatprep.subr.mxu0 0.0
        %264 = vmatpush1.msra.mxu0 0.0
        %265 = vmatprep.subr.mxu0 0.0
        %266 = vmatpush1.msra.mxu0 0.0
        %267 = vmatprep.subr.mxu0 0.0
        %268 = vmatpush1.msra.mxu0 0.0
        %269 = vmatprep.subr.mxu0 0.0
        %270 = vmatpush1.msra.mxu0 0.0
        %271 = vmatprep.subr.mxu0 0.0
        %272 = vmatpush1.msra.mxu0 0.0
        %273 = vmatprep.subr.mxu0 0.0
        %274 = vmatpush1.msra.mxu0 0.0
        %275 = vmatprep.subr.mxu0 0.0
        %276 = vmatpush1.msra.mxu0 0.0
        %277 = vmatprep.subr.mxu0 0.0
        %278 = vmatpush1.msra.mxu0 0.0
        %279 = vmatprep.subr.mxu0 0.0
        %280 = vmatpush1.msra.mxu0 0.0
        %281 = vmatprep.subr.mxu0 0.0
        %282 = vmatpush1.msra.mxu0 0.0
        %283 = vmatprep.subr.mxu0 0.0
        %284 = vmatpush1.msra.mxu0 0.0
        %285 = vmatprep.subr.mxu0 0.0
        %286 = vmatpush1.msra.mxu0 0.0
        %287 = vmatprep.subr.mxu0 0.0
        %288 = vmatpush1.msra.mxu0 0.0
        %289 = vmatprep.subr.mxu0 0.0
        %290 = vmatpush1.msra.mxu0 0.0
        %291 = vmatprep.subr.mxu0 0.0
        %292 = vmatpush1.msra.mxu0 0.0
        %293 = vmatprep.subr.mxu0 0.0
        %294 = vmatpush1.msra.mxu0 0.0
        %295 = vmatprep.mubr.f32.mxu0 0.0
        %296 = vmatmul.mubr.f32.gmra.mrb[0].mxu0 %v208
        %v297 = vpop.f32.mrb[0].mxu0
        %v298 = vadd.f32 %v205, %v297
        %v299 = vpop.f32.mrb[0].mxu0
        %300 = vmatprep.mubr.f32.mxu0 0.0
        %301 = vmatmul.mubr.f32.gmra.mrb[0].mxu0 %v211
        %v302 = vpop.f32.mrb[0].mxu0
        %v303 = vadd.f32 %v205, %v302
        %v304 = vpop.f32.mrb[0].mxu0
        %305 = vmatprep.mubr.f32.mxu0 0.0
        %306 = vmatmul.mubr.f32.gmra.mrb[0].mxu0 %v214
        %v307 = vpop.f32.mrb[0].mxu0
        %v308 = vadd.f32 %v205, %v307
        %v309 = vpop.f32.mrb[0].mxu0
        %310 = vmatprep.mubr.f32.mxu0 0.0
        %311 = vmatmul.mubr.f32.gmra.mrb[0].mxu0 %v217
        %v312 = vpop.f32.mrb[0].mxu0
        %v313 = vadd.f32 %v205, %v312
        %v314 = vpop.f32.mrb[0].mxu0
        %315 = vmatprep.mubr.f32.mxu0 0.0
        %316 = vmatmul.mubr.f32.gmra.mrb[0].mxu0 %v220
        %v317 = vpop.f32.mrb[0].mxu0
        %v318 = vadd.f32 %v205, %v317
        %v319 = vpop.f32.mrb[0].mxu0
        %320 = vmatprep.mubr.f32.mxu0 0.0
        %321 = vmatmul.mubr.f32.gmra.mrb[0].mxu0 %v223
        %v322 = vpop.f32.mrb[0].mxu0
        %v323 = vadd.f32 %v205, %v322
        %v324 = vpop.f32.mrb[0].mxu0
        %325 = vmatprep.mubr.f32.mxu0 0.0
        %326 = vmatmul.mubr.f32.gmra.mrb[0].mxu0 %v226
        %v327 = vpop.f32.mrb[0].mxu0
        %v328 = vadd.f32 %v205, %v327
        %v329 = vpop.f32.mrb[0].mxu0
        %330 = vmatprep.mubr.f32.mxu0 0.0
        %331 = vmatmul.mubr.f32.gmra.mrb[0].mxu0 %v229
        %v332 = vpop.f32.mrb[0].mxu0
        %v333 = vadd.f32 %v205, %v332
        %v334 = vpop.f32.mrb[0].mxu0
        %335 = vdwg.mxu0
        %v336 = vsub.f32 0.0, %v298
        %v337 = vsub.f32 0.0, %v303
        %v338 = vsub.f32 0.0, %v308
        %v339 = vsub.f32 0.0, %v313
        %v340 = vsub.f32 0.0, %v318
        %v341 = vsub.f32 0.0, %v323
        %v342 = vsub.f32 0.0, %v328
        %v343 = vsub.f32 0.0, %v333
        %v344 = vmul.f32 %v336, 1.442695
        %v345 = vpow.pop %v344
        %v346 = vmul.f32 %v337, 1.442695
        %v347 = vpow.pop %v346
        %v348 = vmul.f32 %v338, 1.442695
        %v349 = vpow.pop %v348
        %v350 = vmul.f32 %v339, 1.442695
        %v351 = vpow.pop %v350
        %v352 = vmul.f32 %v340, 1.442695
        %v353 = vpow.pop %v352
        %v354 = vmul.f32 %v341, 1.442695
        %v355 = vpow.pop %v354
        %v356 = vmul.f32 %v342, 1.442695
        %v357 = vpow.pop %v356
        %v358 = vmul.f32 %v343, 1.442695
        %v359 = vpow.pop %v358
        %v360 = vadd.f32 %v345, 1.0
        %v361 = vadd.f32 %v347, 1.0
        %v362 = vadd.f32 %v349, 1.0
        %v363 = vadd.f32 %v351, 1.0
        %v364 = vadd.f32 %v353, 1.0
        %v365 = vadd.f32 %v355, 1.0
        %v366 = vadd.f32 %v357, 1.0
        %v367 = vadd.f32 %v359, 1.0
        %v368 = vrcp.pop %v360
        %v369 = vmul.f32 1.0, %v368
        %v370 = vrcp.pop %v361
        %v371 = vmul.f32 1.0, %v370
        %v372 = vrcp.pop %v362
        %v373 = vmul.f32 1.0, %v372
        %v374 = vrcp.pop %v363
        %v375 = vmul.f32 1.0, %v374
        %v376 = vrcp.pop %v364
        %v377 = vmul.f32 1.0, %v376
        %v378 = vrcp.pop %v365
        %v379 = vmul.f32 1.0, %v378
        %v380 = vrcp.pop %v366
        %v381 = vmul.f32 1.0, %v380
        %v382 = vrcp.pop %v367
        %v383 = vmul.f32 1.0, %v382
        %v384 = vtanh.pop %v298
        %v385 = vtanh.pop %v303
        %v386 = vtanh.pop %v308
        %v387 = vtanh.pop %v313
        %v388 = vtanh.pop %v318
        %v389 = vtanh.pop %v323
        %v390 = vtanh.pop %v328
        %v391 = vtanh.pop %v333
        %400 = vrot.lane.b32.xlu0 %v384, 64
        %v401 = vpop.permute.xlu0 %400
        %402 = vrot.lane.b32.xlu0 %v385, 64
        %v403 = vpop.permute.xlu0 %402
        %404 = vrot.lane.b32.xlu0 %v386, 64
        %v405 = vpop.permute.xlu0 %404
        %406 = vrot.lane.b32.xlu0 %v387, 64
        %v407 = vpop.permute.xlu0 %406
        %408 = vrot.lane.b32.xlu0 %v388, 64
        %v409 = vpop.permute.xlu0 %408
        %410 = vrot.lane.b32.xlu0 %v389, 64
        %v411 = vpop.permute.xlu0 %410
        %412 = vrot.lane.b32.xlu0 %v390, 64
        %v413 = vpop.permute.xlu0 %412
        %414 = vrot.lane.b32.xlu0 %v391, 64
        %v415 = vpop.permute.xlu0 %414
        %v424 = vmul.f32 %v369, %v401
        %v425 = vmul.f32 %v371, %v403
        %v426 = vmul.f32 %v373, %v405
        %v427 = vmul.f32 %v375, %v407
        %v428 = vmul.f32 %v377, %v409
        %v429 = vmul.f32 %v379, %v411
        %v430 = vmul.f32 %v381, %v413
        %v431 = vmul.f32 %v383, %v415
        %v432 = vtanh.pop %v424
        %v433 = vtanh.pop %v425
        %v434 = vtanh.pop %v426
        %v435 = vtanh.pop %v427
        %v436 = vtanh.pop %v428
        %v437 = vtanh.pop %v429
        %v438 = vtanh.pop %v430
        %v439 = vtanh.pop %v431
        %448 = vrot.lane.b32.xlu0 %v432, 96
        %v449 = vpop.permute.xlu0 %448
        %450 = vrot.lane.b32.xlu0 %v433, 96
        %v451 = vpop.permute.xlu0 %450
        %452 = vrot.lane.b32.xlu0 %v434, 96
        %v453 = vpop.permute.xlu0 %452
        %454 = vrot.lane.b32.xlu0 %v435, 96
        %v455 = vpop.permute.xlu0 %454
        %456 = vrot.lane.b32.xlu0 %v436, 96
        %v457 = vpop.permute.xlu0 %456
        %458 = vrot.lane.b32.xlu0 %v437, 96
        %v459 = vpop.permute.xlu0 %458
        %460 = vrot.lane.b32.xlu0 %v438, 96
        %v461 = vpop.permute.xlu0 %460
        %462 = vrot.lane.b32.xlu0 %v439, 96
        %v463 = vpop.permute.xlu0 %462
        %v472 = vmul.f32 %v369, %v449
        %v473 = vmul.f32 %v371, %v451
        %v474 = vmul.f32 %v373, %v453
        %v475 = vmul.f32 %v375, %v455
        %v476 = vmul.f32 %v377, %v457
        %v477 = vmul.f32 %v379, %v459
        %v478 = vmul.f32 %v381, %v461
        %v479 = vmul.f32 %v383, %v463
        %v488 = vrot.slane %v473, 7
        %vm489 = vcmask 1041409
        %v490 = vsel %vm489, %v488, %v472
        %v491 = vrot.slane %v474, 6
        %vm492 = vcmask 1042434
        %v493 = vsel %vm492, %v491, %v490
        %v494 = vrot.slane %v475, 5
        %vm495 = vcmask 1043459
        %v496 = vsel %vm495, %v494, %v493
        %v497 = vrot.slane %v476, 4
        %vm498 = vcmask 1044484
        %v499 = vsel %vm498, %v497, %v496
        %v500 = vrot.slane %v477, 3
        %vm501 = vcmask 1045509
        %v502 = vsel %vm501, %v500, %v499
        %v503 = vrot.slane %v478, 2
        %vm504 = vcmask 1046534
        %v505 = vsel %vm504, %v503, %v502
        %v506 = vrot.slane %v479, 1
        %vm507 = vcmask 1047559
        %v508 = vsel %vm507, %v506, %v505
        %509 = vrot.lane.b32.xlu0 %v508, 32
        %v510 = vpop.permute.xlu0 %509
        %vm511 = vcmask 261120
        %v512 = vsel %vm511, %v510, 0
        %514 = vmatprep.subr.mxu0 0.0
        %515 = vmatpush1.msra.mxu0 %v188
        %516 = vmatprep.subr.mxu0 0.0
        %517 = vmatpush1.msra.mxu0 %v189
        %518 = vmatprep.subr.mxu0 0.0
        %519 = vmatpush1.msra.mxu0 %v190
        %520 = vmatprep.subr.mxu0 0.0
        %521 = vmatpush1.msra.mxu0 %v191
        %522 = vmatprep.subr.mxu0 0.0
        %523 = vmatpush1.msra.mxu0 0.0
        %524 = vmatprep.subr.mxu0 0.0
        %525 = vmatpush1.msra.mxu0 0.0
        %526 = vmatprep.subr.mxu0 0.0
        %527 = vmatpush1.msra.mxu0 0.0
        %528 = vmatprep.subr.mxu0 0.0
        %529 = vmatpush1.msra.mxu0 0.0
        %530 = vmatprep.subr.mxu0 0.0
        %531 = vmatpush1.msra.mxu0 0.0
        %532 = vmatprep.subr.mxu0 0.0
        %533 = vmatpush1.msra.mxu0 0.0
        %534 = vmatprep.subr.mxu0 0.0
        %535 = vmatpush1.msra.mxu0 0.0
        %536 = vmatprep.subr.mxu0 0.0
        %537 = vmatpush1.msra.mxu0 0.0
        %538 = vmatprep.subr.mxu0 0.0
        %539 = vmatpush1.msra.mxu0 0.0
        %540 = vmatprep.subr.mxu0 0.0
        %541 = vmatpush1.msra.mxu0 0.0
        %542 = vmatprep.subr.mxu0 0.0
        %543 = vmatpush1.msra.mxu0 0.0
        %544 = vmatprep.subr.mxu0 0.0
        %545 = vmatpush1.msra.mxu0 0.0
        %546 = vmatprep.subr.mxu0 0.0
        %547 = vmatpush1.msra.mxu0 0.0
        %548 = vmatprep.subr.mxu0 0.0
        %549 = vmatpush1.msra.mxu0 0.0
        %550 = vmatprep.subr.mxu0 0.0
        %551 = vmatpush1.msra.mxu0 0.0
        %552 = vmatprep.subr.mxu0 0.0
        %553 = vmatpush1.msra.mxu0 0.0
        %554 = vmatprep.subr.mxu0 0.0
        %555 = vmatpush1.msra.mxu0 0.0
        %556 = vmatprep.subr.mxu0 0.0
        %557 = vmatpush1.msra.mxu0 0.0
        %558 = vmatprep.subr.mxu0 0.0
        %559 = vmatpush1.msra.mxu0 0.0
        %560 = vmatprep.subr.mxu0 0.0
        %561 = vmatpush1.msra.mxu0 0.0
        %562 = vmatprep.subr.mxu0 0.0
        %563 = vmatpush1.msra.mxu0 0.0
        %564 = vmatprep.subr.mxu0 0.0
        %565 = vmatpush1.msra.mxu0 0.0
        %566 = vmatprep.subr.mxu0 0.0
        %567 = vmatpush1.msra.mxu0 0.0
        %568 = vmatprep.subr.mxu0 0.0
        %569 = vmatpush1.msra.mxu0 0.0
        %570 = vmatprep.subr.mxu0 0.0
        %571 = vmatpush1.msra.mxu0 0.0
        %572 = vmatprep.subr.mxu0 0.0
        %573 = vmatpush1.msra.mxu0 0.0
        %574 = vmatprep.subr.mxu0 0.0
        %575 = vmatpush1.msra.mxu0 0.0
        %576 = vmatprep.subr.mxu0 0.0
        %577 = vmatpush1.msra.mxu0 0.0
        %578 = vmatprep.mubr.f32.mxu0 0.0
        %579 = vmatmul.mubr.f32.gmra.mrb[0].mxu0 %v512
        %v580 = vpop.f32.mrb[0].mxu0
        %v581 = vadd.f32 0.0, %v580
        %v582 = vpop.f32.mrb[0].mxu0
        %583 = vdwg.mxu0
        %v585 = vrot.slane %v581, 7
        %v586 = vrot.slane %v581, 1
        %v587 = vrot.slane %v581, 2
        %v588 = vrot.slane %v581, 3
        %v589 = vrot.slane %v581, 4
        %v590 = vrot.slane %v581, 5
        %v591 = vrot.slane %v581, 6
        %v600 = vadd.f32 %v298, %v585
        %v601 = vadd.f32 %v303, %v581
        %v602 = vadd.f32 %v308, %v586
        %v603 = vadd.f32 %v313, %v587
        %v604 = vadd.f32 %v318, %v588
        %v605 = vadd.f32 %v323, %v589
        %v606 = vadd.f32 %v328, %v590
        %v607 = vadd.f32 %v333, %v591
        %v608 = vsub.f32 0.0, %v600
        %v609 = vsub.f32 0.0, %v601
        %v610 = vsub.f32 0.0, %v602
        %v611 = vsub.f32 0.0, %v603
        %v612 = vsub.f32 0.0, %v604
        %v613 = vsub.f32 0.0, %v605
        %v614 = vsub.f32 0.0, %v606
        %v615 = vsub.f32 0.0, %v607
        %v616 = vmul.f32 %v608, 1.442695
        %v617 = vpow.pop %v616
        %v618 = vmul.f32 %v609, 1.442695
        %v619 = vpow.pop %v618
        %v620 = vmul.f32 %v610, 1.442695
        %v621 = vpow.pop %v620
        %v622 = vmul.f32 %v611, 1.442695
        %v623 = vpow.pop %v622
        %v624 = vmul.f32 %v612, 1.442695
        %v625 = vpow.pop %v624
        %v626 = vmul.f32 %v613, 1.442695
        %v627 = vpow.pop %v626
        %v628 = vmul.f32 %v614, 1.442695
        %v629 = vpow.pop %v628
        %v630 = vmul.f32 %v615, 1.442695
        %v631 = vpow.pop %v630
        %v632 = vadd.f32 %v617, 1.0
        %v633 = vadd.f32 %v619, 1.0
        %v634 = vadd.f32 %v621, 1.0
        %v635 = vadd.f32 %v623, 1.0
        %v636 = vadd.f32 %v625, 1.0
        %v637 = vadd.f32 %v627, 1.0
        %v638 = vadd.f32 %v629, 1.0
        %v639 = vadd.f32 %v631, 1.0
        %v640 = vrcp.pop %v632
        %v641 = vmul.f32 1.0, %v640
        %v642 = vrcp.pop %v633
        %v643 = vmul.f32 1.0, %v642
        %v644 = vrcp.pop %v634
        %v645 = vmul.f32 1.0, %v644
        %v646 = vrcp.pop %v635
        %v647 = vmul.f32 1.0, %v646
        %v648 = vrcp.pop %v636
        %v649 = vmul.f32 1.0, %v648
        %v650 = vrcp.pop %v637
        %v651 = vmul.f32 1.0, %v650
        %v652 = vrcp.pop %v638
        %v653 = vmul.f32 1.0, %v652
        %v654 = vrcp.pop %v639
        %v655 = vmul.f32 1.0, %v654
        %v656 = vtanh.pop %v600
        %v657 = vtanh.pop %v601
        %v658 = vtanh.pop %v602
        %v659 = vtanh.pop %v603
        %v660 = vtanh.pop %v604
        %v661 = vtanh.pop %v605
        %v662 = vtanh.pop %v606
        %v663 = vtanh.pop %v607
        %v672 = vrot.slane %v424, 7
        %v673 = vrot.slane %v425, 7
        %v674 = vrot.slane %v426, 7
        %v675 = vrot.slane %v427, 7
        %v676 = vrot.slane %v428, 7
        %v677 = vrot.slane %v429, 7
        %v678 = vrot.slane %v430, 7
        %v679 = vrot.slane %v431, 7
        %680 = vrot.lane.b32.xlu0 %v672, 32
        %v681 = vpop.permute.xlu0 %680
        %682 = vrot.lane.b32.xlu0 %v673, 32
        %v683 = vpop.permute.xlu0 %682
        %684 = vrot.lane.b32.xlu0 %v674, 32
        %v685 = vpop.permute.xlu0 %684
        %686 = vrot.lane.b32.xlu0 %v675, 32
        %v687 = vpop.permute.xlu0 %686
        %688 = vrot.lane.b32.xlu0 %v676, 32
        %v689 = vpop.permute.xlu0 %688
        %690 = vrot.lane.b32.xlu0 %v677, 32
        %v691 = vpop.permute.xlu0 %690
        %692 = vrot.lane.b32.xlu0 %v678, 32
        %v693 = vpop.permute.xlu0 %692
        %694 = vrot.lane.b32.xlu0 %v679, 32
        %v695 = vpop.permute.xlu0 %694
        %v704 = vmul.f32 %v641, %v681
        %v705 = vmul.f32 %v643, %v683
        %v706 = vmul.f32 %v645, %v685
        %v707 = vmul.f32 %v647, %v687
        %v708 = vmul.f32 %v649, %v689
        %v709 = vmul.f32 %v651, %v691
        %v710 = vmul.f32 %v653, %v693
        %v711 = vmul.f32 %v655, %v695
        %720 = vrot.lane.b32.xlu0 %v656, 64
        %v721 = vpop.permute.xlu0 %720
        %722 = vrot.lane.b32.xlu0 %v657, 64
        %v723 = vpop.permute.xlu0 %722
        %724 = vrot.lane.b32.xlu0 %v658, 64
        %v725 = vpop.permute.xlu0 %724
        %726 = vrot.lane.b32.xlu0 %v659, 64
        %v727 = vpop.permute.xlu0 %726
        %728 = vrot.lane.b32.xlu0 %v660, 64
        %v729 = vpop.permute.xlu0 %728
        %730 = vrot.lane.b32.xlu0 %v661, 64
        %v731 = vpop.permute.xlu0 %730
        %732 = vrot.lane.b32.xlu0 %v662, 64
        %v733 = vpop.permute.xlu0 %732
        %734 = vrot.lane.b32.xlu0 %v663, 64
        %v735 = vpop.permute.xlu0 %734
        %v744 = vmul.f32 %v641, %v721
        %v745 = vmul.f32 %v643, %v723
        %v746 = vmul.f32 %v645, %v725
        %v747 = vmul.f32 %v647, %v727
        %v748 = vmul.f32 %v649, %v729
        %v749 = vmul.f32 %v651, %v731
        %v750 = vmul.f32 %v653, %v733
        %v751 = vmul.f32 %v655, %v735
        %760 = vrot.lane.b32.xlu0 %v744, 32
        %v761 = vpop.permute.xlu0 %760
        %762 = vrot.lane.b32.xlu0 %v745, 32
        %v763 = vpop.permute.xlu0 %762
        %764 = vrot.lane.b32.xlu0 %v746, 32
        %v765 = vpop.permute.xlu0 %764
        %766 = vrot.lane.b32.xlu0 %v747, 32
        %v767 = vpop.permute.xlu0 %766
        %768 = vrot.lane.b32.xlu0 %v748, 32
        %v769 = vpop.permute.xlu0 %768
        %770 = vrot.lane.b32.xlu0 %v749, 32
        %v771 = vpop.permute.xlu0 %770
        %772 = vrot.lane.b32.xlu0 %v750, 32
        %v773 = vpop.permute.xlu0 %772
        %774 = vrot.lane.b32.xlu0 %v751, 32
        %v775 = vpop.permute.xlu0 %774
        %v784 = vadd.f32 %v704, %v761
        %v785 = vadd.f32 %v705, %v763
        %v786 = vadd.f32 %v706, %v765
        %v787 = vadd.f32 %v707, %v767
        %v788 = vadd.f32 %v708, %v769
        %v789 = vadd.f32 %v709, %v771
        %v790 = vadd.f32 %v710, %v773
        %v791 = vadd.f32 %v711, %v775
        %v792 = vtanh.pop %v784
        %v793 = vtanh.pop %v785
        %v794 = vtanh.pop %v786
        %v795 = vtanh.pop %v787
        %v796 = vtanh.pop %v788
        %v797 = vtanh.pop %v789
        %v798 = vtanh.pop %v790
        %v799 = vtanh.pop %v791
        %808 = vrot.lane.b32.xlu0 %v792, 64
        %v809 = vpop.permute.xlu0 %808
        %810 = vrot.lane.b32.xlu0 %v793, 64
        %v811 = vpop.permute.xlu0 %810
        %812 = vrot.lane.b32.xlu0 %v794, 64
        %v813 = vpop.permute.xlu0 %812
        %814 = vrot.lane.b32.xlu0 %v795, 64
        %v815 = vpop.permute.xlu0 %814
        %816 = vrot.lane.b32.xlu0 %v796, 64
        %v817 = vpop.permute.xlu0 %816
        %818 = vrot.lane.b32.xlu0 %v797, 64
        %v819 = vpop.permute.xlu0 %818
        %820 = vrot.lane.b32.xlu0 %v798, 64
        %v821 = vpop.permute.xlu0 %820
        %822 = vrot.lane.b32.xlu0 %v799, 64
        %v823 = vpop.permute.xlu0 %822
        %v832 = vmul.f32 %v641, %v809
        %v833 = vmul.f32 %v643, %v811
        %v834 = vmul.f32 %v645, %v813
        %v835 = vmul.f32 %v647, %v815
        %v836 = vmul.f32 %v649, %v817
        %v837 = vmul.f32 %v651, %v819
        %v838 = vmul.f32 %v653, %v821
        %v839 = vmul.f32 %v655, %v823
        %v848 = vrot.slane %v832, 1
        %v849 = vsel %vm489, %v833, %v848
        %v850 = vrot.slane %v834, 7
        %v851 = vsel %vm492, %v850, %v849
        %v852 = vrot.slane %v835, 6
        %v853 = vsel %vm495, %v852, %v851
        %v854 = vrot.slane %v836, 5
        %v855 = vsel %vm498, %v854, %v853
        %v856 = vrot.slane %v837, 4
        %v857 = vsel %vm501, %v856, %v855
        %v858 = vrot.slane %v838, 3
        %v859 = vsel %vm504, %v858, %v857
        %v860 = vrot.slane %v839, 2
        %v861 = vsel %vm507, %v860, %v859
        %862 = vrot.lane.b32.xlu0 %v861, 32
        %v863 = vpop.permute.xlu0 %862
        %v864 = vsel %vm511, %v863, 0
        %866 = vmatprep.subr.mxu0 0.0
        %867 = vmatpush1.msra.mxu0 %v188
        %868 = vmatprep.subr.mxu0 0.0
        %869 = vmatpush1.msra.mxu0 %v189
        %870 = vmatprep.subr.mxu0 0.0
        %871 = vmatpush1.msra.mxu0 %v190
        %872 = vmatprep.subr.mxu0 0.0
        %873 = vmatpush1.msra.mxu0 %v191
        %874 = vmatprep.subr.mxu0 0.0
        %875 = vmatpush1.msra.mxu0 0.0
        %876 = vmatprep.subr.mxu0 0.0
        %877 = vmatpush1.msra.mxu0 0.0
        %878 = vmatprep.subr.mxu0 0.0
        %879 = vmatpush1.msra.mxu0 0.0
        %880 = vmatprep.subr.mxu0 0.0
        %881 = vmatpush1.msra.mxu0 0.0
        %882 = vmatprep.subr.mxu0 0.0
        %883 = vmatpush1.msra.mxu0 0.0
        %884 = vmatprep.subr.mxu0 0.0
        %885 = vmatpush1.msra.mxu0 0.0
        %886 = vmatprep.subr.mxu0 0.0
        %887 = vmatpush1.msra.mxu0 0.0
        %888 = vmatprep.subr.mxu0 0.0
        %889 = vmatpush1.msra.mxu0 0.0
        %890 = vmatprep.subr.mxu0 0.0
        %891 = vmatpush1.msra.mxu0 0.0
        %892 = vmatprep.subr.mxu0 0.0
        %893 = vmatpush1.msra.mxu0 0.0
        %894 = vmatprep.subr.mxu0 0.0
        %895 = vmatpush1.msra.mxu0 0.0
        %896 = vmatprep.subr.mxu0 0.0
        %897 = vmatpush1.msra.mxu0 0.0
        %898 = vmatprep.subr.mxu0 0.0
        %899 = vmatpush1.msra.mxu0 0.0
        %900 = vmatprep.subr.mxu0 0.0
        %901 = vmatpush1.msra.mxu0 0.0
        %902 = vmatprep.subr.mxu0 0.0
        %903 = vmatpush1.msra.mxu0 0.0
        %904 = vmatprep.subr.mxu0 0.0
        %905 = vmatpush1.msra.mxu0 0.0
        %906 = vmatprep.subr.mxu0 0.0
        %907 = vmatpush1.msra.mxu0 0.0
        %908 = vmatprep.subr.mxu0 0.0
        %909 = vmatpush1.msra.mxu0 0.0
        %910 = vmatprep.subr.mxu0 0.0
        %911 = vmatpush1.msra.mxu0 0.0
        %912 = vmatprep.subr.mxu0 0.0
        %913 = vmatpush1.msra.mxu0 0.0
        %914 = vmatprep.subr.mxu0 0.0
        %915 = vmatpush1.msra.mxu0 0.0
        %916 = vmatprep.subr.mxu0 0.0
        %917 = vmatpush1.msra.mxu0 0.0
        %918 = vmatprep.subr.mxu0 0.0
        %919 = vmatpush1.msra.mxu0 0.0
        %920 = vmatprep.subr.mxu0 0.0
        %921 = vmatpush1.msra.mxu0 0.0
        %922 = vmatprep.subr.mxu0 0.0
        %923 = vmatpush1.msra.mxu0 0.0
        %924 = vmatprep.subr.mxu0 0.0
        %925 = vmatpush1.msra.mxu0 0.0
        %926 = vmatprep.subr.mxu0 0.0
        %927 = vmatpush1.msra.mxu0 0.0
        %928 = vmatprep.subr.mxu0 0.0
        %929 = vmatpush1.msra.mxu0 0.0
        %930 = vmatprep.mubr.f32.mxu0 0.0
        %931 = vmatmul.mubr.f32.gmra.mrb[0].mxu0 %v864
        %v932 = vpop.f32.mrb[0].mxu0
        %v933 = vadd.f32 0.0, %v932
        %v934 = vpop.f32.mrb[0].mxu0
        %935 = vdwg.mxu0
        %v937 = vrot.slane %v933, 6
        %v938 = vrot.slane %v933, 7
        %v939 = vrot.slane %v933, 1
        %v940 = vrot.slane %v933, 2
        %v941 = vrot.slane %v933, 3
        %v942 = vrot.slane %v933, 4
        %v943 = vrot.slane %v933, 5
        %v952 = vadd.f32 %v298, %v937
        %v953 = vadd.f32 %v303, %v938
        %v954 = vadd.f32 %v308, %v933
        %v955 = vadd.f32 %v313, %v939
        %v956 = vadd.f32 %v318, %v940
        %v957 = vadd.f32 %v323, %v941
        %v958 = vadd.f32 %v328, %v942
        %v959 = vadd.f32 %v333, %v943
        %v960 = vsub.f32 0.0, %v952
        %v961 = vsub.f32 0.0, %v953
        %v962 = vsub.f32 0.0, %v954
        %v963 = vsub.f32 0.0, %v955
        %v964 = vsub.f32 0.0, %v956
        %v965 = vsub.f32 0.0, %v957
        %v966 = vsub.f32 0.0, %v958
        %v967 = vsub.f32 0.0, %v959
        %v968 = vmul.f32 %v960, 1.442695
        %v969 = vpow.pop %v968
        %v970 = vmul.f32 %v961, 1.442695
        %v971 = vpow.pop %v970
        %v972 = vmul.f32 %v962, 1.442695
        %v973 = vpow.pop %v972
        %v974 = vmul.f32 %v963, 1.442695
        %v975 = vpow.pop %v974
        %v976 = vmul.f32 %v964, 1.442695
        %v977 = vpow.pop %v976
        %v978 = vmul.f32 %v965, 1.442695
        %v979 = vpow.pop %v978
        %v980 = vmul.f32 %v966, 1.442695
        %v981 = vpow.pop %v980
        %v982 = vmul.f32 %v967, 1.442695
        %v983 = vpow.pop %v982
        %v984 = vadd.f32 %v969, 1.0
        %v985 = vadd.f32 %v971, 1.0
        %v986 = vadd.f32 %v973, 1.0
        %v987 = vadd.f32 %v975, 1.0
        %v988 = vadd.f32 %v977, 1.0
        %v989 = vadd.f32 %v979, 1.0
        %v990 = vadd.f32 %v981, 1.0
        %v991 = vadd.f32 %v983, 1.0
        %v992 = vrcp.pop %v984
        %v993 = vmul.f32 1.0, %v992
        %v994 = vrcp.pop %v985
        %v995 = vmul.f32 1.0, %v994
        %v996 = vrcp.pop %v986
        %v997 = vmul.f32 1.0, %v996
        %v998 = vrcp.pop %v987
        %v999 = vmul.f32 1.0, %v998
        %v1000 = vrcp.pop %v988
        %v1001 = vmul.f32 1.0, %v1000
        %v1002 = vrcp.pop %v989
        %v1003 = vmul.f32 1.0, %v1002
        %v1004 = vrcp.pop %v990
        %v1005 = vmul.f32 1.0, %v1004
        %v1006 = vrcp.pop %v991
        %v1007 = vmul.f32 1.0, %v1006
        %v1008 = vtanh.pop %v952
        %v1009 = vtanh.pop %v953
        %v1010 = vtanh.pop %v954
        %v1011 = vtanh.pop %v955
        %v1012 = vtanh.pop %v956
        %v1013 = vtanh.pop %v957
        %v1014 = vtanh.pop %v958
        %v1015 = vtanh.pop %v959
        %v1024 = vrot.slane %v784, 7
        %v1025 = vrot.slane %v785, 7
        %v1026 = vrot.slane %v786, 7
        %v1027 = vrot.slane %v787, 7
        %v1028 = vrot.slane %v788, 7
        %v1029 = vrot.slane %v789, 7
        %v1030 = vrot.slane %v790, 7
        %v1031 = vrot.slane %v791, 7
        %v1040 = vmul.f32 %v993, %v1024
        %v1041 = vmul.f32 %v995, %v1025
        %v1042 = vmul.f32 %v997, %v1026
        %v1043 = vmul.f32 %v999, %v1027
        %v1044 = vmul.f32 %v1001, %v1028
        %v1045 = vmul.f32 %v1003, %v1029
        %v1046 = vmul.f32 %v1005, %v1030
        %v1047 = vmul.f32 %v1007, %v1031
        %1056 = vrot.lane.b32.xlu0 %v1008, 64
        %v1057 = vpop.permute.xlu0 %1056
        %1058 = vrot.lane.b32.xlu0 %v1009, 64
        %v1059 = vpop.permute.xlu0 %1058
        %1060 = vrot.lane.b32.xlu0 %v1010, 64
        %v1061 = vpop.permute.xlu0 %1060
        %1062 = vrot.lane.b32.xlu0 %v1011, 64
        %v1063 = vpop.permute.xlu0 %1062
        %1064 = vrot.lane.b32.xlu0 %v1012, 64
        %v1065 = vpop.permute.xlu0 %1064
        %1066 = vrot.lane.b32.xlu0 %v1013, 64
        %v1067 = vpop.permute.xlu0 %1066
        %1068 = vrot.lane.b32.xlu0 %v1014, 64
        %v1069 = vpop.permute.xlu0 %1068
        %1070 = vrot.lane.b32.xlu0 %v1015, 64
        %v1071 = vpop.permute.xlu0 %1070
        %v1080 = vmul.f32 %v993, %v1057
        %v1081 = vmul.f32 %v995, %v1059
        %v1082 = vmul.f32 %v997, %v1061
        %v1083 = vmul.f32 %v999, %v1063
        %v1084 = vmul.f32 %v1001, %v1065
        %v1085 = vmul.f32 %v1003, %v1067
        %v1086 = vmul.f32 %v1005, %v1069
        %v1087 = vmul.f32 %v1007, %v1071
        %1096 = vrot.lane.b32.xlu0 %v1080, 32
        %v1097 = vpop.permute.xlu0 %1096
        %1098 = vrot.lane.b32.xlu0 %v1081, 32
        %v1099 = vpop.permute.xlu0 %1098
        %1100 = vrot.lane.b32.xlu0 %v1082, 32
        %v1101 = vpop.permute.xlu0 %1100
        %1102 = vrot.lane.b32.xlu0 %v1083, 32
        %v1103 = vpop.permute.xlu0 %1102
        %1104 = vrot.lane.b32.xlu0 %v1084, 32
        %v1105 = vpop.permute.xlu0 %1104
        %1106 = vrot.lane.b32.xlu0 %v1085, 32
        %v1107 = vpop.permute.xlu0 %1106
        %1108 = vrot.lane.b32.xlu0 %v1086, 32
        %v1109 = vpop.permute.xlu0 %1108
        %1110 = vrot.lane.b32.xlu0 %v1087, 32
        %v1111 = vpop.permute.xlu0 %1110
        %v1120 = vadd.f32 %v1040, %v1097
        %v1121 = vadd.f32 %v1041, %v1099
        %v1122 = vadd.f32 %v1042, %v1101
        %v1123 = vadd.f32 %v1043, %v1103
        %v1124 = vadd.f32 %v1044, %v1105
        %v1125 = vadd.f32 %v1045, %v1107
        %v1126 = vadd.f32 %v1046, %v1109
        %v1127 = vadd.f32 %v1047, %v1111
        %v1128 = vtanh.pop %v1120
        %v1129 = vtanh.pop %v1121
        %v1130 = vtanh.pop %v1122
        %v1131 = vtanh.pop %v1123
        %v1132 = vtanh.pop %v1124
        %v1133 = vtanh.pop %v1125
        %v1134 = vtanh.pop %v1126
        %v1135 = vtanh.pop %v1127
        %1144 = vrot.lane.b32.xlu0 %v1128, 64
        %v1145 = vpop.permute.xlu0 %1144
        %1146 = vrot.lane.b32.xlu0 %v1129, 64
        %v1147 = vpop.permute.xlu0 %1146
        %1148 = vrot.lane.b32.xlu0 %v1130, 64
        %v1149 = vpop.permute.xlu0 %1148
        %1150 = vrot.lane.b32.xlu0 %v1131, 64
        %v1151 = vpop.permute.xlu0 %1150
        %1152 = vrot.lane.b32.xlu0 %v1132, 64
        %v1153 = vpop.permute.xlu0 %1152
        %1154 = vrot.lane.b32.xlu0 %v1133, 64
        %v1155 = vpop.permute.xlu0 %1154
        %1156 = vrot.lane.b32.xlu0 %v1134, 64
        %v1157 = vpop.permute.xlu0 %1156
        %1158 = vrot.lane.b32.xlu0 %v1135, 64
        %v1159 = vpop.permute.xlu0 %1158
        %v1168 = vmul.f32 %v993, %v1145
        %v1169 = vmul.f32 %v995, %v1147
        %v1170 = vmul.f32 %v997, %v1149
        %v1171 = vmul.f32 %v999, %v1151
        %v1172 = vmul.f32 %v1001, %v1153
        %v1173 = vmul.f32 %v1003, %v1155
        %v1174 = vmul.f32 %v1005, %v1157
        %v1175 = vmul.f32 %v1007, %v1159
        %v1184 = vrot.slane %v1168, 2
        %v1185 = vrot.slane %v1169, 1
        %v1186 = vsel %vm489, %v1185, %v1184
        %v1187 = vsel %vm492, %v1170, %v1186
        %v1188 = vrot.slane %v1171, 7
        %v1189 = vsel %vm495, %v1188, %v1187
        %v1190 = vrot.slane %v1172, 6
        %v1191 = vsel %vm498, %v1190, %v1189
        %v1192 = vrot.slane %v1173, 5
        %v1193 = vsel %vm501, %v1192, %v1191
        %v1194 = vrot.slane %v1174, 4
        %v1195 = vsel %vm504, %v1194, %v1193
        %v1196 = vrot.slane %v1175, 3
        %v1197 = vsel %vm507, %v1196, %v1195
        %1198 = vrot.lane.b32.xlu0 %v1197, 32
        %v1199 = vpop.permute.xlu0 %1198
        %v1200 = vsel %vm511, %v1199, 0
        %1202 = vmatprep.subr.mxu0 0.0
        %1203 = vmatpush1.msra.mxu0 %v188
        %1204 = vmatprep.subr.mxu0 0.0
        %1205 = vmatpush1.msra.mxu0 %v189
        %1206 = vmatprep.subr.mxu0 0.0
        %1207 = vmatpush1.msra.mxu0 %v190
        %1208 = vmatprep.subr.mxu0 0.0
        %1209 = vmatpush1.msra.mxu0 %v191
        %1210 = vmatprep.subr.mxu0 0.0
        %1211 = vmatpush1.msra.mxu0 0.0
        %1212 = vmatprep.subr.mxu0 0.0
        %1213 = vmatpush1.msra.mxu0 0.0
        %1214 = vmatprep.subr.mxu0 0.0
        %1215 = vmatpush1.msra.mxu0 0.0
        %1216 = vmatprep.subr.mxu0 0.0
        %1217 = vmatpush1.msra.mxu0 0.0
        %1218 = vmatprep.subr.mxu0 0.0
        %1219 = vmatpush1.msra.mxu0 0.0
        %1220 = vmatprep.subr.mxu0 0.0
        %1221 = vmatpush1.msra.mxu0 0.0
        %1222 = vmatprep.subr.mxu0 0.0
        %1223 = vmatpush1.msra.mxu0 0.0
        %1224 = vmatprep.subr.mxu0 0.0
        %1225 = vmatpush1.msra.mxu0 0.0
        %1226 = vmatprep.subr.mxu0 0.0
        %1227 = vmatpush1.msra.mxu0 0.0
        %1228 = vmatprep.subr.mxu0 0.0
        %1229 = vmatpush1.msra.mxu0 0.0
        %1230 = vmatprep.subr.mxu0 0.0
        %1231 = vmatpush1.msra.mxu0 0.0
        %1232 = vmatprep.subr.mxu0 0.0
        %1233 = vmatpush1.msra.mxu0 0.0
        %1234 = vmatprep.subr.mxu0 0.0
        %1235 = vmatpush1.msra.mxu0 0.0
        %1236 = vmatprep.subr.mxu0 0.0
        %1237 = vmatpush1.msra.mxu0 0.0
        %1238 = vmatprep.subr.mxu0 0.0
        %1239 = vmatpush1.msra.mxu0 0.0
        %1240 = vmatprep.subr.mxu0 0.0
        %1241 = vmatpush1.msra.mxu0 0.0
        %1242 = vmatprep.subr.mxu0 0.0
        %1243 = vmatpush1.msra.mxu0 0.0
        %1244 = vmatprep.subr.mxu0 0.0
        %1245 = vmatpush1.msra.mxu0 0.0
        %1246 = vmatprep.subr.mxu0 0.0
        %1247 = vmatpush1.msra.mxu0 0.0
        %1248 = vmatprep.subr.mxu0 0.0
        %1249 = vmatpush1.msra.mxu0 0.0
        %1250 = vmatprep.subr.mxu0 0.0
        %1251 = vmatpush1.msra.mxu0 0.0
        %1252 = vmatprep.subr.mxu0 0.0
        %1253 = vmatpush1.msra.mxu0 0.0
        %1254 = vmatprep.subr.mxu0 0.0
        %1255 = vmatpush1.msra.mxu0 0.0
        %1256 = vmatprep.subr.mxu0 0.0
        %1257 = vmatpush1.msra.mxu0 0.0
        %1258 = vmatprep.subr.mxu0 0.0
        %1259 = vmatpush1.msra.mxu0 0.0
        %1260 = vmatprep.subr.mxu0 0.0
        %1261 = vmatpush1.msra.mxu0 0.0
        %1262 = vmatprep.subr.mxu0 0.0
        %1263 = vmatpush1.msra.mxu0 0.0
        %1264 = vmatprep.subr.mxu0 0.0
        %1265 = vmatpush1.msra.mxu0 0.0
        %1266 = vmatprep.mubr.f32.mxu0 0.0
        %1267 = vmatmul.mubr.f32.gmra.mrb[0].mxu0 %v1200
        %v1268 = vpop.f32.mrb[0].mxu0
        %v1269 = vadd.f32 0.0, %v1268
        %v1270 = vpop.f32.mrb[0].mxu0
        %1271 = vdwg.mxu0
        %v1273 = vrot.slane %v1269, 5
        %v1274 = vrot.slane %v1269, 6
        %v1275 = vrot.slane %v1269, 7
        %v1276 = vrot.slane %v1269, 1
        %v1277 = vrot.slane %v1269, 2
        %v1278 = vrot.slane %v1269, 3
        %v1279 = vrot.slane %v1269, 4
        %v1288 = vadd.f32 %v298, %v1273
        %v1289 = vadd.f32 %v303, %v1274
        %v1290 = vadd.f32 %v308, %v1275
        %v1291 = vadd.f32 %v313, %v1269
        %v1292 = vadd.f32 %v318, %v1276
        %v1293 = vadd.f32 %v323, %v1277
        %v1294 = vadd.f32 %v328, %v1278
        %v1295 = vadd.f32 %v333, %v1279
        %v1296 = vsub.f32 0.0, %v1288
        %v1297 = vsub.f32 0.0, %v1289
        %v1298 = vsub.f32 0.0, %v1290
        %v1299 = vsub.f32 0.0, %v1291
        %v1300 = vsub.f32 0.0, %v1292
        %v1301 = vsub.f32 0.0, %v1293
        %v1302 = vsub.f32 0.0, %v1294
        %v1303 = vsub.f32 0.0, %v1295
        %v1304 = vmul.f32 %v1296, 1.442695
        %v1305 = vpow.pop %v1304
        %v1306 = vmul.f32 %v1297, 1.442695
        %v1307 = vpow.pop %v1306
        %v1308 = vmul.f32 %v1298, 1.442695
        %v1309 = vpow.pop %v1308
        %v1310 = vmul.f32 %v1299, 1.442695
        %v1311 = vpow.pop %v1310
        %v1312 = vmul.f32 %v1300, 1.442695
        %v1313 = vpow.pop %v1312
        %v1314 = vmul.f32 %v1301, 1.442695
        %v1315 = vpow.pop %v1314
        %v1316 = vmul.f32 %v1302, 1.442695
        %v1317 = vpow.pop %v1316
        %v1318 = vmul.f32 %v1303, 1.442695
        %v1319 = vpow.pop %v1318
        %v1320 = vadd.f32 %v1305, 1.0
        %v1321 = vadd.f32 %v1307, 1.0
        %v1322 = vadd.f32 %v1309, 1.0
        %v1323 = vadd.f32 %v1311, 1.0
        %v1324 = vadd.f32 %v1313, 1.0
        %v1325 = vadd.f32 %v1315, 1.0
        %v1326 = vadd.f32 %v1317, 1.0
        %v1327 = vadd.f32 %v1319, 1.0
        %v1328 = vrcp.pop %v1320
        %v1329 = vmul.f32 1.0, %v1328
        %v1330 = vrcp.pop %v1321
        %v1331 = vmul.f32 1.0, %v1330
        %v1332 = vrcp.pop %v1322
        %v1333 = vmul.f32 1.0, %v1332
        %v1334 = vrcp.pop %v1323
        %v1335 = vmul.f32 1.0, %v1334
        %v1336 = vrcp.pop %v1324
        %v1337 = vmul.f32 1.0, %v1336
        %v1338 = vrcp.pop %v1325
        %v1339 = vmul.f32 1.0, %v1338
        %v1340 = vrcp.pop %v1326
        %v1341 = vmul.f32 1.0, %v1340
        %v1342 = vrcp.pop %v1327
        %v1343 = vmul.f32 1.0, %v1342
        %v1344 = vtanh.pop %v1288
        %v1345 = vtanh.pop %v1289
        %v1346 = vtanh.pop %v1290
        %v1347 = vtanh.pop %v1291
        %v1348 = vtanh.pop %v1292
        %v1349 = vtanh.pop %v1293
        %v1350 = vtanh.pop %v1294
        %v1351 = vtanh.pop %v1295
        %v1360 = vrot.slane %v1120, 7
        %v1361 = vrot.slane %v1121, 7
        %v1362 = vrot.slane %v1122, 7
        %v1363 = vrot.slane %v1123, 7
        %v1364 = vrot.slane %v1124, 7
        %v1365 = vrot.slane %v1125, 7
        %v1366 = vrot.slane %v1126, 7
        %v1367 = vrot.slane %v1127, 7
        %v1376 = vmul.f32 %v1329, %v1360
        %v1377 = vmul.f32 %v1331, %v1361
        %v1378 = vmul.f32 %v1333, %v1362
        %v1379 = vmul.f32 %v1335, %v1363
        %v1380 = vmul.f32 %v1337, %v1364
        %v1381 = vmul.f32 %v1339, %v1365
        %v1382 = vmul.f32 %v1341, %v1366
        %v1383 = vmul.f32 %v1343, %v1367
        %1392 = vrot.lane.b32.xlu0 %v1344, 64
        %v1393 = vpop.permute.xlu0 %1392
        %1394 = vrot.lane.b32.xlu0 %v1345, 64
        %v1395 = vpop.permute.xlu0 %1394
        %1396 = vrot.lane.b32.xlu0 %v1346, 64
        %v1397 = vpop.permute.xlu0 %1396
        %1398 = vrot.lane.b32.xlu0 %v1347, 64
        %v1399 = vpop.permute.xlu0 %1398
        %1400 = vrot.lane.b32.xlu0 %v1348, 64
        %v1401 = vpop.permute.xlu0 %1400
        %1402 = vrot.lane.b32.xlu0 %v1349, 64
        %v1403 = vpop.permute.xlu0 %1402
        %1404 = vrot.lane.b32.xlu0 %v1350, 64
        %v1405 = vpop.permute.xlu0 %1404
        %1406 = vrot.lane.b32.xlu0 %v1351, 64
        %v1407 = vpop.permute.xlu0 %1406
        %v1416 = vmul.f32 %v1329, %v1393
        %v1417 = vmul.f32 %v1331, %v1395
        %v1418 = vmul.f32 %v1333, %v1397
        %v1419 = vmul.f32 %v1335, %v1399
        %v1420 = vmul.f32 %v1337, %v1401
        %v1421 = vmul.f32 %v1339, %v1403
        %v1422 = vmul.f32 %v1341, %v1405
        %v1423 = vmul.f32 %v1343, %v1407
        %1432 = vrot.lane.b32.xlu0 %v1416, 32
        %v1433 = vpop.permute.xlu0 %1432
        %1434 = vrot.lane.b32.xlu0 %v1417, 32
        %v1435 = vpop.permute.xlu0 %1434
        %1436 = vrot.lane.b32.xlu0 %v1418, 32
        %v1437 = vpop.permute.xlu0 %1436
        %1438 = vrot.lane.b32.xlu0 %v1419, 32
        %v1439 = vpop.permute.xlu0 %1438
        %1440 = vrot.lane.b32.xlu0 %v1420, 32
        %v1441 = vpop.permute.xlu0 %1440
        %1442 = vrot.lane.b32.xlu0 %v1421, 32
        %v1443 = vpop.permute.xlu0 %1442
        %1444 = vrot.lane.b32.xlu0 %v1422, 32
        %v1445 = vpop.permute.xlu0 %1444
        %1446 = vrot.lane.b32.xlu0 %v1423, 32
        %v1447 = vpop.permute.xlu0 %1446
        %v1456 = vadd.f32 %v1376, %v1433
        %v1457 = vadd.f32 %v1377, %v1435
        %v1458 = vadd.f32 %v1378, %v1437
        %v1459 = vadd.f32 %v1379, %v1439
        %v1460 = vadd.f32 %v1380, %v1441
        %v1461 = vadd.f32 %v1381, %v1443
        %v1462 = vadd.f32 %v1382, %v1445
        %v1463 = vadd.f32 %v1383, %v1447
        %v1464 = vtanh.pop %v1456
        %v1465 = vtanh.pop %v1457
        %v1466 = vtanh.pop %v1458
        %v1467 = vtanh.pop %v1459
        %v1468 = vtanh.pop %v1460
        %v1469 = vtanh.pop %v1461
        %v1470 = vtanh.pop %v1462
        %v1471 = vtanh.pop %v1463
        %1480 = vrot.lane.b32.xlu0 %v1464, 64
        %v1481 = vpop.permute.xlu0 %1480
        %1482 = vrot.lane.b32.xlu0 %v1465, 64
        %v1483 = vpop.permute.xlu0 %1482
        %1484 = vrot.lane.b32.xlu0 %v1466, 64
        %v1485 = vpop.permute.xlu0 %1484
        %1486 = vrot.lane.b32.xlu0 %v1467, 64
        %v1487 = vpop.permute.xlu0 %1486
        %1488 = vrot.lane.b32.xlu0 %v1468, 64
        %v1489 = vpop.permute.xlu0 %1488
        %1490 = vrot.lane.b32.xlu0 %v1469, 64
        %v1491 = vpop.permute.xlu0 %1490
        %1492 = vrot.lane.b32.xlu0 %v1470, 64
        %v1493 = vpop.permute.xlu0 %1492
        %1494 = vrot.lane.b32.xlu0 %v1471, 64
        %v1495 = vpop.permute.xlu0 %1494
        %v1504 = vmul.f32 %v1329, %v1481
        %v1505 = vmul.f32 %v1331, %v1483
        %v1506 = vmul.f32 %v1333, %v1485
        %v1507 = vmul.f32 %v1335, %v1487
        %v1508 = vmul.f32 %v1337, %v1489
        %v1509 = vmul.f32 %v1339, %v1491
        %v1510 = vmul.f32 %v1341, %v1493
        %v1511 = vmul.f32 %v1343, %v1495
        %v1520 = vrot.slane %v1504, 3
        %v1521 = vrot.slane %v1505, 2
        %v1522 = vsel %vm489, %v1521, %v1520
        %v1523 = vrot.slane %v1506, 1
        %v1524 = vsel %vm492, %v1523, %v1522
        %v1525 = vsel %vm495, %v1507, %v1524
        %v1526 = vrot.slane %v1508, 7
        %v1527 = vsel %vm498, %v1526, %v1525
        %v1528 = vrot.slane %v1509, 6
        %v1529 = vsel %vm501, %v1528, %v1527
        %v1530 = vrot.slane %v1510, 5
        %v1531 = vsel %vm504, %v1530, %v1529
        %v1532 = vrot.slane %v1511, 4
        %v1533 = vsel %vm507, %v1532, %v1531
        %1534 = vrot.lane.b32.xlu0 %v1533, 32
        %v1535 = vpop.permute.xlu0 %1534
        %v1536 = vsel %vm511, %v1535, 0
        %1538 = vmatprep.subr.mxu0 0.0
        %1539 = vmatpush1.msra.mxu0 %v188
        %1540 = vmatprep.subr.mxu0 0.0
        %1541 = vmatpush1.msra.mxu0 %v189
        %1542 = vmatprep.subr.mxu0 0.0
        %1543 = vmatpush1.msra.mxu0 %v190
        %1544 = vmatprep.subr.mxu0 0.0
        %1545 = vmatpush1.msra.mxu0 %v191
        %1546 = vmatprep.subr.mxu0 0.0
        %1547 = vmatpush1.msra.mxu0 0.0
        %1548 = vmatprep.subr.mxu0 0.0
        %1549 = vmatpush1.msra.mxu0 0.0
        %1550 = vmatprep.subr.mxu0 0.0
        %1551 = vmatpush1.msra.mxu0 0.0
        %1552 = vmatprep.subr.mxu0 0.0
        %1553 = vmatpush1.msra.mxu0 0.0
        %1554 = vmatprep.subr.mxu0 0.0
        %1555 = vmatpush1.msra.mxu0 0.0
        %1556 = vmatprep.subr.mxu0 0.0
        %1557 = vmatpush1.msra.mxu0 0.0
        %1558 = vmatprep.subr.mxu0 0.0
        %1559 = vmatpush1.msra.mxu0 0.0
        %1560 = vmatprep.subr.mxu0 0.0
        %1561 = vmatpush1.msra.mxu0 0.0
        %1562 = vmatprep.subr.mxu0 0.0
        %1563 = vmatpush1.msra.mxu0 0.0
        %1564 = vmatprep.subr.mxu0 0.0
        %1565 = vmatpush1.msra.mxu0 0.0
        %1566 = vmatprep.subr.mxu0 0.0
        %1567 = vmatpush1.msra.mxu0 0.0
        %1568 = vmatprep.subr.mxu0 0.0
        %1569 = vmatpush1.msra.mxu0 0.0
        %1570 = vmatprep.subr.mxu0 0.0
        %1571 = vmatpush1.msra.mxu0 0.0
        %1572 = vmatprep.subr.mxu0 0.0
        %1573 = vmatpush1.msra.mxu0 0.0
        %1574 = vmatprep.subr.mxu0 0.0
        %1575 = vmatpush1.msra.mxu0 0.0
        %1576 = vmatprep.subr.mxu0 0.0
        %1577 = vmatpush1.msra.mxu0 0.0
        %1578 = vmatprep.subr.mxu0 0.0
        %1579 = vmatpush1.msra.mxu0 0.0
        %1580 = vmatprep.subr.mxu0 0.0
        %1581 = vmatpush1.msra.mxu0 0.0
        %1582 = vmatprep.subr.mxu0 0.0
        %1583 = vmatpush1.msra.mxu0 0.0
        %1584 = vmatprep.subr.mxu0 0.0
        %1585 = vmatpush1.msra.mxu0 0.0
        %1586 = vmatprep.subr.mxu0 0.0
        %1587 = vmatpush1.msra.mxu0 0.0
        %1588 = vmatprep.subr.mxu0 0.0
        %1589 = vmatpush1.msra.mxu0 0.0
        %1590 = vmatprep.subr.mxu0 0.0
        %1591 = vmatpush1.msra.mxu0 0.0
        %1592 = vmatprep.subr.mxu0 0.0
        %1593 = vmatpush1.msra.mxu0 0.0
        %1594 = vmatprep.subr.mxu0 0.0
        %1595 = vmatpush1.msra.mxu0 0.0
        %1596 = vmatprep.subr.mxu0 0.0
        %1597 = vmatpush1.msra.mxu0 0.0
        %1598 = vmatprep.subr.mxu0 0.0
        %1599 = vmatpush1.msra.mxu0 0.0
        %1600 = vmatprep.subr.mxu0 0.0
        %1601 = vmatpush1.msra.mxu0 0.0
        %1602 = vmatprep.mubr.f32.mxu0 0.0
        %1603 = vmatmul.mubr.f32.gmra.mrb[0].mxu0 %v1536
        %v1604 = vpop.f32.mrb[0].mxu0
        %v1605 = vadd.f32 0.0, %v1604
        %v1606 = vpop.f32.mrb[0].mxu0
        %1607 = vdwg.mxu0
        %v1609 = vrot.slane %v1605, 4
        %v1610 = vrot.slane %v1605, 5
        %v1611 = vrot.slane %v1605, 6
        %v1612 = vrot.slane %v1605, 7
        %v1613 = vrot.slane %v1605, 1
        %v1614 = vrot.slane %v1605, 2
        %v1615 = vrot.slane %v1605, 3
        %v1624 = vadd.f32 %v298, %v1609
        %v1625 = vadd.f32 %v303, %v1610
        %v1626 = vadd.f32 %v308, %v1611
        %v1627 = vadd.f32 %v313, %v1612
        %v1628 = vadd.f32 %v318, %v1605
        %v1629 = vadd.f32 %v323, %v1613
        %v1630 = vadd.f32 %v328, %v1614
        %v1631 = vadd.f32 %v333, %v1615
        %v1632 = vsub.f32 0.0, %v1624
        %v1633 = vsub.f32 0.0, %v1625
        %v1634 = vsub.f32 0.0, %v1626
        %v1635 = vsub.f32 0.0, %v1627
        %v1636 = vsub.f32 0.0, %v1628
        %v1637 = vsub.f32 0.0, %v1629
        %v1638 = vsub.f32 0.0, %v1630
        %v1639 = vsub.f32 0.0, %v1631
        %v1640 = vmul.f32 %v1632, 1.442695
        %v1641 = vpow.pop %v1640
        %v1642 = vmul.f32 %v1633, 1.442695
        %v1643 = vpow.pop %v1642
        %v1644 = vmul.f32 %v1634, 1.442695
        %v1645 = vpow.pop %v1644
        %v1646 = vmul.f32 %v1635, 1.442695
        %v1647 = vpow.pop %v1646
        %v1648 = vmul.f32 %v1636, 1.442695
        %v1649 = vpow.pop %v1648
        %v1650 = vmul.f32 %v1637, 1.442695
        %v1651 = vpow.pop %v1650
        %v1652 = vmul.f32 %v1638, 1.442695
        %v1653 = vpow.pop %v1652
        %v1654 = vmul.f32 %v1639, 1.442695
        %v1655 = vpow.pop %v1654
        %v1656 = vadd.f32 %v1641, 1.0
        %v1657 = vadd.f32 %v1643, 1.0
        %v1658 = vadd.f32 %v1645, 1.0
        %v1659 = vadd.f32 %v1647, 1.0
        %v1660 = vadd.f32 %v1649, 1.0
        %v1661 = vadd.f32 %v1651, 1.0
        %v1662 = vadd.f32 %v1653, 1.0
        %v1663 = vadd.f32 %v1655, 1.0
        %v1664 = vrcp.pop %v1656
        %v1665 = vmul.f32 1.0, %v1664
        %v1666 = vrcp.pop %v1657
        %v1667 = vmul.f32 1.0, %v1666
        %v1668 = vrcp.pop %v1658
        %v1669 = vmul.f32 1.0, %v1668
        %v1670 = vrcp.pop %v1659
        %v1671 = vmul.f32 1.0, %v1670
        %v1672 = vrcp.pop %v1660
        %v1673 = vmul.f32 1.0, %v1672
        %v1674 = vrcp.pop %v1661
        %v1675 = vmul.f32 1.0, %v1674
        %v1676 = vrcp.pop %v1662
        %v1677 = vmul.f32 1.0, %v1676
        %v1678 = vrcp.pop %v1663
        %v1679 = vmul.f32 1.0, %v1678
        %v1680 = vtanh.pop %v1624
        %v1681 = vtanh.pop %v1625
        %v1682 = vtanh.pop %v1626
        %v1683 = vtanh.pop %v1627
        %v1684 = vtanh.pop %v1628
        %v1685 = vtanh.pop %v1629
        %v1686 = vtanh.pop %v1630
        %v1687 = vtanh.pop %v1631
        %v1696 = vrot.slane %v1456, 7
        %v1697 = vrot.slane %v1457, 7
        %v1698 = vrot.slane %v1458, 7
        %v1699 = vrot.slane %v1459, 7
        %v1700 = vrot.slane %v1460, 7
        %v1701 = vrot.slane %v1461, 7
        %v1702 = vrot.slane %v1462, 7
        %v1703 = vrot.slane %v1463, 7
        %v1712 = vmul.f32 %v1665, %v1696
        %v1713 = vmul.f32 %v1667, %v1697
        %v1714 = vmul.f32 %v1669, %v1698
        %v1715 = vmul.f32 %v1671, %v1699
        %v1716 = vmul.f32 %v1673, %v1700
        %v1717 = vmul.f32 %v1675, %v1701
        %v1718 = vmul.f32 %v1677, %v1702
        %v1719 = vmul.f32 %v1679, %v1703
        %1728 = vrot.lane.b32.xlu0 %v1680, 64
        %v1729 = vpop.permute.xlu0 %1728
        %1730 = vrot.lane.b32.xlu0 %v1681, 64
        %v1731 = vpop.permute.xlu0 %1730
        %1732 = vrot.lane.b32.xlu0 %v1682, 64
        %v1733 = vpop.permute.xlu0 %1732
        %1734 = vrot.lane.b32.xlu0 %v1683, 64
        %v1735 = vpop.permute.xlu0 %1734
        %1736 = vrot.lane.b32.xlu0 %v1684, 64
        %v1737 = vpop.permute.xlu0 %1736
        %1738 = vrot.lane.b32.xlu0 %v1685, 64
        %v1739 = vpop.permute.xlu0 %1738
        %1740 = vrot.lane.b32.xlu0 %v1686, 64
        %v1741 = vpop.permute.xlu0 %1740
        %1742 = vrot.lane.b32.xlu0 %v1687, 64
        %v1743 = vpop.permute.xlu0 %1742
        %v1752 = vmul.f32 %v1665, %v1729
        %v1753 = vmul.f32 %v1667, %v1731
        %v1754 = vmul.f32 %v1669, %v1733
        %v1755 = vmul.f32 %v1671, %v1735
        %v1756 = vmul.f32 %v1673, %v1737
        %v1757 = vmul.f32 %v1675, %v1739
        %v1758 = vmul.f32 %v1677, %v1741
        %v1759 = vmul.f32 %v1679, %v1743
        %1768 = vrot.lane.b32.xlu0 %v1752, 32
        %v1769 = vpop.permute.xlu0 %1768
        %1770 = vrot.lane.b32.xlu0 %v1753, 32
        %v1771 = vpop.permute.xlu0 %1770
        %1772 = vrot.lane.b32.xlu0 %v1754, 32
        %v1773 = vpop.permute.xlu0 %1772
        %1774 = vrot.lane.b32.xlu0 %v1755, 32
        %v1775 = vpop.permute.xlu0 %1774
        %1776 = vrot.lane.b32.xlu0 %v1756, 32
        %v1777 = vpop.permute.xlu0 %1776
        %1778 = vrot.lane.b32.xlu0 %v1757, 32
        %v1779 = vpop.permute.xlu0 %1778
        %1780 = vrot.lane.b32.xlu0 %v1758, 32
        %v1781 = vpop.permute.xlu0 %1780
        %1782 = vrot.lane.b32.xlu0 %v1759, 32
        %v1783 = vpop.permute.xlu0 %1782
        %v1792 = vadd.f32 %v1712, %v1769
        %v1793 = vadd.f32 %v1713, %v1771
        %v1794 = vadd.f32 %v1714, %v1773
        %v1795 = vadd.f32 %v1715, %v1775
        %v1796 = vadd.f32 %v1716, %v1777
        %v1797 = vadd.f32 %v1717, %v1779
        %v1798 = vadd.f32 %v1718, %v1781
        %v1799 = vadd.f32 %v1719, %v1783
        %v1800 = vtanh.pop %v1792
        %v1801 = vtanh.pop %v1793
        %v1802 = vtanh.pop %v1794
        %v1803 = vtanh.pop %v1795
        %v1804 = vtanh.pop %v1796
        %v1805 = vtanh.pop %v1797
        %v1806 = vtanh.pop %v1798
        %v1807 = vtanh.pop %v1799
        %1816 = vrot.lane.b32.xlu0 %v1800, 64
        %v1817 = vpop.permute.xlu0 %1816
        %1818 = vrot.lane.b32.xlu0 %v1801, 64
        %v1819 = vpop.permute.xlu0 %1818
        %1820 = vrot.lane.b32.xlu0 %v1802, 64
        %v1821 = vpop.permute.xlu0 %1820
        %1822 = vrot.lane.b32.xlu0 %v1803, 64
        %v1823 = vpop.permute.xlu0 %1822
        %1824 = vrot.lane.b32.xlu0 %v1804, 64
        %v1825 = vpop.permute.xlu0 %1824
        %1826 = vrot.lane.b32.xlu0 %v1805, 64
        %v1827 = vpop.permute.xlu0 %1826
        %1828 = vrot.lane.b32.xlu0 %v1806, 64
        %v1829 = vpop.permute.xlu0 %1828
        %1830 = vrot.lane.b32.xlu0 %v1807, 64
        %v1831 = vpop.permute.xlu0 %1830
        %v1840 = vmul.f32 %v1665, %v1817
        %v1841 = vmul.f32 %v1667, %v1819
        %v1842 = vmul.f32 %v1669, %v1821
        %v1843 = vmul.f32 %v1671, %v1823
        %v1844 = vmul.f32 %v1673, %v1825
        %v1845 = vmul.f32 %v1675, %v1827
        %v1846 = vmul.f32 %v1677, %v1829
        %v1847 = vmul.f32 %v1679, %v1831
        %v1856 = vrot.slane %v1840, 4
        %v1857 = vrot.slane %v1841, 3
        %v1858 = vsel %vm489, %v1857, %v1856
        %v1859 = vrot.slane %v1842, 2
        %v1860 = vsel %vm492, %v1859, %v1858
        %v1861 = vrot.slane %v1843, 1
        %v1862 = vsel %vm495, %v1861, %v1860
        %v1863 = vsel %vm498, %v1844, %v1862
        %v1864 = vrot.slane %v1845, 7
        %v1865 = vsel %vm501, %v1864, %v1863
        %v1866 = vrot.slane %v1846, 6
        %v1867 = vsel %vm504, %v1866, %v1865
        %v1868 = vrot.slane %v1847, 5
        %v1869 = vsel %vm507, %v1868, %v1867
        %1870 = vrot.lane.b32.xlu0 %v1869, 32
        %v1871 = vpop.permute.xlu0 %1870
        %v1872 = vsel %vm511, %v1871, 0
        %1874 = vmatprep.subr.mxu0 0.0
        %1875 = vmatpush1.msra.mxu0 %v188
        %1876 = vmatprep.subr.mxu0 0.0
        %1877 = vmatpush1.msra.mxu0 %v189
        %1878 = vmatprep.subr.mxu0 0.0
        %1879 = vmatpush1.msra.mxu0 %v190
        %1880 = vmatprep.subr.mxu0 0.0
        %1881 = vmatpush1.msra.mxu0 %v191
        %1882 = vmatprep.subr.mxu0 0.0
        %1883 = vmatpush1.msra.mxu0 0.0
        %1884 = vmatprep.subr.mxu0 0.0
        %1885 = vmatpush1.msra.mxu0 0.0
        %1886 = vmatprep.subr.mxu0 0.0
        %1887 = vmatpush1.msra.mxu0 0.0
        %1888 = vmatprep.subr.mxu0 0.0
        %1889 = vmatpush1.msra.mxu0 0.0
        %1890 = vmatprep.subr.mxu0 0.0
        %1891 = vmatpush1.msra.mxu0 0.0
        %1892 = vmatprep.subr.mxu0 0.0
        %1893 = vmatpush1.msra.mxu0 0.0
        %1894 = vmatprep.subr.mxu0 0.0
        %1895 = vmatpush1.msra.mxu0 0.0
        %1896 = vmatprep.subr.mxu0 0.0
        %1897 = vmatpush1.msra.mxu0 0.0
        %1898 = vmatprep.subr.mxu0 0.0
        %1899 = vmatpush1.msra.mxu0 0.0
        %1900 = vmatprep.subr.mxu0 0.0
        %1901 = vmatpush1.msra.mxu0 0.0
        %1902 = vmatprep.subr.mxu0 0.0
        %1903 = vmatpush1.msra.mxu0 0.0
        %1904 = vmatprep.subr.mxu0 0.0
        %1905 = vmatpush1.msra.mxu0 0.0
        %1906 = vmatprep.subr.mxu0 0.0
        %1907 = vmatpush1.msra.mxu0 0.0
        %1908 = vmatprep.subr.mxu0 0.0
        %1909 = vmatpush1.msra.mxu0 0.0
        %1910 = vmatprep.subr.mxu0 0.0
        %1911 = vmatpush1.msra.mxu0 0.0
        %1912 = vmatprep.subr.mxu0 0.0
        %1913 = vmatpush1.msra.mxu0 0.0
        %1914 = vmatprep.subr.mxu0 0.0
        %1915 = vmatpush1.msra.mxu0 0.0
        %1916 = vmatprep.subr.mxu0 0.0
        %1917 = vmatpush1.msra.mxu0 0.0
        %1918 = vmatprep.subr.mxu0 0.0
        %1919 = vmatpush1.msra.mxu0 0.0
        %1920 = vmatprep.subr.mxu0 0.0
        %1921 = vmatpush1.msra.mxu0 0.0
        %1922 = vmatprep.subr.mxu0 0.0
        %1923 = vmatpush1.msra.mxu0 0.0
        %1924 = vmatprep.subr.mxu0 0.0
        %1925 = vmatpush1.msra.mxu0 0.0
        %1926 = vmatprep.subr.mxu0 0.0
        %1927 = vmatpush1.msra.mxu0 0.0
        %1928 = vmatprep.subr.mxu0 0.0
        %1929 = vmatpush1.msra.mxu0 0.0
        %1930 = vmatprep.subr.mxu0 0.0
        %1931 = vmatpush1.msra.mxu0 0.0
        %1932 = vmatprep.subr.mxu0 0.0
        %1933 = vmatpush1.msra.mxu0 0.0
        %1934 = vmatprep.subr.mxu0 0.0
        %1935 = vmatpush1.msra.mxu0 0.0
        %1936 = vmatprep.subr.mxu0 0.0
        %1937 = vmatpush1.msra.mxu0 0.0
        %1938 = vmatprep.mubr.f32.mxu0 0.0
        %1939 = vmatmul.mubr.f32.gmra.mrb[0].mxu0 %v1872
        %v1940 = vpop.f32.mrb[0].mxu0
        %v1941 = vadd.f32 0.0, %v1940
        %v1942 = vpop.f32.mrb[0].mxu0
        %1943 = vdwg.mxu0
        %v1945 = vrot.slane %v1941, 3
        %v1946 = vrot.slane %v1941, 4
        %v1947 = vrot.slane %v1941, 5
        %v1948 = vrot.slane %v1941, 6
        %v1949 = vrot.slane %v1941, 7
        %v1950 = vrot.slane %v1941, 1
        %v1951 = vrot.slane %v1941, 2
        %v1960 = vadd.f32 %v298, %v1945
        %v1961 = vadd.f32 %v303, %v1946
        %v1962 = vadd.f32 %v308, %v1947
        %v1963 = vadd.f32 %v313, %v1948
        %v1964 = vadd.f32 %v318, %v1949
        %v1965 = vadd.f32 %v323, %v1941
        %v1966 = vadd.f32 %v328, %v1950
        %v1967 = vadd.f32 %v333, %v1951
        %v1968 = vsub.f32 0.0, %v1960
        %v1969 = vsub.f32 0.0, %v1961
        %v1970 = vsub.f32 0.0, %v1962
        %v1971 = vsub.f32 0.0, %v1963
        %v1972 = vsub.f32 0.0, %v1964
        %v1973 = vsub.f32 0.0, %v1965
        %v1974 = vsub.f32 0.0, %v1966
        %v1975 = vsub.f32 0.0, %v1967
        %v1976 = vmul.f32 %v1968, 1.442695
        %v1977 = vpow.pop %v1976
        %v1978 = vmul.f32 %v1969, 1.442695
        %v1979 = vpow.pop %v1978
        %v1980 = vmul.f32 %v1970, 1.442695
        %v1981 = vpow.pop %v1980
        %v1982 = vmul.f32 %v1971, 1.442695
        %v1983 = vpow.pop %v1982
        %v1984 = vmul.f32 %v1972, 1.442695
        %v1985 = vpow.pop %v1984
        %v1986 = vmul.f32 %v1973, 1.442695
        %v1987 = vpow.pop %v1986
        %v1988 = vmul.f32 %v1974, 1.442695
        %v1989 = vpow.pop %v1988
        %v1990 = vmul.f32 %v1975, 1.442695
        %v1991 = vpow.pop %v1990
        %v1992 = vadd.f32 %v1977, 1.0
        %v1993 = vadd.f32 %v1979, 1.0
        %v1994 = vadd.f32 %v1981, 1.0
        %v1995 = vadd.f32 %v1983, 1.0
        %v1996 = vadd.f32 %v1985, 1.0
        %v1997 = vadd.f32 %v1987, 1.0
        %v1998 = vadd.f32 %v1989, 1.0
        %v1999 = vadd.f32 %v1991, 1.0
        %v2000 = vrcp.pop %v1992
        %v2001 = vmul.f32 1.0, %v2000
        %v2002 = vrcp.pop %v1993
        %v2003 = vmul.f32 1.0, %v2002
        %v2004 = vrcp.pop %v1994
        %v2005 = vmul.f32 1.0, %v2004
        %v2006 = vrcp.pop %v1995
        %v2007 = vmul.f32 1.0, %v2006
        %v2008 = vrcp.pop %v1996
        %v2009 = vmul.f32 1.0, %v2008
        %v2010 = vrcp.pop %v1997
        %v2011 = vmul.f32 1.0, %v2010
        %v2012 = vrcp.pop %v1998
        %v2013 = vmul.f32 1.0, %v2012
        %v2014 = vrcp.pop %v1999
        %v2015 = vmul.f32 1.0, %v2014
        %v2016 = vtanh.pop %v1960
        %v2017 = vtanh.pop %v1961
        %v2018 = vtanh.pop %v1962
        %v2019 = vtanh.pop %v1963
        %v2020 = vtanh.pop %v1964
        %v2021 = vtanh.pop %v1965
        %v2022 = vtanh.pop %v1966
        %v2023 = vtanh.pop %v1967
        %v2032 = vrot.slane %v1792, 7
        %v2033 = vrot.slane %v1793, 7
        %v2034 = vrot.slane %v1794, 7
        %v2035 = vrot.slane %v1795, 7
        %v2036 = vrot.slane %v1796, 7
        %v2037 = vrot.slane %v1797, 7
        %v2038 = vrot.slane %v1798, 7
        %v2039 = vrot.slane %v1799, 7
        %v2048 = vmul.f32 %v2001, %v2032
        %v2049 = vmul.f32 %v2003, %v2033
        %v2050 = vmul.f32 %v2005, %v2034
        %v2051 = vmul.f32 %v2007, %v2035
        %v2052 = vmul.f32 %v2009, %v2036
        %v2053 = vmul.f32 %v2011, %v2037
        %v2054 = vmul.f32 %v2013, %v2038
        %v2055 = vmul.f32 %v2015, %v2039
        %2064 = vrot.lane.b32.xlu0 %v2016, 64
        %v2065 = vpop.permute.xlu0 %2064
        %2066 = vrot.lane.b32.xlu0 %v2017, 64
        %v2067 = vpop.permute.xlu0 %2066
        %2068 = vrot.lane.b32.xlu0 %v2018, 64
        %v2069 = vpop.permute.xlu0 %2068
        %2070 = vrot.lane.b32.xlu0 %v2019, 64
        %v2071 = vpop.permute.xlu0 %2070
        %2072 = vrot.lane.b32.xlu0 %v2020, 64
        %v2073 = vpop.permute.xlu0 %2072
        %2074 = vrot.lane.b32.xlu0 %v2021, 64
        %v2075 = vpop.permute.xlu0 %2074
        %2076 = vrot.lane.b32.xlu0 %v2022, 64
        %v2077 = vpop.permute.xlu0 %2076
        %2078 = vrot.lane.b32.xlu0 %v2023, 64
        %v2079 = vpop.permute.xlu0 %2078
        %v2088 = vmul.f32 %v2001, %v2065
        %v2089 = vmul.f32 %v2003, %v2067
        %v2090 = vmul.f32 %v2005, %v2069
        %v2091 = vmul.f32 %v2007, %v2071
        %v2092 = vmul.f32 %v2009, %v2073
        %v2093 = vmul.f32 %v2011, %v2075
        %v2094 = vmul.f32 %v2013, %v2077
        %v2095 = vmul.f32 %v2015, %v2079
        %2104 = vrot.lane.b32.xlu0 %v2088, 32
        %v2105 = vpop.permute.xlu0 %2104
        %2106 = vrot.lane.b32.xlu0 %v2089, 32
        %v2107 = vpop.permute.xlu0 %2106
        %2108 = vrot.lane.b32.xlu0 %v2090, 32
        %v2109 = vpop.permute.xlu0 %2108
        %2110 = vrot.lane.b32.xlu0 %v2091, 32
        %v2111 = vpop.permute.xlu0 %2110
        %2112 = vrot.lane.b32.xlu0 %v2092, 32
        %v2113 = vpop.permute.xlu0 %2112
        %2114 = vrot.lane.b32.xlu0 %v2093, 32
        %v2115 = vpop.permute.xlu0 %2114
        %2116 = vrot.lane.b32.xlu0 %v2094, 32
        %v2117 = vpop.permute.xlu0 %2116
        %2118 = vrot.lane.b32.xlu0 %v2095, 32
        %v2119 = vpop.permute.xlu0 %2118
        %v2128 = vadd.f32 %v2048, %v2105
        %v2129 = vadd.f32 %v2049, %v2107
        %v2130 = vadd.f32 %v2050, %v2109
        %v2131 = vadd.f32 %v2051, %v2111
        %v2132 = vadd.f32 %v2052, %v2113
        %v2133 = vadd.f32 %v2053, %v2115
        %v2134 = vadd.f32 %v2054, %v2117
        %v2135 = vadd.f32 %v2055, %v2119
        %v2136 = vtanh.pop %v2128
        %v2137 = vtanh.pop %v2129
        %v2138 = vtanh.pop %v2130
        %v2139 = vtanh.pop %v2131
        %v2140 = vtanh.pop %v2132
        %v2141 = vtanh.pop %v2133
        %v2142 = vtanh.pop %v2134
        %v2143 = vtanh.pop %v2135
        %2152 = vrot.lane.b32.xlu0 %v2136, 64
        %v2153 = vpop.permute.xlu0 %2152
        %2154 = vrot.lane.b32.xlu0 %v2137, 64
        %v2155 = vpop.permute.xlu0 %2154
        %2156 = vrot.lane.b32.xlu0 %v2138, 64
        %v2157 = vpop.permute.xlu0 %2156
        %2158 = vrot.lane.b32.xlu0 %v2139, 64
        %v2159 = vpop.permute.xlu0 %2158
        %2160 = vrot.lane.b32.xlu0 %v2140, 64
        %v2161 = vpop.permute.xlu0 %2160
        %2162 = vrot.lane.b32.xlu0 %v2141, 64
        %v2163 = vpop.permute.xlu0 %2162
        %2164 = vrot.lane.b32.xlu0 %v2142, 64
        %v2165 = vpop.permute.xlu0 %2164
        %2166 = vrot.lane.b32.xlu0 %v2143, 64
        %v2167 = vpop.permute.xlu0 %2166
        %v2176 = vmul.f32 %v2001, %v2153
        %v2177 = vmul.f32 %v2003, %v2155
        %v2178 = vmul.f32 %v2005, %v2157
        %v2179 = vmul.f32 %v2007, %v2159
        %v2180 = vmul.f32 %v2009, %v2161
        %v2181 = vmul.f32 %v2011, %v2163
        %v2182 = vmul.f32 %v2013, %v2165
        %v2183 = vmul.f32 %v2015, %v2167
        %v2192 = vrot.slane %v2176, 5
        %v2193 = vrot.slane %v2177, 4
        %v2194 = vsel %vm489, %v2193, %v2192
        %v2195 = vrot.slane %v2178, 3
        %v2196 = vsel %vm492, %v2195, %v2194
        %v2197 = vrot.slane %v2179, 2
        %v2198 = vsel %vm495, %v2197, %v2196
        %v2199 = vrot.slane %v2180, 1
        %v2200 = vsel %vm498, %v2199, %v2198
        %v2201 = vsel %vm501, %v2181, %v2200
        %v2202 = vrot.slane %v2182, 7
        %v2203 = vsel %vm504, %v2202, %v2201
        %v2204 = vrot.slane %v2183, 6
        %v2205 = vsel %vm507, %v2204, %v2203
        %2206 = vrot.lane.b32.xlu0 %v2205, 32
        %v2207 = vpop.permute.xlu0 %2206
        %v2208 = vsel %vm511, %v2207, 0
        %2210 = vmatprep.subr.mxu0 0.0
        %2211 = vmatpush1.msra.mxu0 %v188
        %2212 = vmatprep.subr.mxu0 0.0
        %2213 = vmatpush1.msra.mxu0 %v189
        %2214 = vmatprep.subr.mxu0 0.0
        %2215 = vmatpush1.msra.mxu0 %v190
        %2216 = vmatprep.subr.mxu0 0.0
        %2217 = vmatpush1.msra.mxu0 %v191
        %2218 = vmatprep.subr.mxu0 0.0
        %2219 = vmatpush1.msra.mxu0 0.0
        %2220 = vmatprep.subr.mxu0 0.0
        %2221 = vmatpush1.msra.mxu0 0.0
        %2222 = vmatprep.subr.mxu0 0.0
        %2223 = vmatpush1.msra.mxu0 0.0
        %2224 = vmatprep.subr.mxu0 0.0
        %2225 = vmatpush1.msra.mxu0 0.0
        %2226 = vmatprep.subr.mxu0 0.0
        %2227 = vmatpush1.msra.mxu0 0.0
        %2228 = vmatprep.subr.mxu0 0.0
        %2229 = vmatpush1.msra.mxu0 0.0
        %2230 = vmatprep.subr.mxu0 0.0
        %2231 = vmatpush1.msra.mxu0 0.0
        %2232 = vmatprep.subr.mxu0 0.0
        %2233 = vmatpush1.msra.mxu0 0.0
        %2234 = vmatprep.subr.mxu0 0.0
        %2235 = vmatpush1.msra.mxu0 0.0
        %2236 = vmatprep.subr.mxu0 0.0
        %2237 = vmatpush1.msra.mxu0 0.0
        %2238 = vmatprep.subr.mxu0 0.0
        %2239 = vmatpush1.msra.mxu0 0.0
        %2240 = vmatprep.subr.mxu0 0.0
        %2241 = vmatpush1.msra.mxu0 0.0
        %2242 = vmatprep.subr.mxu0 0.0
        %2243 = vmatpush1.msra.mxu0 0.0
        %2244 = vmatprep.subr.mxu0 0.0
        %2245 = vmatpush1.msra.mxu0 0.0
        %2246 = vmatprep.subr.mxu0 0.0
        %2247 = vmatpush1.msra.mxu0 0.0
        %2248 = vmatprep.subr.mxu0 0.0
        %2249 = vmatpush1.msra.mxu0 0.0
        %2250 = vmatprep.subr.mxu0 0.0
        %2251 = vmatpush1.msra.mxu0 0.0
        %2252 = vmatprep.subr.mxu0 0.0
        %2253 = vmatpush1.msra.mxu0 0.0
        %2254 = vmatprep.subr.mxu0 0.0
        %2255 = vmatpush1.msra.mxu0 0.0
        %2256 = vmatprep.subr.mxu0 0.0
        %2257 = vmatpush1.msra.mxu0 0.0
        %2258 = vmatprep.subr.mxu0 0.0
        %2259 = vmatpush1.msra.mxu0 0.0
        %2260 = vmatprep.subr.mxu0 0.0
        %2261 = vmatpush1.msra.mxu0 0.0
        %2262 = vmatprep.subr.mxu0 0.0
        %2263 = vmatpush1.msra.mxu0 0.0
        %2264 = vmatprep.subr.mxu0 0.0
        %2265 = vmatpush1.msra.mxu0 0.0
        %2266 = vmatprep.subr.mxu0 0.0
        %2267 = vmatpush1.msra.mxu0 0.0
        %2268 = vmatprep.subr.mxu0 0.0
        %2269 = vmatpush1.msra.mxu0 0.0
        %2270 = vmatprep.subr.mxu0 0.0
        %2271 = vmatpush1.msra.mxu0 0.0
        %2272 = vmatprep.subr.mxu0 0.0
        %2273 = vmatpush1.msra.mxu0 0.0
        %2274 = vmatprep.mubr.f32.mxu0 0.0
        %2275 = vmatmul.mubr.f32.gmra.mrb[0].mxu0 %v2208
        %v2276 = vpop.f32.mrb[0].mxu0
        %v2277 = vadd.f32 0.0, %v2276
        %v2278 = vpop.f32.mrb[0].mxu0
        %2279 = vdwg.mxu0
        %v2281 = vrot.slane %v2277, 2
        %v2282 = vrot.slane %v2277, 3
        %v2283 = vrot.slane %v2277, 4
        %v2284 = vrot.slane %v2277, 5
        %v2285 = vrot.slane %v2277, 6
        %v2286 = vrot.slane %v2277, 7
        %v2287 = vrot.slane %v2277, 1
        %v2296 = vadd.f32 %v298, %v2281
        %v2297 = vadd.f32 %v303, %v2282
        %v2298 = vadd.f32 %v308, %v2283
        %v2299 = vadd.f32 %v313, %v2284
        %v2300 = vadd.f32 %v318, %v2285
        %v2301 = vadd.f32 %v323, %v2286
        %v2302 = vadd.f32 %v328, %v2277
        %v2303 = vadd.f32 %v333, %v2287
        %v2304 = vsub.f32 0.0, %v2296
        %v2305 = vsub.f32 0.0, %v2297
        %v2306 = vsub.f32 0.0, %v2298
        %v2307 = vsub.f32 0.0, %v2299
        %v2308 = vsub.f32 0.0, %v2300
        %v2309 = vsub.f32 0.0, %v2301
        %v2310 = vsub.f32 0.0, %v2302
        %v2311 = vsub.f32 0.0, %v2303
        %v2312 = vmul.f32 %v2304, 1.442695
        %v2313 = vpow.pop %v2312
        %v2314 = vmul.f32 %v2305, 1.442695
        %v2315 = vpow.pop %v2314
        %v2316 = vmul.f32 %v2306, 1.442695
        %v2317 = vpow.pop %v2316
        %v2318 = vmul.f32 %v2307, 1.442695
        %v2319 = vpow.pop %v2318
        %v2320 = vmul.f32 %v2308, 1.442695
        %v2321 = vpow.pop %v2320
        %v2322 = vmul.f32 %v2309, 1.442695
        %v2323 = vpow.pop %v2322
        %v2324 = vmul.f32 %v2310, 1.442695
        %v2325 = vpow.pop %v2324
        %v2326 = vmul.f32 %v2311, 1.442695
        %v2327 = vpow.pop %v2326
        %v2328 = vadd.f32 %v2313, 1.0
        %v2329 = vadd.f32 %v2315, 1.0
        %v2330 = vadd.f32 %v2317, 1.0
        %v2331 = vadd.f32 %v2319, 1.0
        %v2332 = vadd.f32 %v2321, 1.0
        %v2333 = vadd.f32 %v2323, 1.0
        %v2334 = vadd.f32 %v2325, 1.0
        %v2335 = vadd.f32 %v2327, 1.0
        %v2336 = vrcp.pop %v2328
        %v2337 = vmul.f32 1.0, %v2336
        %v2338 = vrcp.pop %v2329
        %v2339 = vmul.f32 1.0, %v2338
        %v2340 = vrcp.pop %v2330
        %v2341 = vmul.f32 1.0, %v2340
        %v2342 = vrcp.pop %v2331
        %v2343 = vmul.f32 1.0, %v2342
        %v2344 = vrcp.pop %v2332
        %v2345 = vmul.f32 1.0, %v2344
        %v2346 = vrcp.pop %v2333
        %v2347 = vmul.f32 1.0, %v2346
        %v2348 = vrcp.pop %v2334
        %v2349 = vmul.f32 1.0, %v2348
        %v2350 = vrcp.pop %v2335
        %v2351 = vmul.f32 1.0, %v2350
        %v2352 = vtanh.pop %v2296
        %v2353 = vtanh.pop %v2297
        %v2354 = vtanh.pop %v2298
        %v2355 = vtanh.pop %v2299
        %v2356 = vtanh.pop %v2300
        %v2357 = vtanh.pop %v2301
        %v2358 = vtanh.pop %v2302
        %v2359 = vtanh.pop %v2303
        %v2368 = vrot.slane %v2128, 7
        %v2369 = vrot.slane %v2129, 7
        %v2370 = vrot.slane %v2130, 7
        %v2371 = vrot.slane %v2131, 7
        %v2372 = vrot.slane %v2132, 7
        %v2373 = vrot.slane %v2133, 7
        %v2374 = vrot.slane %v2134, 7
        %v2375 = vrot.slane %v2135, 7
        %v2384 = vmul.f32 %v2337, %v2368
        %v2385 = vmul.f32 %v2339, %v2369
        %v2386 = vmul.f32 %v2341, %v2370
        %v2387 = vmul.f32 %v2343, %v2371
        %v2388 = vmul.f32 %v2345, %v2372
        %v2389 = vmul.f32 %v2347, %v2373
        %v2390 = vmul.f32 %v2349, %v2374
        %v2391 = vmul.f32 %v2351, %v2375
        %2400 = vrot.lane.b32.xlu0 %v2352, 64
        %v2401 = vpop.permute.xlu0 %2400
        %2402 = vrot.lane.b32.xlu0 %v2353, 64
        %v2403 = vpop.permute.xlu0 %2402
        %2404 = vrot.lane.b32.xlu0 %v2354, 64
        %v2405 = vpop.permute.xlu0 %2404
        %2406 = vrot.lane.b32.xlu0 %v2355, 64
        %v2407 = vpop.permute.xlu0 %2406
        %2408 = vrot.lane.b32.xlu0 %v2356, 64
        %v2409 = vpop.permute.xlu0 %2408
        %2410 = vrot.lane.b32.xlu0 %v2357, 64
        %v2411 = vpop.permute.xlu0 %2410
        %2412 = vrot.lane.b32.xlu0 %v2358, 64
        %v2413 = vpop.permute.xlu0 %2412
        %2414 = vrot.lane.b32.xlu0 %v2359, 64
        %v2415 = vpop.permute.xlu0 %2414
        %v2424 = vmul.f32 %v2337, %v2401
        %v2425 = vmul.f32 %v2339, %v2403
        %v2426 = vmul.f32 %v2341, %v2405
        %v2427 = vmul.f32 %v2343, %v2407
        %v2428 = vmul.f32 %v2345, %v2409
        %v2429 = vmul.f32 %v2347, %v2411
        %v2430 = vmul.f32 %v2349, %v2413
        %v2431 = vmul.f32 %v2351, %v2415
        %2440 = vrot.lane.b32.xlu0 %v2424, 32
        %v2441 = vpop.permute.xlu0 %2440
        %2442 = vrot.lane.b32.xlu0 %v2425, 32
        %v2443 = vpop.permute.xlu0 %2442
        %2444 = vrot.lane.b32.xlu0 %v2426, 32
        %v2445 = vpop.permute.xlu0 %2444
        %2446 = vrot.lane.b32.xlu0 %v2427, 32
        %v2447 = vpop.permute.xlu0 %2446
        %2448 = vrot.lane.b32.xlu0 %v2428, 32
        %v2449 = vpop.permute.xlu0 %2448
        %2450 = vrot.lane.b32.xlu0 %v2429, 32
        %v2451 = vpop.permute.xlu0 %2450
        %2452 = vrot.lane.b32.xlu0 %v2430, 32
        %v2453 = vpop.permute.xlu0 %2452
        %2454 = vrot.lane.b32.xlu0 %v2431, 32
        %v2455 = vpop.permute.xlu0 %2454
        %v2464 = vadd.f32 %v2384, %v2441
        %v2465 = vadd.f32 %v2385, %v2443
        %v2466 = vadd.f32 %v2386, %v2445
        %v2467 = vadd.f32 %v2387, %v2447
        %v2468 = vadd.f32 %v2388, %v2449
        %v2469 = vadd.f32 %v2389, %v2451
        %v2470 = vadd.f32 %v2390, %v2453
        %v2471 = vadd.f32 %v2391, %v2455
        %v2472 = vtanh.pop %v2464
        %v2473 = vtanh.pop %v2465
        %v2474 = vtanh.pop %v2466
        %v2475 = vtanh.pop %v2467
        %v2476 = vtanh.pop %v2468
        %v2477 = vtanh.pop %v2469
        %v2478 = vtanh.pop %v2470
        %v2479 = vtanh.pop %v2471
        %2488 = vrot.lane.b32.xlu0 %v2472, 64
        %v2489 = vpop.permute.xlu0 %2488
        %2490 = vrot.lane.b32.xlu0 %v2473, 64
        %v2491 = vpop.permute.xlu0 %2490
        %2492 = vrot.lane.b32.xlu0 %v2474, 64
        %v2493 = vpop.permute.xlu0 %2492
        %2494 = vrot.lane.b32.xlu0 %v2475, 64
        %v2495 = vpop.permute.xlu0 %2494
        %2496 = vrot.lane.b32.xlu0 %v2476, 64
        %v2497 = vpop.permute.xlu0 %2496
        %2498 = vrot.lane.b32.xlu0 %v2477, 64
        %v2499 = vpop.permute.xlu0 %2498
        %2500 = vrot.lane.b32.xlu0 %v2478, 64
        %v2501 = vpop.permute.xlu0 %2500
        %2502 = vrot.lane.b32.xlu0 %v2479, 64
        %v2503 = vpop.permute.xlu0 %2502
        %v2512 = vmul.f32 %v2337, %v2489
        %v2513 = vmul.f32 %v2339, %v2491
        %v2514 = vmul.f32 %v2341, %v2493
        %v2515 = vmul.f32 %v2343, %v2495
        %v2516 = vmul.f32 %v2345, %v2497
        %v2517 = vmul.f32 %v2347, %v2499
        %v2518 = vmul.f32 %v2349, %v2501
        %v2519 = vmul.f32 %v2351, %v2503
        %v2528 = vrot.slane %v2512, 6
        %v2529 = vrot.slane %v2513, 5
        %v2530 = vsel %vm489, %v2529, %v2528
        %v2531 = vrot.slane %v2514, 4
        %v2532 = vsel %vm492, %v2531, %v2530
        %v2533 = vrot.slane %v2515, 3
        %v2534 = vsel %vm495, %v2533, %v2532
        %v2535 = vrot.slane %v2516, 2
        %v2536 = vsel %vm498, %v2535, %v2534
        %v2537 = vrot.slane %v2517, 1
        %v2538 = vsel %vm501, %v2537, %v2536
        %v2539 = vsel %vm504, %v2518, %v2538
        %v2540 = vrot.slane %v2519, 7
        %v2541 = vsel %vm507, %v2540, %v2539
        %2542 = vrot.lane.b32.xlu0 %v2541, 32
        %v2543 = vpop.permute.xlu0 %2542
        %v2544 = vsel %vm511, %v2543, 0
        %2546 = vmatprep.subr.mxu0 0.0
        %2547 = vmatpush1.msra.mxu0 %v188
        %2548 = vmatprep.subr.mxu0 0.0
        %2549 = vmatpush1.msra.mxu0 %v189
        %2550 = vmatprep.subr.mxu0 0.0
        %2551 = vmatpush1.msra.mxu0 %v190
        %2552 = vmatprep.subr.mxu0 0.0
        %2553 = vmatpush1.msra.mxu0 %v191
        %2554 = vmatprep.subr.mxu0 0.0
        %2555 = vmatpush1.msra.mxu0 0.0
        %2556 = vmatprep.subr.mxu0 0.0
        %2557 = vmatpush1.msra.mxu0 0.0
        %2558 = vmatprep.subr.mxu0 0.0
        %2559 = vmatpush1.msra.mxu0 0.0
        %2560 = vmatprep.subr.mxu0 0.0
        %2561 = vmatpush1.msra.mxu0 0.0
        %2562 = vmatprep.subr.mxu0 0.0
        %2563 = vmatpush1.msra.mxu0 0.0
        %2564 = vmatprep.subr.mxu0 0.0
        %2565 = vmatpush1.msra.mxu0 0.0
        %2566 = vmatprep.subr.mxu0 0.0
        %2567 = vmatpush1.msra.mxu0 0.0
        %2568 = vmatprep.subr.mxu0 0.0
        %2569 = vmatpush1.msra.mxu0 0.0
        %2570 = vmatprep.subr.mxu0 0.0
        %2571 = vmatpush1.msra.mxu0 0.0
        %2572 = vmatprep.subr.mxu0 0.0
        %2573 = vmatpush1.msra.mxu0 0.0
        %2574 = vmatprep.subr.mxu0 0.0
        %2575 = vmatpush1.msra.mxu0 0.0
        %2576 = vmatprep.subr.mxu0 0.0
        %2577 = vmatpush1.msra.mxu0 0.0
        %2578 = vmatprep.subr.mxu0 0.0
        %2579 = vmatpush1.msra.mxu0 0.0
        %2580 = vmatprep.subr.mxu0 0.0
        %2581 = vmatpush1.msra.mxu0 0.0
        %2582 = vmatprep.subr.mxu0 0.0
        %2583 = vmatpush1.msra.mxu0 0.0
        %2584 = vmatprep.subr.mxu0 0.0
        %2585 = vmatpush1.msra.mxu0 0.0
        %2586 = vmatprep.subr.mxu0 0.0
        %2587 = vmatpush1.msra.mxu0 0.0
        %2588 = vmatprep.subr.mxu0 0.0
        %2589 = vmatpush1.msra.mxu0 0.0
        %2590 = vmatprep.subr.mxu0 0.0
        %2591 = vmatpush1.msra.mxu0 0.0
        %2592 = vmatprep.subr.mxu0 0.0
        %2593 = vmatpush1.msra.mxu0 0.0
        %2594 = vmatprep.subr.mxu0 0.0
        %2595 = vmatpush1.msra.mxu0 0.0
        %2596 = vmatprep.subr.mxu0 0.0
        %2597 = vmatpush1.msra.mxu0 0.0
        %2598 = vmatprep.subr.mxu0 0.0
        %2599 = vmatpush1.msra.mxu0 0.0
        %2600 = vmatprep.subr.mxu0 0.0
        %2601 = vmatpush1.msra.mxu0 0.0
        %2602 = vmatprep.subr.mxu0 0.0
        %2603 = vmatpush1.msra.mxu0 0.0
        %2604 = vmatprep.subr.mxu0 0.0
        %2605 = vmatpush1.msra.mxu0 0.0
        %2606 = vmatprep.subr.mxu0 0.0
        %2607 = vmatpush1.msra.mxu0 0.0
        %2608 = vmatprep.subr.mxu0 0.0
        %2609 = vmatpush1.msra.mxu0 0.0
        %2610 = vmatprep.mubr.f32.mxu0 0.0
        %2611 = vmatmul.mubr.f32.gmra.mrb[0].mxu0 %v2544
        %v2612 = vpop.f32.mrb[0].mxu0
        %v2613 = vadd.f32 0.0, %v2612
        %v2614 = vpop.f32.mrb[0].mxu0
        %2615 = vdwg.mxu0
        %v2617 = vrot.slane %v2613, 1
        %v2618 = vrot.slane %v2613, 2
        %v2619 = vrot.slane %v2613, 3
        %v2620 = vrot.slane %v2613, 4
        %v2621 = vrot.slane %v2613, 5
        %v2622 = vrot.slane %v2613, 6
        %v2623 = vrot.slane %v2613, 7
        %v2632 = vadd.f32 %v298, %v2617
        %v2633 = vadd.f32 %v303, %v2618
        %v2634 = vadd.f32 %v308, %v2619
        %v2635 = vadd.f32 %v313, %v2620
        %v2636 = vadd.f32 %v318, %v2621
        %v2637 = vadd.f32 %v323, %v2622
        %v2638 = vadd.f32 %v328, %v2623
        %v2639 = vadd.f32 %v333, %v2613
        %v2640 = vsub.f32 0.0, %v2632
        %v2641 = vsub.f32 0.0, %v2633
        %v2642 = vsub.f32 0.0, %v2634
        %v2643 = vsub.f32 0.0, %v2635
        %v2644 = vsub.f32 0.0, %v2636
        %v2645 = vsub.f32 0.0, %v2637
        %v2646 = vsub.f32 0.0, %v2638
        %v2647 = vsub.f32 0.0, %v2639
        %v2648 = vmul.f32 %v2640, 1.442695
        %v2649 = vpow.pop %v2648
        %v2650 = vmul.f32 %v2641, 1.442695
        %v2651 = vpow.pop %v2650
        %v2652 = vmul.f32 %v2642, 1.442695
        %v2653 = vpow.pop %v2652
        %v2654 = vmul.f32 %v2643, 1.442695
        %v2655 = vpow.pop %v2654
        %v2656 = vmul.f32 %v2644, 1.442695
        %v2657 = vpow.pop %v2656
        %v2658 = vmul.f32 %v2645, 1.442695
        %v2659 = vpow.pop %v2658
        %v2660 = vmul.f32 %v2646, 1.442695
        %v2661 = vpow.pop %v2660
        %v2662 = vmul.f32 %v2647, 1.442695
        %v2663 = vpow.pop %v2662
        %v2664 = vadd.f32 %v2649, 1.0
        %v2665 = vadd.f32 %v2651, 1.0
        %v2666 = vadd.f32 %v2653, 1.0
        %v2667 = vadd.f32 %v2655, 1.0
        %v2668 = vadd.f32 %v2657, 1.0
        %v2669 = vadd.f32 %v2659, 1.0
        %v2670 = vadd.f32 %v2661, 1.0
        %v2671 = vadd.f32 %v2663, 1.0
        %v2672 = vrcp.pop %v2664
        %v2673 = vmul.f32 1.0, %v2672
        %v2674 = vrcp.pop %v2665
        %v2675 = vmul.f32 1.0, %v2674
        %v2676 = vrcp.pop %v2666
        %v2677 = vmul.f32 1.0, %v2676
        %v2678 = vrcp.pop %v2667
        %v2679 = vmul.f32 1.0, %v2678
        %v2680 = vrcp.pop %v2668
        %v2681 = vmul.f32 1.0, %v2680
        %v2682 = vrcp.pop %v2669
        %v2683 = vmul.f32 1.0, %v2682
        %v2684 = vrcp.pop %v2670
        %v2685 = vmul.f32 1.0, %v2684
        %v2686 = vrcp.pop %v2671
        %v2687 = vmul.f32 1.0, %v2686
        %v2688 = vtanh.pop %v2632
        %v2689 = vtanh.pop %v2633
        %v2690 = vtanh.pop %v2634
        %v2691 = vtanh.pop %v2635
        %v2692 = vtanh.pop %v2636
        %v2693 = vtanh.pop %v2637
        %v2694 = vtanh.pop %v2638
        %v2695 = vtanh.pop %v2639
        %v2704 = vrot.slane %v2464, 7
        %v2705 = vrot.slane %v2465, 7
        %v2706 = vrot.slane %v2466, 7
        %v2707 = vrot.slane %v2467, 7
        %v2708 = vrot.slane %v2468, 7
        %v2709 = vrot.slane %v2469, 7
        %v2710 = vrot.slane %v2470, 7
        %v2711 = vrot.slane %v2471, 7
        %v2720 = vmul.f32 %v2673, %v2704
        %v2721 = vmul.f32 %v2675, %v2705
        %v2722 = vmul.f32 %v2677, %v2706
        %v2723 = vmul.f32 %v2679, %v2707
        %v2724 = vmul.f32 %v2681, %v2708
        %v2725 = vmul.f32 %v2683, %v2709
        %v2726 = vmul.f32 %v2685, %v2710
        %v2727 = vmul.f32 %v2687, %v2711
        %2736 = vrot.lane.b32.xlu0 %v2688, 64
        %v2737 = vpop.permute.xlu0 %2736
        %2738 = vrot.lane.b32.xlu0 %v2689, 64
        %v2739 = vpop.permute.xlu0 %2738
        %2740 = vrot.lane.b32.xlu0 %v2690, 64
        %v2741 = vpop.permute.xlu0 %2740
        %2742 = vrot.lane.b32.xlu0 %v2691, 64
        %v2743 = vpop.permute.xlu0 %2742
        %2744 = vrot.lane.b32.xlu0 %v2692, 64
        %v2745 = vpop.permute.xlu0 %2744
        %2746 = vrot.lane.b32.xlu0 %v2693, 64
        %v2747 = vpop.permute.xlu0 %2746
        %2748 = vrot.lane.b32.xlu0 %v2694, 64
        %v2749 = vpop.permute.xlu0 %2748
        %2750 = vrot.lane.b32.xlu0 %v2695, 64
        %v2751 = vpop.permute.xlu0 %2750
        %v2760 = vmul.f32 %v2673, %v2737
        %v2761 = vmul.f32 %v2675, %v2739
        %v2762 = vmul.f32 %v2677, %v2741
        %v2763 = vmul.f32 %v2679, %v2743
        %v2764 = vmul.f32 %v2681, %v2745
        %v2765 = vmul.f32 %v2683, %v2747
        %v2766 = vmul.f32 %v2685, %v2749
        %v2767 = vmul.f32 %v2687, %v2751
        %2776 = vrot.lane.b32.xlu0 %v2760, 32
        %v2777 = vpop.permute.xlu0 %2776
        %2778 = vrot.lane.b32.xlu0 %v2761, 32
        %v2779 = vpop.permute.xlu0 %2778
        %2780 = vrot.lane.b32.xlu0 %v2762, 32
        %v2781 = vpop.permute.xlu0 %2780
        %2782 = vrot.lane.b32.xlu0 %v2763, 32
        %v2783 = vpop.permute.xlu0 %2782
        %2784 = vrot.lane.b32.xlu0 %v2764, 32
        %v2785 = vpop.permute.xlu0 %2784
        %2786 = vrot.lane.b32.xlu0 %v2765, 32
        %v2787 = vpop.permute.xlu0 %2786
        %2788 = vrot.lane.b32.xlu0 %v2766, 32
        %v2789 = vpop.permute.xlu0 %2788
        %2790 = vrot.lane.b32.xlu0 %v2767, 32
        %v2791 = vpop.permute.xlu0 %2790
        %v2800 = vadd.f32 %v2720, %v2777
        %v2801 = vadd.f32 %v2721, %v2779
        %v2802 = vadd.f32 %v2722, %v2781
        %v2803 = vadd.f32 %v2723, %v2783
        %v2804 = vadd.f32 %v2724, %v2785
        %v2805 = vadd.f32 %v2725, %v2787
        %v2806 = vadd.f32 %v2726, %v2789
        %v2807 = vadd.f32 %v2727, %v2791
        %v2808 = vtanh.pop %v2800
        %v2809 = vtanh.pop %v2801
        %v2810 = vtanh.pop %v2802
        %v2811 = vtanh.pop %v2803
        %v2812 = vtanh.pop %v2804
        %v2813 = vtanh.pop %v2805
        %v2814 = vtanh.pop %v2806
        %v2815 = vtanh.pop %v2807
        %2824 = vrot.lane.b32.xlu0 %v2808, 64
        %v2825 = vpop.permute.xlu0 %2824
        %2826 = vrot.lane.b32.xlu0 %v2809, 64
        %v2827 = vpop.permute.xlu0 %2826
        %2828 = vrot.lane.b32.xlu0 %v2810, 64
        %v2829 = vpop.permute.xlu0 %2828
        %2830 = vrot.lane.b32.xlu0 %v2811, 64
        %v2831 = vpop.permute.xlu0 %2830
        %2832 = vrot.lane.b32.xlu0 %v2812, 64
        %v2833 = vpop.permute.xlu0 %2832
        %2834 = vrot.lane.b32.xlu0 %v2813, 64
        %v2835 = vpop.permute.xlu0 %2834
        %2836 = vrot.lane.b32.xlu0 %v2814, 64
        %v2837 = vpop.permute.xlu0 %2836
        %2838 = vrot.lane.b32.xlu0 %v2815, 64
        %v2839 = vpop.permute.xlu0 %2838
        %v2848 = vmul.f32 %v2673, %v2825
        %v2849 = vmul.f32 %v2675, %v2827
        %v2850 = vmul.f32 %v2677, %v2829
        %v2851 = vmul.f32 %v2679, %v2831
        %v2852 = vmul.f32 %v2681, %v2833
        %v2853 = vmul.f32 %v2683, %v2835
        %v2854 = vmul.f32 %v2685, %v2837
        %v2855 = vmul.f32 %v2687, %v2839
        %v2864 = vrot.slane %v2848, 7
        %v2865 = vrot.slane %v2849, 6
        %v2866 = vsel %vm489, %v2865, %v2864
        %v2867 = vrot.slane %v2850, 5
        %v2868 = vsel %vm492, %v2867, %v2866
        %v2869 = vrot.slane %v2851, 4
        %v2870 = vsel %vm495, %v2869, %v2868
        %v2871 = vrot.slane %v2852, 3
        %v2872 = vsel %vm498, %v2871, %v2870
        %v2873 = vrot.slane %v2853, 2
        %v2874 = vsel %vm501, %v2873, %v2872
        %v2875 = vrot.slane %v2854, 1
        %v2876 = vsel %vm504, %v2875, %v2874
        %v2877 = vsel %vm507, %v2855, %v2876
        %v2878 = vlaneseq
        %v2879 = vshrl.u32 %v2878, 7
        %v2880 = vsub.s32 0, %v2879
        %v2881 = vrot.slane %v201, %v2880
        %2882 = vrot.lane.b32.xlu0 %v2877, 32
        %v2883 = vpop.permute.xlu0 %2882
        %v2884 = vsel %vm511, %v2883, 0
        %2886 = vmatprep.subr.mxu0 0.0
        %2887 = vmatpush1.msra.mxu0 %v192
        %2888 = vmatprep.subr.mxu0 0.0
        %2889 = vmatpush1.msra.mxu0 %v193
        %2890 = vmatprep.subr.mxu0 0.0
        %2891 = vmatpush1.msra.mxu0 %v194
        %2892 = vmatprep.subr.mxu0 0.0
        %2893 = vmatpush1.msra.mxu0 %v195
        %2894 = vmatprep.subr.mxu0 0.0
        %2895 = vmatpush1.msra.mxu0 0.0
        %2896 = vmatprep.subr.mxu0 0.0
        %2897 = vmatpush1.msra.mxu0 0.0
        %2898 = vmatprep.subr.mxu0 0.0
        %2899 = vmatpush1.msra.mxu0 0.0
        %2900 = vmatprep.subr.mxu0 0.0
        %2901 = vmatpush1.msra.mxu0 0.0
        %2902 = vmatprep.subr.mxu0 0.0
        %2903 = vmatpush1.msra.mxu0 0.0
        %2904 = vmatprep.subr.mxu0 0.0
        %2905 = vmatpush1.msra.mxu0 0.0
        %2906 = vmatprep.subr.mxu0 0.0
        %2907 = vmatpush1.msra.mxu0 0.0
        %2908 = vmatprep.subr.mxu0 0.0
        %2909 = vmatpush1.msra.mxu0 0.0
        %2910 = vmatprep.subr.mxu0 0.0
        %2911 = vmatpush1.msra.mxu0 0.0
        %2912 = vmatprep.subr.mxu0 0.0
        %2913 = vmatpush1.msra.mxu0 0.0
        %2914 = vmatprep.subr.mxu0 0.0
        %2915 = vmatpush1.msra.mxu0 0.0
        %2916 = vmatprep.subr.mxu0 0.0
        %2917 = vmatpush1.msra.mxu0 0.0
        %2918 = vmatprep.subr.mxu0 0.0
        %2919 = vmatpush1.msra.mxu0 0.0
        %2920 = vmatprep.subr.mxu0 0.0
        %2921 = vmatpush1.msra.mxu0 0.0
        %2922 = vmatprep.subr.mxu0 0.0
        %2923 = vmatpush1.msra.mxu0 0.0
        %2924 = vmatprep.subr.mxu0 0.0
        %2925 = vmatpush1.msra.mxu0 0.0
        %2926 = vmatprep.subr.mxu0 0.0
        %2927 = vmatpush1.msra.mxu0 0.0
        %2928 = vmatprep.subr.mxu0 0.0
        %2929 = vmatpush1.msra.mxu0 0.0
        %2930 = vmatprep.subr.mxu0 0.0
        %2931 = vmatpush1.msra.mxu0 0.0
        %2932 = vmatprep.subr.mxu0 0.0
        %2933 = vmatpush1.msra.mxu0 0.0
        %2934 = vmatprep.subr.mxu0 0.0
        %2935 = vmatpush1.msra.mxu0 0.0
        %2936 = vmatprep.subr.mxu0 0.0
        %2937 = vmatpush1.msra.mxu0 0.0
        %2938 = vmatprep.subr.mxu0 0.0
        %2939 = vmatpush1.msra.mxu0 0.0
        %2940 = vmatprep.subr.mxu0 0.0
        %2941 = vmatpush1.msra.mxu0 0.0
        %2942 = vmatprep.subr.mxu0 0.0
        %2943 = vmatpush1.msra.mxu0 0.0
        %2944 = vmatprep.subr.mxu0 0.0
        %2945 = vmatpush1.msra.mxu0 0.0
        %2946 = vmatprep.subr.mxu0 0.0
        %2947 = vmatpush1.msra.mxu0 0.0
        %2948 = vmatprep.subr.mxu0 0.0
        %2949 = vmatpush1.msra.mxu0 0.0
        %2950 = vmatprep.mubr.f32.mxu0 0.0
        %2951 = vmatmul.mubr.f32.gmra.mrb[0].mxu0 %v512
        %v2952 = vpop.f32.mrb[0].mxu0
        %v2953 = vadd.f32 %v2881, %v2952
        %v2954 = vpop.f32.mrb[0].mxu0
        %2955 = vmatprep.mubr.f32.mxu0 0.0
        %2956 = vmatmul.mubr.f32.gmra.mrb[0].mxu0 %v864
        %v2957 = vpop.f32.mrb[0].mxu0
        %v2958 = vadd.f32 %v2881, %v2957
        %v2959 = vpop.f32.mrb[0].mxu0
        %2960 = vmatprep.mubr.f32.mxu0 0.0
        %2961 = vmatmul.mubr.f32.gmra.mrb[0].mxu0 %v1200
        %v2962 = vpop.f32.mrb[0].mxu0
        %v2963 = vadd.f32 %v2881, %v2962
        %v2964 = vpop.f32.mrb[0].mxu0
        %2965 = vmatprep.mubr.f32.mxu0 0.0
        %2966 = vmatmul.mubr.f32.gmra.mrb[0].mxu0 %v1536
        %v2967 = vpop.f32.mrb[0].mxu0
        %v2968 = vadd.f32 %v2881, %v2967
        %v2969 = vpop.f32.mrb[0].mxu0
        %2970 = vmatprep.mubr.f32.mxu0 0.0
        %2971 = vmatmul.mubr.f32.gmra.mrb[0].mxu0 %v1872
        %v2972 = vpop.f32.mrb[0].mxu0
        %v2973 = vadd.f32 %v2881, %v2972
        %v2974 = vpop.f32.mrb[0].mxu0
        %2975 = vmatprep.mubr.f32.mxu0 0.0
        %2976 = vmatmul.mubr.f32.gmra.mrb[0].mxu0 %v2208
        %v2977 = vpop.f32.mrb[0].mxu0
        %v2978 = vadd.f32 %v2881, %v2977
        %v2979 = vpop.f32.mrb[0].mxu0
        %2980 = vmatprep.mubr.f32.mxu0 0.0
        %2981 = vmatmul.mubr.f32.gmra.mrb[0].mxu0 %v2544
        %v2982 = vpop.f32.mrb[0].mxu0
        %v2983 = vadd.f32 %v2881, %v2982
        %v2984 = vpop.f32.mrb[0].mxu0
        %2985 = vmatprep.mubr.f32.mxu0 0.0
        %2986 = vmatmul.mubr.f32.gmra.mrb[0].mxu0 %v2884
        %v2987 = vpop.f32.mrb[0].mxu0
        %v2988 = vadd.f32 %v2881, %v2987
        %v2989 = vpop.f32.mrb[0].mxu0
        %2990 = vdwg.mxu0
        %v2991 = vsub.f32 0.0, %v2953
        %v2992 = vmul.f32 %v2991, 1.442695
        %v2993 = vpow.pop %v2992
        %v2994 = vadd.f32 %v2993, 1.0
        %v2995 = vrcp.pop %v2994
        %v2996 = vmul.f32 1.0, %v2995
        %v2997 = vtanh.pop %v2953
        %2999 = vrot.lane.b32.xlu0 %v2997, 64
        %v3000 = vpop.permute.xlu0 %2999
        %v3002 = vmul.f32 %v2996, %v3000
        %v3003 = vtanh.pop %v3002
        %3005 = vrot.lane.b32.xlu0 %v3003, 96
        %v3006 = vpop.permute.xlu0 %3005
        %v3008 = vmul.f32 %v2996, %v3006
        %3010 = vrot.lane.b32.xlu0 %v3008, 32
        %v3011 = vpop.permute.xlu0 %3010
        %v3012 = vsel %vm511, %v3011, 0
        %3014 = vmatprep.subr.mxu0 0.0
        %3015 = vmatpush1.msra.mxu0 %v196
        %3016 = vmatprep.subr.mxu0 0.0
        %3017 = vmatpush1.msra.mxu0 %v197
        %3018 = vmatprep.subr.mxu0 0.0
        %3019 = vmatpush1.msra.mxu0 %v198
        %3020 = vmatprep.subr.mxu0 0.0
        %3021 = vmatpush1.msra.mxu0 %v199
        %3022 = vmatprep.subr.mxu0 0.0
        %3023 = vmatpush1.msra.mxu0 0.0
        %3024 = vmatprep.subr.mxu0 0.0
        %3025 = vmatpush1.msra.mxu0 0.0
        %3026 = vmatprep.subr.mxu0 0.0
        %3027 = vmatpush1.msra.mxu0 0.0
        %3028 = vmatprep.subr.mxu0 0.0
        %3029 = vmatpush1.msra.mxu0 0.0
        %3030 = vmatprep.subr.mxu0 0.0
        %3031 = vmatpush1.msra.mxu0 0.0
        %3032 = vmatprep.subr.mxu0 0.0
        %3033 = vmatpush1.msra.mxu0 0.0
        %3034 = vmatprep.subr.mxu0 0.0
        %3035 = vmatpush1.msra.mxu0 0.0
        %3036 = vmatprep.subr.mxu0 0.0
        %3037 = vmatpush1.msra.mxu0 0.0
        %3038 = vmatprep.subr.mxu0 0.0
        %3039 = vmatpush1.msra.mxu0 0.0
        %3040 = vmatprep.subr.mxu0 0.0
        %3041 = vmatpush1.msra.mxu0 0.0
        %3042 = vmatprep.subr.mxu0 0.0
        %3043 = vmatpush1.msra.mxu0 0.0
        %3044 = vmatprep.subr.mxu0 0.0
        %3045 = vmatpush1.msra.mxu0 0.0
        %3046 = vmatprep.subr.mxu0 0.0
        %3047 = vmatpush1.msra.mxu0 0.0
        %3048 = vmatprep.subr.mxu0 0.0
        %3049 = vmatpush1.msra.mxu0 0.0
        %3050 = vmatprep.subr.mxu0 0.0
        %3051 = vmatpush1.msra.mxu0 0.0
        %3052 = vmatprep.subr.mxu0 0.0
        %3053 = vmatpush1.msra.mxu0 0.0
        %3054 = vmatprep.subr.mxu0 0.0
        %3055 = vmatpush1.msra.mxu0 0.0
        %3056 = vmatprep.subr.mxu0 0.0
        %3057 = vmatpush1.msra.mxu0 0.0
        %3058 = vmatprep.subr.mxu0 0.0
        %3059 = vmatpush1.msra.mxu0 0.0
        %3060 = vmatprep.subr.mxu0 0.0
        %3061 = vmatpush1.msra.mxu0 0.0
        %3062 = vmatprep.subr.mxu0 0.0
        %3063 = vmatpush1.msra.mxu0 0.0
        %3064 = vmatprep.subr.mxu0 0.0
        %3065 = vmatpush1.msra.mxu0 0.0
        %3066 = vmatprep.subr.mxu0 0.0
        %3067 = vmatpush1.msra.mxu0 0.0
        %3068 = vmatprep.subr.mxu0 0.0
        %3069 = vmatpush1.msra.mxu0 0.0
        %3070 = vmatprep.subr.mxu0 0.0
        %3071 = vmatpush1.msra.mxu0 0.0
        %3072 = vmatprep.subr.mxu0 0.0
        %3073 = vmatpush1.msra.mxu0 0.0
        %3074 = vmatprep.subr.mxu0 0.0
        %3075 = vmatpush1.msra.mxu0 0.0
        %3076 = vmatprep.subr.mxu0 0.0
        %3077 = vmatpush1.msra.mxu0 0.0
        %3078 = vmatprep.mubr.f32.mxu0 0.0
        %3079 = vmatmul.mubr.f32.gmra.mrb[0].mxu0 %v3012
        %v3080 = vpop.f32.mrb[0].mxu0
        %v3081 = vadd.f32 0.0, %v3080
        %v3082 = vpop.f32.mrb[0].mxu0
        %3083 = vdwg.mxu0
        %v3084 = vadd.f32 %v2958, %v3081
        %v3085 = vsub.f32 0.0, %v3084
        %v3086 = vmul.f32 %v3085, 1.442695
        %v3087 = vpow.pop %v3086
        %v3088 = vadd.f32 %v3087, 1.0
        %v3089 = vrcp.pop %v3088
        %v3090 = vmul.f32 1.0, %v3089
        %v3091 = vtanh.pop %v3084
        %3093 = vrot.lane.b32.xlu0 %v3002, 32
        %v3094 = vpop.permute.xlu0 %3093
        %v3096 = vmul.f32 %v3090, %v3094
        %3098 = vrot.lane.b32.xlu0 %v3091, 64
        %v3099 = vpop.permute.xlu0 %3098
        %v3101 = vmul.f32 %v3090, %v3099
        %3103 = vrot.lane.b32.xlu0 %v3101, 32
        %v3104 = vpop.permute.xlu0 %3103
        %v3106 = vadd.f32 %v3096, %v3104
        %v3107 = vtanh.pop %v3106
        %3109 = vrot.lane.b32.xlu0 %v3107, 64
        %v3110 = vpop.permute.xlu0 %3109
        %v3112 = vmul.f32 %v3090, %v3110
        %3114 = vrot.lane.b32.xlu0 %v3112, 32
        %v3115 = vpop.permute.xlu0 %3114
        %v3116 = vsel %vm511, %v3115, 0
        %3118 = vmatprep.subr.mxu0 0.0
        %3119 = vmatpush1.msra.mxu0 %v196
        %3120 = vmatprep.subr.mxu0 0.0
        %3121 = vmatpush1.msra.mxu0 %v197
        %3122 = vmatprep.subr.mxu0 0.0
        %3123 = vmatpush1.msra.mxu0 %v198
        %3124 = vmatprep.subr.mxu0 0.0
        %3125 = vmatpush1.msra.mxu0 %v199
        %3126 = vmatprep.subr.mxu0 0.0
        %3127 = vmatpush1.msra.mxu0 0.0
        %3128 = vmatprep.subr.mxu0 0.0
        %3129 = vmatpush1.msra.mxu0 0.0
        %3130 = vmatprep.subr.mxu0 0.0
        %3131 = vmatpush1.msra.mxu0 0.0
        %3132 = vmatprep.subr.mxu0 0.0
        %3133 = vmatpush1.msra.mxu0 0.0
        %3134 = vmatprep.subr.mxu0 0.0
        %3135 = vmatpush1.msra.mxu0 0.0
        %3136 = vmatprep.subr.mxu0 0.0
        %3137 = vmatpush1.msra.mxu0 0.0
        %3138 = vmatprep.subr.mxu0 0.0
        %3139 = vmatpush1.msra.mxu0 0.0
        %3140 = vmatprep.subr.mxu0 0.0
        %3141 = vmatpush1.msra.mxu0 0.0
        %3142 = vmatprep.subr.mxu0 0.0
        %3143 = vmatpush1.msra.mxu0 0.0
        %3144 = vmatprep.subr.mxu0 0.0
        %3145 = vmatpush1.msra.mxu0 0.0
        %3146 = vmatprep.subr.mxu0 0.0
        %3147 = vmatpush1.msra.mxu0 0.0
        %3148 = vmatprep.subr.mxu0 0.0
        %3149 = vmatpush1.msra.mxu0 0.0
        %3150 = vmatprep.subr.mxu0 0.0
        %3151 = vmatpush1.msra.mxu0 0.0
        %3152 = vmatprep.subr.mxu0 0.0
        %3153 = vmatpush1.msra.mxu0 0.0
        %3154 = vmatprep.subr.mxu0 0.0
        %3155 = vmatpush1.msra.mxu0 0.0
        %3156 = vmatprep.subr.mxu0 0.0
        %3157 = vmatpush1.msra.mxu0 0.0
        %3158 = vmatprep.subr.mxu0 0.0
        %3159 = vmatpush1.msra.mxu0 0.0
        %3160 = vmatprep.subr.mxu0 0.0
        %3161 = vmatpush1.msra.mxu0 0.0
        %3162 = vmatprep.subr.mxu0 0.0
        %3163 = vmatpush1.msra.mxu0 0.0
        %3164 = vmatprep.subr.mxu0 0.0
        %3165 = vmatpush1.msra.mxu0 0.0
        %3166 = vmatprep.subr.mxu0 0.0
        %3167 = vmatpush1.msra.mxu0 0.0
        %3168 = vmatprep.subr.mxu0 0.0
        %3169 = vmatpush1.msra.mxu0 0.0
        %3170 = vmatprep.subr.mxu0 0.0
        %3171 = vmatpush1.msra.mxu0 0.0
        %3172 = vmatprep.subr.mxu0 0.0
        %3173 = vmatpush1.msra.mxu0 0.0
        %3174 = vmatprep.subr.mxu0 0.0
        %3175 = vmatpush1.msra.mxu0 0.0
        %3176 = vmatprep.subr.mxu0 0.0
        %3177 = vmatpush1.msra.mxu0 0.0
        %3178 = vmatprep.subr.mxu0 0.0
        %3179 = vmatpush1.msra.mxu0 0.0
        %3180 = vmatprep.subr.mxu0 0.0
        %3181 = vmatpush1.msra.mxu0 0.0
        %3182 = vmatprep.mubr.f32.mxu0 0.0
        %3183 = vmatmul.mubr.f32.gmra.mrb[0].mxu0 %v3116
        %v3184 = vpop.f32.mrb[0].mxu0
        %v3185 = vadd.f32 0.0, %v3184
        %v3186 = vpop.f32.mrb[0].mxu0
        %3187 = vdwg.mxu0
        %v3188 = vadd.f32 %v2963, %v3185
        %v3189 = vsub.f32 0.0, %v3188
        %v3190 = vmul.f32 %v3189, 1.442695
        %v3191 = vpow.pop %v3190
        %v3192 = vadd.f32 %v3191, 1.0
        %v3193 = vrcp.pop %v3192
        %v3194 = vmul.f32 1.0, %v3193
        %v3195 = vtanh.pop %v3188
        %v3196 = vmul.f32 %v3194, %v3106
        %3198 = vrot.lane.b32.xlu0 %v3195, 64
        %v3199 = vpop.permute.xlu0 %3198
        %v3201 = vmul.f32 %v3194, %v3199
        %3203 = vrot.lane.b32.xlu0 %v3201, 32
        %v3204 = vpop.permute.xlu0 %3203
        %v3206 = vadd.f32 %v3196, %v3204
        %v3207 = vtanh.pop %v3206
        %3209 = vrot.lane.b32.xlu0 %v3207, 64
        %v3210 = vpop.permute.xlu0 %3209
        %v3212 = vmul.f32 %v3194, %v3210
        %3214 = vrot.lane.b32.xlu0 %v3212, 32
        %v3215 = vpop.permute.xlu0 %3214
        %v3216 = vsel %vm511, %v3215, 0
        %3218 = vmatprep.subr.mxu0 0.0
        %3219 = vmatpush1.msra.mxu0 %v196
        %3220 = vmatprep.subr.mxu0 0.0
        %3221 = vmatpush1.msra.mxu0 %v197
        %3222 = vmatprep.subr.mxu0 0.0
        %3223 = vmatpush1.msra.mxu0 %v198
        %3224 = vmatprep.subr.mxu0 0.0
        %3225 = vmatpush1.msra.mxu0 %v199
        %3226 = vmatprep.subr.mxu0 0.0
        %3227 = vmatpush1.msra.mxu0 0.0
        %3228 = vmatprep.subr.mxu0 0.0
        %3229 = vmatpush1.msra.mxu0 0.0
        %3230 = vmatprep.subr.mxu0 0.0
        %3231 = vmatpush1.msra.mxu0 0.0
        %3232 = vmatprep.subr.mxu0 0.0
        %3233 = vmatpush1.msra.mxu0 0.0
        %3234 = vmatprep.subr.mxu0 0.0
        %3235 = vmatpush1.msra.mxu0 0.0
        %3236 = vmatprep.subr.mxu0 0.0
        %3237 = vmatpush1.msra.mxu0 0.0
        %3238 = vmatprep.subr.mxu0 0.0
        %3239 = vmatpush1.msra.mxu0 0.0
        %3240 = vmatprep.subr.mxu0 0.0
        %3241 = vmatpush1.msra.mxu0 0.0
        %3242 = vmatprep.subr.mxu0 0.0
        %3243 = vmatpush1.msra.mxu0 0.0
        %3244 = vmatprep.subr.mxu0 0.0
        %3245 = vmatpush1.msra.mxu0 0.0
        %3246 = vmatprep.subr.mxu0 0.0
        %3247 = vmatpush1.msra.mxu0 0.0
        %3248 = vmatprep.subr.mxu0 0.0
        %3249 = vmatpush1.msra.mxu0 0.0
        %3250 = vmatprep.subr.mxu0 0.0
        %3251 = vmatpush1.msra.mxu0 0.0
        %3252 = vmatprep.subr.mxu0 0.0
        %3253 = vmatpush1.msra.mxu0 0.0
        %3254 = vmatprep.subr.mxu0 0.0
        %3255 = vmatpush1.msra.mxu0 0.0
        %3256 = vmatprep.subr.mxu0 0.0
        %3257 = vmatpush1.msra.mxu0 0.0
        %3258 = vmatprep.subr.mxu0 0.0
        %3259 = vmatpush1.msra.mxu0 0.0
        %3260 = vmatprep.subr.mxu0 0.0
        %3261 = vmatpush1.msra.mxu0 0.0
        %3262 = vmatprep.subr.mxu0 0.0
        %3263 = vmatpush1.msra.mxu0 0.0
        %3264 = vmatprep.subr.mxu0 0.0
        %3265 = vmatpush1.msra.mxu0 0.0
        %3266 = vmatprep.subr.mxu0 0.0
        %3267 = vmatpush1.msra.mxu0 0.0
        %3268 = vmatprep.subr.mxu0 0.0
        %3269 = vmatpush1.msra.mxu0 0.0
        %3270 = vmatprep.subr.mxu0 0.0
        %3271 = vmatpush1.msra.mxu0 0.0
        %3272 = vmatprep.subr.mxu0 0.0
        %3273 = vmatpush1.msra.mxu0 0.0
        %3274 = vmatprep.subr.mxu0 0.0
        %3275 = vmatpush1.msra.mxu0 0.0
        %3276 = vmatprep.subr.mxu0 0.0
        %3277 = vmatpush1.msra.mxu0 0.0
        %3278 = vmatprep.subr.mxu0 0.0
        %3279 = vmatpush1.msra.mxu0 0.0
        %3280 = vmatprep.subr.mxu0 0.0
        %3281 = vmatpush1.msra.mxu0 0.0
        %3282 = vmatprep.mubr.f32.mxu0 0.0
        %3283 = vmatmul.mubr.f32.gmra.mrb[0].mxu0 %v3216
        %v3284 = vpop.f32.mrb[0].mxu0
        %v3285 = vadd.f32 0.0, %v3284
        %v3286 = vpop.f32.mrb[0].mxu0
        %3287 = vdwg.mxu0
        %v3288 = vadd.f32 %v2968, %v3285
        %v3289 = vsub.f32 0.0, %v3288
        %v3290 = vmul.f32 %v3289, 1.442695
        %v3291 = vpow.pop %v3290
        %v3292 = vadd.f32 %v3291, 1.0
        %v3293 = vrcp.pop %v3292
        %v3294 = vmul.f32 1.0, %v3293
        %v3295 = vtanh.pop %v3288
        %v3296 = vmul.f32 %v3294, %v3206
        %3298 = vrot.lane.b32.xlu0 %v3295, 64
        %v3299 = vpop.permute.xlu0 %3298
        %v3301 = vmul.f32 %v3294, %v3299
        %3303 = vrot.lane.b32.xlu0 %v3301, 32
        %v3304 = vpop.permute.xlu0 %3303
        %v3306 = vadd.f32 %v3296, %v3304
        %v3307 = vtanh.pop %v3306
        %3309 = vrot.lane.b32.xlu0 %v3307, 64
        %v3310 = vpop.permute.xlu0 %3309
        %v3312 = vmul.f32 %v3294, %v3310
        %3314 = vrot.lane.b32.xlu0 %v3312, 32
        %v3315 = vpop.permute.xlu0 %3314
        %v3316 = vsel %vm511, %v3315, 0
        %3318 = vmatprep.subr.mxu0 0.0
        %3319 = vmatpush1.msra.mxu0 %v196
        %3320 = vmatprep.subr.mxu0 0.0
        %3321 = vmatpush1.msra.mxu0 %v197
        %3322 = vmatprep.subr.mxu0 0.0
        %3323 = vmatpush1.msra.mxu0 %v198
        %3324 = vmatprep.subr.mxu0 0.0
        %3325 = vmatpush1.msra.mxu0 %v199
        %3326 = vmatprep.subr.mxu0 0.0
        %3327 = vmatpush1.msra.mxu0 0.0
        %3328 = vmatprep.subr.mxu0 0.0
        %3329 = vmatpush1.msra.mxu0 0.0
        %3330 = vmatprep.subr.mxu0 0.0
        %3331 = vmatpush1.msra.mxu0 0.0
        %3332 = vmatprep.subr.mxu0 0.0
        %3333 = vmatpush1.msra.mxu0 0.0
        %3334 = vmatprep.subr.mxu0 0.0
        %3335 = vmatpush1.msra.mxu0 0.0
        %3336 = vmatprep.subr.mxu0 0.0
        %3337 = vmatpush1.msra.mxu0 0.0
        %3338 = vmatprep.subr.mxu0 0.0
        %3339 = vmatpush1.msra.mxu0 0.0
        %3340 = vmatprep.subr.mxu0 0.0
        %3341 = vmatpush1.msra.mxu0 0.0
        %3342 = vmatprep.subr.mxu0 0.0
        %3343 = vmatpush1.msra.mxu0 0.0
        %3344 = vmatprep.subr.mxu0 0.0
        %3345 = vmatpush1.msra.mxu0 0.0
        %3346 = vmatprep.subr.mxu0 0.0
        %3347 = vmatpush1.msra.mxu0 0.0
        %3348 = vmatprep.subr.mxu0 0.0
        %3349 = vmatpush1.msra.mxu0 0.0
        %3350 = vmatprep.subr.mxu0 0.0
        %3351 = vmatpush1.msra.mxu0 0.0
        %3352 = vmatprep.subr.mxu0 0.0
        %3353 = vmatpush1.msra.mxu0 0.0
        %3354 = vmatprep.subr.mxu0 0.0
        %3355 = vmatpush1.msra.mxu0 0.0
        %3356 = vmatprep.subr.mxu0 0.0
        %3357 = vmatpush1.msra.mxu0 0.0
        %3358 = vmatprep.subr.mxu0 0.0
        %3359 = vmatpush1.msra.mxu0 0.0
        %3360 = vmatprep.subr.mxu0 0.0
        %3361 = vmatpush1.msra.mxu0 0.0
        %3362 = vmatprep.subr.mxu0 0.0
        %3363 = vmatpush1.msra.mxu0 0.0
        %3364 = vmatprep.subr.mxu0 0.0
        %3365 = vmatpush1.msra.mxu0 0.0
        %3366 = vmatprep.subr.mxu0 0.0
        %3367 = vmatpush1.msra.mxu0 0.0
        %3368 = vmatprep.subr.mxu0 0.0
        %3369 = vmatpush1.msra.mxu0 0.0
        %3370 = vmatprep.subr.mxu0 0.0
        %3371 = vmatpush1.msra.mxu0 0.0
        %3372 = vmatprep.subr.mxu0 0.0
        %3373 = vmatpush1.msra.mxu0 0.0
        %3374 = vmatprep.subr.mxu0 0.0
        %3375 = vmatpush1.msra.mxu0 0.0
        %3376 = vmatprep.subr.mxu0 0.0
        %3377 = vmatpush1.msra.mxu0 0.0
        %3378 = vmatprep.subr.mxu0 0.0
        %3379 = vmatpush1.msra.mxu0 0.0
        %3380 = vmatprep.subr.mxu0 0.0
        %3381 = vmatpush1.msra.mxu0 0.0
        %3382 = vmatprep.mubr.f32.mxu0 0.0
        %3383 = vmatmul.mubr.f32.gmra.mrb[0].mxu0 %v3316
        %v3384 = vpop.f32.mrb[0].mxu0
        %v3385 = vadd.f32 0.0, %v3384
        %v3386 = vpop.f32.mrb[0].mxu0
        %3387 = vdwg.mxu0
        %v3388 = vadd.f32 %v2973, %v3385
        %v3389 = vsub.f32 0.0, %v3388
        %v3390 = vmul.f32 %v3389, 1.442695
        %v3391 = vpow.pop %v3390
        %v3392 = vadd.f32 %v3391, 1.0
        %v3393 = vrcp.pop %v3392
        %v3394 = vmul.f32 1.0, %v3393
        %v3395 = vtanh.pop %v3388
        %v3396 = vmul.f32 %v3394, %v3306
        %3398 = vrot.lane.b32.xlu0 %v3395, 64
        %v3399 = vpop.permute.xlu0 %3398
        %v3401 = vmul.f32 %v3394, %v3399
        %3403 = vrot.lane.b32.xlu0 %v3401, 32
        %v3404 = vpop.permute.xlu0 %3403
        %v3406 = vadd.f32 %v3396, %v3404
        %v3407 = vtanh.pop %v3406
        %3409 = vrot.lane.b32.xlu0 %v3407, 64
        %v3410 = vpop.permute.xlu0 %3409
        %v3412 = vmul.f32 %v3394, %v3410
        %3414 = vrot.lane.b32.xlu0 %v3412, 32
        %v3415 = vpop.permute.xlu0 %3414
        %v3416 = vsel %vm511, %v3415, 0
        %3418 = vmatprep.subr.mxu0 0.0
        %3419 = vmatpush1.msra.mxu0 %v196
        %3420 = vmatprep.subr.mxu0 0.0
        %3421 = vmatpush1.msra.mxu0 %v197
        %3422 = vmatprep.subr.mxu0 0.0
        %3423 = vmatpush1.msra.mxu0 %v198
        %3424 = vmatprep.subr.mxu0 0.0
        %3425 = vmatpush1.msra.mxu0 %v199
        %3426 = vmatprep.subr.mxu0 0.0
        %3427 = vmatpush1.msra.mxu0 0.0
        %3428 = vmatprep.subr.mxu0 0.0
        %3429 = vmatpush1.msra.mxu0 0.0
        %3430 = vmatprep.subr.mxu0 0.0
        %3431 = vmatpush1.msra.mxu0 0.0
        %3432 = vmatprep.subr.mxu0 0.0
        %3433 = vmatpush1.msra.mxu0 0.0
        %3434 = vmatprep.subr.mxu0 0.0
        %3435 = vmatpush1.msra.mxu0 0.0
        %3436 = vmatprep.subr.mxu0 0.0
        %3437 = vmatpush1.msra.mxu0 0.0
        %3438 = vmatprep.subr.mxu0 0.0
        %3439 = vmatpush1.msra.mxu0 0.0
        %3440 = vmatprep.subr.mxu0 0.0
        %3441 = vmatpush1.msra.mxu0 0.0
        %3442 = vmatprep.subr.mxu0 0.0
        %3443 = vmatpush1.msra.mxu0 0.0
        %3444 = vmatprep.subr.mxu0 0.0
        %3445 = vmatpush1.msra.mxu0 0.0
        %3446 = vmatprep.subr.mxu0 0.0
        %3447 = vmatpush1.msra.mxu0 0.0
        %3448 = vmatprep.subr.mxu0 0.0
        %3449 = vmatpush1.msra.mxu0 0.0
        %3450 = vmatprep.subr.mxu0 0.0
        %3451 = vmatpush1.msra.mxu0 0.0
        %3452 = vmatprep.subr.mxu0 0.0
        %3453 = vmatpush1.msra.mxu0 0.0
        %3454 = vmatprep.subr.mxu0 0.0
        %3455 = vmatpush1.msra.mxu0 0.0
        %3456 = vmatprep.subr.mxu0 0.0
        %3457 = vmatpush1.msra.mxu0 0.0
        %3458 = vmatprep.subr.mxu0 0.0
        %3459 = vmatpush1.msra.mxu0 0.0
        %3460 = vmatprep.subr.mxu0 0.0
        %3461 = vmatpush1.msra.mxu0 0.0
        %3462 = vmatprep.subr.mxu0 0.0
        %3463 = vmatpush1.msra.mxu0 0.0
        %3464 = vmatprep.subr.mxu0 0.0
        %3465 = vmatpush1.msra.mxu0 0.0
        %3466 = vmatprep.subr.mxu0 0.0
        %3467 = vmatpush1.msra.mxu0 0.0
        %3468 = vmatprep.subr.mxu0 0.0
        %3469 = vmatpush1.msra.mxu0 0.0
        %3470 = vmatprep.subr.mxu0 0.0
        %3471 = vmatpush1.msra.mxu0 0.0
        %3472 = vmatprep.subr.mxu0 0.0
        %3473 = vmatpush1.msra.mxu0 0.0
        %3474 = vmatprep.subr.mxu0 0.0
        %3475 = vmatpush1.msra.mxu0 0.0
        %3476 = vmatprep.subr.mxu0 0.0
        %3477 = vmatpush1.msra.mxu0 0.0
        %3478 = vmatprep.subr.mxu0 0.0
        %3479 = vmatpush1.msra.mxu0 0.0
        %3480 = vmatprep.subr.mxu0 0.0
        %3481 = vmatpush1.msra.mxu0 0.0
        %3482 = vmatprep.mubr.f32.mxu0 0.0
        %3483 = vmatmul.mubr.f32.gmra.mrb[0].mxu0 %v3416
        %v3484 = vpop.f32.mrb[0].mxu0
        %v3485 = vadd.f32 0.0, %v3484
        %v3486 = vpop.f32.mrb[0].mxu0
        %3487 = vdwg.mxu0
        %v3488 = vadd.f32 %v2978, %v3485
        %v3489 = vsub.f32 0.0, %v3488
        %v3490 = vmul.f32 %v3489, 1.442695
        %v3491 = vpow.pop %v3490
        %v3492 = vadd.f32 %v3491, 1.0
        %v3493 = vrcp.pop %v3492
        %v3494 = vmul.f32 1.0, %v3493
        %v3495 = vtanh.pop %v3488
        %v3496 = vmul.f32 %v3494, %v3406
        %3498 = vrot.lane.b32.xlu0 %v3495, 64
        %v3499 = vpop.permute.xlu0 %3498
        %v3501 = vmul.f32 %v3494, %v3499
        %3503 = vrot.lane.b32.xlu0 %v3501, 32
        %v3504 = vpop.permute.xlu0 %3503
        %v3506 = vadd.f32 %v3496, %v3504
        %v3507 = vtanh.pop %v3506
        %3509 = vrot.lane.b32.xlu0 %v3507, 64
        %v3510 = vpop.permute.xlu0 %3509
        %v3512 = vmul.f32 %v3494, %v3510
        %3514 = vrot.lane.b32.xlu0 %v3512, 32
        %v3515 = vpop.permute.xlu0 %3514
        %v3516 = vsel %vm511, %v3515, 0
        %3518 = vmatprep.subr.mxu0 0.0
        %3519 = vmatpush1.msra.mxu0 %v196
        %3520 = vmatprep.subr.mxu0 0.0
        %3521 = vmatpush1.msra.mxu0 %v197
        %3522 = vmatprep.subr.mxu0 0.0
        %3523 = vmatpush1.msra.mxu0 %v198
        %3524 = vmatprep.subr.mxu0 0.0
        %3525 = vmatpush1.msra.mxu0 %v199
        %3526 = vmatprep.subr.mxu0 0.0
        %3527 = vmatpush1.msra.mxu0 0.0
        %3528 = vmatprep.subr.mxu0 0.0
        %3529 = vmatpush1.msra.mxu0 0.0
        %3530 = vmatprep.subr.mxu0 0.0
        %3531 = vmatpush1.msra.mxu0 0.0
        %3532 = vmatprep.subr.mxu0 0.0
        %3533 = vmatpush1.msra.mxu0 0.0
        %3534 = vmatprep.subr.mxu0 0.0
        %3535 = vmatpush1.msra.mxu0 0.0
        %3536 = vmatprep.subr.mxu0 0.0
        %3537 = vmatpush1.msra.mxu0 0.0
        %3538 = vmatprep.subr.mxu0 0.0
        %3539 = vmatpush1.msra.mxu0 0.0
        %3540 = vmatprep.subr.mxu0 0.0
        %3541 = vmatpush1.msra.mxu0 0.0
        %3542 = vmatprep.subr.mxu0 0.0
        %3543 = vmatpush1.msra.mxu0 0.0
        %3544 = vmatprep.subr.mxu0 0.0
        %3545 = vmatpush1.msra.mxu0 0.0
        %3546 = vmatprep.subr.mxu0 0.0
        %3547 = vmatpush1.msra.mxu0 0.0
        %3548 = vmatprep.subr.mxu0 0.0
        %3549 = vmatpush1.msra.mxu0 0.0
        %3550 = vmatprep.subr.mxu0 0.0
        %3551 = vmatpush1.msra.mxu0 0.0
        %3552 = vmatprep.subr.mxu0 0.0
        %3553 = vmatpush1.msra.mxu0 0.0
        %3554 = vmatprep.subr.mxu0 0.0
        %3555 = vmatpush1.msra.mxu0 0.0
        %3556 = vmatprep.subr.mxu0 0.0
        %3557 = vmatpush1.msra.mxu0 0.0
        %3558 = vmatprep.subr.mxu0 0.0
        %3559 = vmatpush1.msra.mxu0 0.0
        %3560 = vmatprep.subr.mxu0 0.0
        %3561 = vmatpush1.msra.mxu0 0.0
        %3562 = vmatprep.subr.mxu0 0.0
        %3563 = vmatpush1.msra.mxu0 0.0
        %3564 = vmatprep.subr.mxu0 0.0
        %3565 = vmatpush1.msra.mxu0 0.0
        %3566 = vmatprep.subr.mxu0 0.0
        %3567 = vmatpush1.msra.mxu0 0.0
        %3568 = vmatprep.subr.mxu0 0.0
        %3569 = vmatpush1.msra.mxu0 0.0
        %3570 = vmatprep.subr.mxu0 0.0
        %3571 = vmatpush1.msra.mxu0 0.0
        %3572 = vmatprep.subr.mxu0 0.0
        %3573 = vmatpush1.msra.mxu0 0.0
        %3574 = vmatprep.subr.mxu0 0.0
        %3575 = vmatpush1.msra.mxu0 0.0
        %3576 = vmatprep.subr.mxu0 0.0
        %3577 = vmatpush1.msra.mxu0 0.0
        %3578 = vmatprep.subr.mxu0 0.0
        %3579 = vmatpush1.msra.mxu0 0.0
        %3580 = vmatprep.subr.mxu0 0.0
        %3581 = vmatpush1.msra.mxu0 0.0
        %3582 = vmatprep.mubr.f32.mxu0 0.0
        %3583 = vmatmul.mubr.f32.gmra.mrb[0].mxu0 %v3516
        %v3584 = vpop.f32.mrb[0].mxu0
        %v3585 = vadd.f32 0.0, %v3584
        %v3586 = vpop.f32.mrb[0].mxu0
        %3587 = vdwg.mxu0
        %v3588 = vadd.f32 %v2983, %v3585
        %v3589 = vsub.f32 0.0, %v3588
        %v3590 = vmul.f32 %v3589, 1.442695
        %v3591 = vpow.pop %v3590
        %v3592 = vadd.f32 %v3591, 1.0
        %v3593 = vrcp.pop %v3592
        %v3594 = vmul.f32 1.0, %v3593
        %v3595 = vtanh.pop %v3588
        %v3596 = vmul.f32 %v3594, %v3506
        %3598 = vrot.lane.b32.xlu0 %v3595, 64
        %v3599 = vpop.permute.xlu0 %3598
        %v3601 = vmul.f32 %v3594, %v3599
        %3603 = vrot.lane.b32.xlu0 %v3601, 32
        %v3604 = vpop.permute.xlu0 %3603
        %v3606 = vadd.f32 %v3596, %v3604
        %v3607 = vtanh.pop %v3606
        %3609 = vrot.lane.b32.xlu0 %v3607, 64
        %v3610 = vpop.permute.xlu0 %3609
        %v3612 = vmul.f32 %v3594, %v3610
        %3614 = vrot.lane.b32.xlu0 %v3612, 32
        %v3615 = vpop.permute.xlu0 %3614
        %v3616 = vsel %vm511, %v3615, 0
        %3618 = vmatprep.subr.mxu0 0.0
        %3619 = vmatpush1.msra.mxu0 %v196
        %3620 = vmatprep.subr.mxu0 0.0
        %3621 = vmatpush1.msra.mxu0 %v197
        %3622 = vmatprep.subr.mxu0 0.0
        %3623 = vmatpush1.msra.mxu0 %v198
        %3624 = vmatprep.subr.mxu0 0.0
        %3625 = vmatpush1.msra.mxu0 %v199
        %3626 = vmatprep.subr.mxu0 0.0
        %3627 = vmatpush1.msra.mxu0 0.0
        %3628 = vmatprep.subr.mxu0 0.0
        %3629 = vmatpush1.msra.mxu0 0.0
        %3630 = vmatprep.subr.mxu0 0.0
        %3631 = vmatpush1.msra.mxu0 0.0
        %3632 = vmatprep.subr.mxu0 0.0
        %3633 = vmatpush1.msra.mxu0 0.0
        %3634 = vmatprep.subr.mxu0 0.0
        %3635 = vmatpush1.msra.mxu0 0.0
        %3636 = vmatprep.subr.mxu0 0.0
        %3637 = vmatpush1.msra.mxu0 0.0
        %3638 = vmatprep.subr.mxu0 0.0
        %3639 = vmatpush1.msra.mxu0 0.0
        %3640 = vmatprep.subr.mxu0 0.0
        %3641 = vmatpush1.msra.mxu0 0.0
        %3642 = vmatprep.subr.mxu0 0.0
        %3643 = vmatpush1.msra.mxu0 0.0
        %3644 = vmatprep.subr.mxu0 0.0
        %3645 = vmatpush1.msra.mxu0 0.0
        %3646 = vmatprep.subr.mxu0 0.0
        %3647 = vmatpush1.msra.mxu0 0.0
        %3648 = vmatprep.subr.mxu0 0.0
        %3649 = vmatpush1.msra.mxu0 0.0
        %3650 = vmatprep.subr.mxu0 0.0
        %3651 = vmatpush1.msra.mxu0 0.0
        %3652 = vmatprep.subr.mxu0 0.0
        %3653 = vmatpush1.msra.mxu0 0.0
        %3654 = vmatprep.subr.mxu0 0.0
        %3655 = vmatpush1.msra.mxu0 0.0
        %3656 = vmatprep.subr.mxu0 0.0
        %3657 = vmatpush1.msra.mxu0 0.0
        %3658 = vmatprep.subr.mxu0 0.0
        %3659 = vmatpush1.msra.mxu0 0.0
        %3660 = vmatprep.subr.mxu0 0.0
        %3661 = vmatpush1.msra.mxu0 0.0
        %3662 = vmatprep.subr.mxu0 0.0
        %3663 = vmatpush1.msra.mxu0 0.0
        %3664 = vmatprep.subr.mxu0 0.0
        %3665 = vmatpush1.msra.mxu0 0.0
        %3666 = vmatprep.subr.mxu0 0.0
        %3667 = vmatpush1.msra.mxu0 0.0
        %3668 = vmatprep.subr.mxu0 0.0
        %3669 = vmatpush1.msra.mxu0 0.0
        %3670 = vmatprep.subr.mxu0 0.0
        %3671 = vmatpush1.msra.mxu0 0.0
        %3672 = vmatprep.subr.mxu0 0.0
        %3673 = vmatpush1.msra.mxu0 0.0
        %3674 = vmatprep.subr.mxu0 0.0
        %3675 = vmatpush1.msra.mxu0 0.0
        %3676 = vmatprep.subr.mxu0 0.0
        %3677 = vmatpush1.msra.mxu0 0.0
        %3678 = vmatprep.subr.mxu0 0.0
        %3679 = vmatpush1.msra.mxu0 0.0
        %3680 = vmatprep.subr.mxu0 0.0
        %3681 = vmatpush1.msra.mxu0 0.0
        %3682 = vmatprep.mubr.f32.mxu0 0.0
        %3683 = vmatmul.mubr.f32.gmra.mrb[0].mxu0 %v3616
        %v3684 = vpop.f32.mrb[0].mxu0
        %v3685 = vadd.f32 0.0, %v3684
        %v3686 = vpop.f32.mrb[0].mxu0
        %3687 = vdwg.mxu0
        %v3688 = vadd.f32 %v2988, %v3685
        %v3689 = vsub.f32 0.0, %v3688
        %v3690 = vmul.f32 %v3689, 1.442695
        %v3691 = vpow.pop %v3690
        %v3692 = vadd.f32 %v3691, 1.0
        %v3693 = vrcp.pop %v3692
        %v3694 = vmul.f32 1.0, %v3693
        %v3695 = vtanh.pop %v3688
        %v3696 = vmul.f32 %v3694, %v3606
        %3698 = vrot.lane.b32.xlu0 %v3695, 64
        %v3699 = vpop.permute.xlu0 %3698
        %v3701 = vmul.f32 %v3694, %v3699
        %3703 = vrot.lane.b32.xlu0 %v3701, 32
        %v3704 = vpop.permute.xlu0 %3703
        %v3706 = vadd.f32 %v3696, %v3704
        %v3707 = vtanh.pop %v3706
        %3709 = vrot.lane.b32.xlu0 %v3707, 64
        %v3710 = vpop.permute.xlu0 %3709
        %v3712 = vmul.f32 %v3694, %v3710
        %3714 = vrot.lane.b32.xlu0 %v3712, 32
        %v3715 = vpop.permute.xlu0 %3714
        %3717 = vst.msk [vmem:[%s176] sm:$0xff] %vm511, %v3715
        %s3718 = sand.u32 %s75, 1
        %s3719 = scalar_lea.sflag [#allocation4], %s3718
        %s3720 = sand.u32 %s75, 1
        %s3721 = smul.addr %s3720, 8
        %s3722 = scalar_lea.vmem [#allocation7], %s3721
        // Predicated region
        $region37: #{tpu_custom_call.1} parent=27 // pred_check
          %p3723 = pneg %p85
        $region38: #{tpu_custom_call.1} parent=27 // pred_check_branch
          %3725 = sbr.rel (%p3723) target = $region40
        $region39: #{tpu_custom_call.1} parent=27 // pred_region
          %s3727 = ssub.s32 128, 128
          %3728 = vsyncadd %s3719, %s3727
          %s3729 = smul.addr %s20, 128
          %s3730 = scalar_lea.hbm %s2, %s3729
          %s3732 = sshll.u32 %s3722, 4
          %s3733 = int_to_ptr.vmem [resolvable:$true] %s3732
          %3735 = dma.vmem_to_hbm [thread:$0]  %s3733, 128, %s3730, %s3719
        $region40: #{tpu_custom_call.1} parent=27 // pred_fallthru
          _
      $region28: #{tpu_custom_call.1} parent=5 // pred_fallthru
        _
      %p3736 = scmp.le.s32.totalorder 2, %s15
      // Predicated region
      $region41: #{tpu_custom_call.1} parent=5 // pred_check
        %p3737 = pneg %p3736
      $region42: #{tpu_custom_call.1} parent=5 // pred_check_branch
        %3739 = sbr.rel (%p3737) target = $region44
      $region43: #{tpu_custom_call.1} parent=5 // pred_region
        %s3740 = ssub.s32 %s15, 2
        // Predicated region
        $region45: #{tpu_custom_call.1} parent=43 // pred_check
          %p3741 = pneg %p91
        $region46: #{tpu_custom_call.1} parent=43 // pred_check_branch
          %3743 = sbr.rel (%p3741) target = $region48
        $region47: #{tpu_custom_call.1} parent=43 // pred_region
          %s3744 = sand.u32 %s76, 1
          %s3745 = scalar_lea.sflag [#allocation4], %s3744
          %s3746 = sand.u32 %s76, 1
          %s3747 = smul.addr %s3746, 8
          %s3748 = scalar_lea.vmem [#allocation7], %s3747
          %3749 = dma.done %s3745, 128
        $region48: #{tpu_custom_call.1} parent=43 // pred_fallthru
          _
      $region44: #{tpu_custom_call.1} parent=5 // pred_fallthru
        _
    $region6: #{tpu_custom_call.1} parent=1 // loop_footer
      %s19 = sadd.s32 1, %s15
    $region7: #{tpu_custom_call.1} parent=1 // loop_footer_branch
      %14 = sbr.rel target = $region3
    $region8: #{tpu_custom_call.1} parent=1 // loop_exit
      _
    %3750 = vsyncpa [#allocation3], 1
    %s3751 = scalar_lea.sflag [#allocation3], 1
    %3752 = vsyncpa %s3751, 1
    %3753 = vsyncpa [#allocation6], 1
    %3754 = vsyncpa [#allocation4], 1
    %s3755 = scalar_lea.sflag [#allocation4], 1
    %3756 = vsyncpa %s3755, 1

</llo_original>
